<compile_context>
chip_gen: v7x
topology: tpu7x:2x2x1
jax: 0.10.0
libtpu: 0.0.40
codegen_flags: <defaults>
</compile_context>

<pallas_src>
import functools

import jax
import jax.numpy as jnp
from jax.experimental import pallas as pl
from jax.experimental.pallas import tpu as pltpu

H = 15            # hidden width of the PyTorch module
SUB = 8           # sublanes per vreg
LANES = 128       # lanes per vreg
MIN_TILE = SUB * LANES   # 1024 batch rows = one (8,128) f32 vreg


def _mlp_kernel(x_ref, w1_ref, b1_ref, w2_ref, b2_ref, w3_ref, b3_ref,
                w4_ref, b4_ref, o_ref):
    """x_ref/o_ref: (TR, 128) VMEM tiles, batch lane-dense.
    w*/b* are tiny f32 tables in SMEM (scalar reads feed VPU broadcasts)."""
    n_chunks = x_ref.shape[0] // SUB

    @pl.loop(0, n_chunks)
    def _(s):
        r0 = pl.multiple_of(s * SUB, SUB)
        x = x_ref[pl.ds(r0, SUB), :]                      # (8, 128) f32

        # fc1: Linear(1, 15) -> 15 scalar broadcast MACs + tanh (VPU + EUP).
        h1 = [jnp.tanh(x * w1_ref[j] + b1_ref[j]) for j in range(H)]

        # fc2: Linear(15, 15) -> relu; 15x15 scalar-weight MACs on the VPU.
        h2 = []
        for j in range(H):
            acc = h1[0] * w2_ref[j, 0]
            for i in range(1, H):
                acc = acc + h1[i] * w2_ref[j, i]
            h2.append(jnp.maximum(acc + b2_ref[j], 0.0))

        # fc3: Linear(15, 15) -> tanh.
        h3 = []
        for j in range(H):
            acc = h2[0] * w3_ref[j, 0]
            for i in range(1, H):
                acc = acc + h2[i] * w3_ref[j, i]
            h3.append(jnp.tanh(acc + b3_ref[j]))

        # fc4: Linear(15, 1): accumulate the 15 planes into one output plane.
        out = h3[0] * w4_ref[0]
        for j in range(1, H):
            out = out + h3[j] * w4_ref[j]
        o_ref[pl.ds(r0, SUB), :] = out + b4_ref[0]


def prepare_params(params):
    """Convert PyTorch-layout params to the SMEM scalar tables, once."""
    (w1, b1), (w2, b2), (w3, b3), (w4, b4) = (
        params["fc1"], params["fc2"], params["fc3"], params["fc4"])
    f32 = lambda a: jnp.asarray(a, jnp.float32)
    return {
        "w1": f32(w1[:, 0]),          # (15,)   fc1 weight column
        "b1": f32(b1),                # (15,)
        "w2": f32(w2),                # (15,15) (out, in) layout
        "b2": f32(b2),                # (15,)
        "w3": f32(w3),                # (15,15)
        "b3": f32(b3),                # (15,)
        "w4": f32(w4[0, :]),          # (15,)   fc4 weight row
        "b4": f32(b4).reshape(1),     # (1,)
    }


def _pick_tile(n, block_rows):
    """Rows per grid step (multiple of 1024) and padded batch size."""
    block_rows = max(MIN_TILE, (block_rows // MIN_TILE) * MIN_TILE)
    n_min = pl.cdiv(n, MIN_TILE) * MIN_TILE
    # Prefer >= 2 grid steps (v7x dual TensorCore / megacore) when possible.
    half = pl.cdiv(n_min // MIN_TILE, 2) * MIN_TILE
    t = int(min(block_rows, max(MIN_TILE, half)))
    n_pad = pl.cdiv(n, t) * t
    return t, n_pad


@functools.partial(jax.jit, static_argnames=("block_rows",))
def net_hgr_forward(x, p, block_rows=8192):
    """x: (N, 1) float32, p: output of prepare_params.  Returns (N, 1)."""
    n = x.shape[0]
    t, n_pad = _pick_tile(n, block_rows)
    tr = t // LANES                                  # sublane rows per tile

    x_flat = x.reshape(-1).astype(jnp.float32)
    if n_pad != n:
        # TODO(synk): a ragged last tile could avoid this pad copy entirely;
        # padding here is < one tile so the extra HBM traffic is negligible.
        x_flat = jnp.pad(x_flat, (0, n_pad - n))
    x2d = x_flat.reshape(n_pad // LANES, LANES)      # lane-dense, free reshape

    smem = pl.BlockSpec(memory_space=pltpu.MemorySpace.SMEM)  # whole tiny array

    out2d = pl.pallas_call(
        _mlp_kernel,
        out_shape=jax.ShapeDtypeStruct((n_pad // LANES, LANES), jnp.float32),
        grid=(n_pad // t,),
        in_specs=[
            pl.BlockSpec((tr, LANES), lambda i: (i, 0)),      # x tile
            smem, smem,                                       # w1, b1
            smem, smem,                                       # w2, b2
            smem, smem,                                       # w3, b3
            smem, smem,                                       # w4, b4
        ],
        out_specs=pl.BlockSpec((tr, LANES), lambda i: (i, 0)),
        compiler_params=pltpu.CompilerParams(
            dimension_semantics=("parallel",)),
    )(x2d, p["w1"], p["b1"], p["w2"], p["b2"], p["w3"], p["b3"],
      p["w4"], p["b4"])

    return out2d.reshape(n_pad, 1)[:n]


def init_params(key):
    """Deterministic init mirroring PyTorch Linear default U[-1/sqrt(fan_in), +]."""
    def linear(k, fan_in, fan_out):
        kw, kb = jax.random.split(k)
        bound = 1.0 / jnp.sqrt(float(fan_in))
        w = jax.random.uniform(kw, (fan_out, fan_in), jnp.float32, -bound, bound)
        b = jax.random.uniform(kb, (fan_out,), jnp.float32, -bound, bound)
        return w, b

    k1, k2, k3, k4 = jax.random.split(key, 4)
    return {
        "fc1": linear(k1, 1, H),
        "fc2": linear(k2, H, H),
        "fc3": linear(k3, H, H),
        "fc4": linear(k4, H, 1),
    }


def _reference(x, params):
    (w1, b1), (w2, b2), (w3, b3), (w4, b4) = (
        params["fc1"], params["fc2"], params["fc3"], params["fc4"])
    h1 = jnp.tanh(x @ w1.T + b1)
    h2 = jax.nn.relu(h1 @ w2.T + b2)
    h3 = jnp.tanh(h2 @ w3.T + b3)
    return h3 @ w4.T + b4


if __name__ == "__main__":
    key = jax.random.PRNGKey(0)
    kx, kx2, kp = jax.random.split(key, 3)

    params = init_params(kp)
    padded = prepare_params(params)          # hoisted param conversion (once)

    # Small batch: single grid step, single in-kernel chunk.
    N = 8
    x = jax.random.normal(kx, (N, 1), jnp.float32)
    y = jax.block_until_ready(net_hgr_forward(x, padded))
    y_ref = _reference(x, params)
    assert y.shape == (N, 1)
    assert jnp.allclose(y, y_ref, atol=5e-5, rtol=5e-5)

    # Non-multiple batch: multiple grid steps and multiple in-kernel chunks
    # (exercises tiling, SMEM-resident weights, lane-dense stores).
    N2 = 2500
    x2 = jax.random.normal(kx2, (N2, 1), jnp.float32)
    y2 = jax.block_until_ready(net_hgr_forward(x2, padded, block_rows=2048))
    y2_ref = _reference(x2, params)
    assert y2.shape == (N2, 1)
    assert jnp.allclose(y2, y2_ref, atol=5e-5, rtol=5e-5)

    print("KERNEL_OK")
</pallas_src>

<mosaic_0001>
module attributes {stable_mosaic.version = 11 : i64} {
  func.func @_mlp_kernel(%arg0: i32, %arg1: memref<8x128xf32, #tpu.memory_space<vmem>>, %arg2: memref<15xf32, #tpu.memory_space<smem>>, %arg3: memref<15xf32, #tpu.memory_space<smem>>, %arg4: memref<15x15xf32, #tpu.memory_space<smem>>, %arg5: memref<15xf32, #tpu.memory_space<smem>>, %arg6: memref<15x15xf32, #tpu.memory_space<smem>>, %arg7: memref<15xf32, #tpu.memory_space<smem>>, %arg8: memref<15xf32, #tpu.memory_space<smem>>, %arg9: memref<1xf32, #tpu.memory_space<smem>>, %arg10: memref<8x128xf32, #tpu.memory_space<vmem>>) attributes {dimension_semantics = [#tpu.dimension_semantics<parallel>], iteration_bounds = array<i64: 1>, scalar_prefetch = 0 : i64, scratch_operands = 0 : i64, tpu.core_type = #tpu.core_type<tc>, window_params = [{transform_indices = @transform_0, window_bounds = array<i64: 8, 128>}, {transform_indices = @transform_1, window_bounds = array<i64: 15>}, {transform_indices = @transform_2, window_bounds = array<i64: 15>}, {transform_indices = @transform_3, window_bounds = array<i64: 15, 15>}, {transform_indices = @transform_4, window_bounds = array<i64: 15>}, {transform_indices = @transform_5, window_bounds = array<i64: 15, 15>}, {transform_indices = @transform_6, window_bounds = array<i64: 15>}, {transform_indices = @transform_7, window_bounds = array<i64: 15>}, {transform_indices = @transform_8, window_bounds = array<i64: 1>}, {transform_indices = @transform_9, window_bounds = array<i64: 8, 128>}]} {
    %c0_i32 = arith.constant 0 : i32
    %c1_i32 = arith.constant 1 : i32
    %0 = arith.muli %c0_i32, %c1_i32 : i32
    %c0_i32_0 = arith.constant 0 : i32
    %1 = arith.addi %c0_i32_0, %0 : i32
    %c8_i32 = arith.constant 8 : i32
    %2 = arith.muli %1, %c8_i32 : i32
    %3 = tpu.assume_multiple %2, 8 : i32
    %4 = arith.index_cast %3 : i32 to index
    %c0 = arith.constant 0 : index
    %5 = vector.load %arg1[%4, %c0] : memref<8x128xf32, #tpu.memory_space<vmem>>, vector<8x128xf32>
    %c0_1 = arith.constant 0 : index
    %6 = memref.load %arg2[%c0_1] : memref<15xf32, #tpu.memory_space<smem>>
    %7 = vector.broadcast %6 : f32 to vector<8x128xf32>
    %8 = arith.mulf %5, %7 : vector<8x128xf32>
    %c0_2 = arith.constant 0 : index
    %9 = memref.load %arg3[%c0_2] : memref<15xf32, #tpu.memory_space<smem>>
    %10 = vector.broadcast %9 : f32 to vector<8x128xf32>
    %11 = arith.addf %8, %10 : vector<8x128xf32>
    %12 = math.tanh %11 : vector<8x128xf32>
    %c1 = arith.constant 1 : index
    %13 = memref.load %arg2[%c1] : memref<15xf32, #tpu.memory_space<smem>>
    %14 = vector.broadcast %13 : f32 to vector<8x128xf32>
    %15 = arith.mulf %5, %14 : vector<8x128xf32>
    %c1_3 = arith.constant 1 : index
    %16 = memref.load %arg3[%c1_3] : memref<15xf32, #tpu.memory_space<smem>>
    %17 = vector.broadcast %16 : f32 to vector<8x128xf32>
    %18 = arith.addf %15, %17 : vector<8x128xf32>
    %19 = math.tanh %18 : vector<8x128xf32>
    %c2 = arith.constant 2 : index
    %20 = memref.load %arg2[%c2] : memref<15xf32, #tpu.memory_space<smem>>
    %21 = vector.broadcast %20 : f32 to vector<8x128xf32>
    %22 = arith.mulf %5, %21 : vector<8x128xf32>
    %c2_4 = arith.constant 2 : index
    %23 = memref.load %arg3[%c2_4] : memref<15xf32, #tpu.memory_space<smem>>
    %24 = vector.broadcast %23 : f32 to vector<8x128xf32>
    %25 = arith.addf %22, %24 : vector<8x128xf32>
    %26 = math.tanh %25 : vector<8x128xf32>
    %c3 = arith.constant 3 : index
    %27 = memref.load %arg2[%c3] : memref<15xf32, #tpu.memory_space<smem>>
    %28 = vector.broadcast %27 : f32 to vector<8x128xf32>
    %29 = arith.mulf %5, %28 : vector<8x128xf32>
    %c3_5 = arith.constant 3 : index
    %30 = memref.load %arg3[%c3_5] : memref<15xf32, #tpu.memory_space<smem>>
    %31 = vector.broadcast %30 : f32 to vector<8x128xf32>
    %32 = arith.addf %29, %31 : vector<8x128xf32>
    %33 = math.tanh %32 : vector<8x128xf32>
    %c4 = arith.constant 4 : index
    %34 = memref.load %arg2[%c4] : memref<15xf32, #tpu.memory_space<smem>>
    %35 = vector.broadcast %34 : f32 to vector<8x128xf32>
    %36 = arith.mulf %5, %35 : vector<8x128xf32>
    %c4_6 = arith.constant 4 : index
    %37 = memref.load %arg3[%c4_6] : memref<15xf32, #tpu.memory_space<smem>>
    %38 = vector.broadcast %37 : f32 to vector<8x128xf32>
    %39 = arith.addf %36, %38 : vector<8x128xf32>
    %40 = math.tanh %39 : vector<8x128xf32>
    %c5 = arith.constant 5 : index
    %41 = memref.load %arg2[%c5] : memref<15xf32, #tpu.memory_space<smem>>
    %42 = vector.broadcast %41 : f32 to vector<8x128xf32>
    %43 = arith.mulf %5, %42 : vector<8x128xf32>
    %c5_7 = arith.constant 5 : index
    %44 = memref.load %arg3[%c5_7] : memref<15xf32, #tpu.memory_space<smem>>
    %45 = vector.broadcast %44 : f32 to vector<8x128xf32>
    %46 = arith.addf %43, %45 : vector<8x128xf32>
    %47 = math.tanh %46 : vector<8x128xf32>
    %c6 = arith.constant 6 : index
    %48 = memref.load %arg2[%c6] : memref<15xf32, #tpu.memory_space<smem>>
    %49 = vector.broadcast %48 : f32 to vector<8x128xf32>
    %50 = arith.mulf %5, %49 : vector<8x128xf32>
    %c6_8 = arith.constant 6 : index
    %51 = memref.load %arg3[%c6_8] : memref<15xf32, #tpu.memory_space<smem>>
    %52 = vector.broadcast %51 : f32 to vector<8x128xf32>
    %53 = arith.addf %50, %52 : vector<8x128xf32>
    %54 = math.tanh %53 : vector<8x128xf32>
    %c7 = arith.constant 7 : index
    %55 = memref.load %arg2[%c7] : memref<15xf32, #tpu.memory_space<smem>>
    %56 = vector.broadcast %55 : f32 to vector<8x128xf32>
    %57 = arith.mulf %5, %56 : vector<8x128xf32>
    %c7_9 = arith.constant 7 : index
    %58 = memref.load %arg3[%c7_9] : memref<15xf32, #tpu.memory_space<smem>>
    %59 = vector.broadcast %58 : f32 to vector<8x128xf32>
    %60 = arith.addf %57, %59 : vector<8x128xf32>
    %61 = math.tanh %60 : vector<8x128xf32>
    %c8 = arith.constant 8 : index
    %62 = memref.load %arg2[%c8] : memref<15xf32, #tpu.memory_space<smem>>
    %63 = vector.broadcast %62 : f32 to vector<8x128xf32>
    %64 = arith.mulf %5, %63 : vector<8x128xf32>
    %c8_10 = arith.constant 8 : index
    %65 = memref.load %arg3[%c8_10] : memref<15xf32, #tpu.memory_space<smem>>
    %66 = vector.broadcast %65 : f32 to vector<8x128xf32>
    %67 = arith.addf %64, %66 : vector<8x128xf32>
    %68 = math.tanh %67 : vector<8x128xf32>
    %c9 = arith.constant 9 : index
    %69 = memref.load %arg2[%c9] : memref<15xf32, #tpu.memory_space<smem>>
    %70 = vector.broadcast %69 : f32 to vector<8x128xf32>
    %71 = arith.mulf %5, %70 : vector<8x128xf32>
    %c9_11 = arith.constant 9 : index
    %72 = memref.load %arg3[%c9_11] : memref<15xf32, #tpu.memory_space<smem>>
    %73 = vector.broadcast %72 : f32 to vector<8x128xf32>
    %74 = arith.addf %71, %73 : vector<8x128xf32>
    %75 = math.tanh %74 : vector<8x128xf32>
    %c10 = arith.constant 10 : index
    %76 = memref.load %arg2[%c10] : memref<15xf32, #tpu.memory_space<smem>>
    %77 = vector.broadcast %76 : f32 to vector<8x128xf32>
    %78 = arith.mulf %5, %77 : vector<8x128xf32>
    %c10_12 = arith.constant 10 : index
    %79 = memref.load %arg3[%c10_12] : memref<15xf32, #tpu.memory_space<smem>>
    %80 = vector.broadcast %79 : f32 to vector<8x128xf32>
    %81 = arith.addf %78, %80 : vector<8x128xf32>
    %82 = math.tanh %81 : vector<8x128xf32>
    %c11 = arith.constant 11 : index
    %83 = memref.load %arg2[%c11] : memref<15xf32, #tpu.memory_space<smem>>
    %84 = vector.broadcast %83 : f32 to vector<8x128xf32>
    %85 = arith.mulf %5, %84 : vector<8x128xf32>
    %c11_13 = arith.constant 11 : index
    %86 = memref.load %arg3[%c11_13] : memref<15xf32, #tpu.memory_space<smem>>
    %87 = vector.broadcast %86 : f32 to vector<8x128xf32>
    %88 = arith.addf %85, %87 : vector<8x128xf32>
    %89 = math.tanh %88 : vector<8x128xf32>
    %c12 = arith.constant 12 : index
    %90 = memref.load %arg2[%c12] : memref<15xf32, #tpu.memory_space<smem>>
    %91 = vector.broadcast %90 : f32 to vector<8x128xf32>
    %92 = arith.mulf %5, %91 : vector<8x128xf32>
    %c12_14 = arith.constant 12 : index
    %93 = memref.load %arg3[%c12_14] : memref<15xf32, #tpu.memory_space<smem>>
    %94 = vector.broadcast %93 : f32 to vector<8x128xf32>
    %95 = arith.addf %92, %94 : vector<8x128xf32>
    %96 = math.tanh %95 : vector<8x128xf32>
    %c13 = arith.constant 13 : index
    %97 = memref.load %arg2[%c13] : memref<15xf32, #tpu.memory_space<smem>>
    %98 = vector.broadcast %97 : f32 to vector<8x128xf32>
    %99 = arith.mulf %5, %98 : vector<8x128xf32>
    %c13_15 = arith.constant 13 : index
    %100 = memref.load %arg3[%c13_15] : memref<15xf32, #tpu.memory_space<smem>>
    %101 = vector.broadcast %100 : f32 to vector<8x128xf32>
    %102 = arith.addf %99, %101 : vector<8x128xf32>
    %103 = math.tanh %102 : vector<8x128xf32>
    %c14 = arith.constant 14 : index
    %104 = memref.load %arg2[%c14] : memref<15xf32, #tpu.memory_space<smem>>
    %105 = vector.broadcast %104 : f32 to vector<8x128xf32>
    %106 = arith.mulf %5, %105 : vector<8x128xf32>
    %c14_16 = arith.constant 14 : index
    %107 = memref.load %arg3[%c14_16] : memref<15xf32, #tpu.memory_space<smem>>
    %108 = vector.broadcast %107 : f32 to vector<8x128xf32>
    %109 = arith.addf %106, %108 : vector<8x128xf32>
    %110 = math.tanh %109 : vector<8x128xf32>
    %c0_17 = arith.constant 0 : index
    %c0_18 = arith.constant 0 : index
    %111 = memref.load %arg4[%c0_17, %c0_18] : memref<15x15xf32, #tpu.memory_space<smem>>
    %112 = vector.broadcast %111 : f32 to vector<8x128xf32>
    %113 = arith.mulf %12, %112 : vector<8x128xf32>
    %c0_19 = arith.constant 0 : index
    %c1_20 = arith.constant 1 : index
    %114 = memref.load %arg4[%c0_19, %c1_20] : memref<15x15xf32, #tpu.memory_space<smem>>
    %115 = vector.broadcast %114 : f32 to vector<8x128xf32>
    %116 = arith.mulf %19, %115 : vector<8x128xf32>
    %117 = arith.addf %113, %116 : vector<8x128xf32>
    %c0_21 = arith.constant 0 : index
    %c2_22 = arith.constant 2 : index
    %118 = memref.load %arg4[%c0_21, %c2_22] : memref<15x15xf32, #tpu.memory_space<smem>>
    %119 = vector.broadcast %118 : f32 to vector<8x128xf32>
    %120 = arith.mulf %26, %119 : vector<8x128xf32>
    %121 = arith.addf %117, %120 : vector<8x128xf32>
    %c0_23 = arith.constant 0 : index
    %c3_24 = arith.constant 3 : index
    %122 = memref.load %arg4[%c0_23, %c3_24] : memref<15x15xf32, #tpu.memory_space<smem>>
    %123 = vector.broadcast %122 : f32 to vector<8x128xf32>
    %124 = arith.mulf %33, %123 : vector<8x128xf32>
    %125 = arith.addf %121, %124 : vector<8x128xf32>
    %c0_25 = arith.constant 0 : index
    %c4_26 = arith.constant 4 : index
    %126 = memref.load %arg4[%c0_25, %c4_26] : memref<15x15xf32, #tpu.memory_space<smem>>
    %127 = vector.broadcast %126 : f32 to vector<8x128xf32>
    %128 = arith.mulf %40, %127 : vector<8x128xf32>
    %129 = arith.addf %125, %128 : vector<8x128xf32>
    %c0_27 = arith.constant 0 : index
    %c5_28 = arith.constant 5 : index
    %130 = memref.load %arg4[%c0_27, %c5_28] : memref<15x15xf32, #tpu.memory_space<smem>>
    %131 = vector.broadcast %130 : f32 to vector<8x128xf32>
    %132 = arith.mulf %47, %131 : vector<8x128xf32>
    %133 = arith.addf %129, %132 : vector<8x128xf32>
    %c0_29 = arith.constant 0 : index
    %c6_30 = arith.constant 6 : index
    %134 = memref.load %arg4[%c0_29, %c6_30] : memref<15x15xf32, #tpu.memory_space<smem>>
    %135 = vector.broadcast %134 : f32 to vector<8x128xf32>
    %136 = arith.mulf %54, %135 : vector<8x128xf32>
    %137 = arith.addf %133, %136 : vector<8x128xf32>
    %c0_31 = arith.constant 0 : index
    %c7_32 = arith.constant 7 : index
    %138 = memref.load %arg4[%c0_31, %c7_32] : memref<15x15xf32, #tpu.memory_space<smem>>
    %139 = vector.broadcast %138 : f32 to vector<8x128xf32>
    %140 = arith.mulf %61, %139 : vector<8x128xf32>
    %141 = arith.addf %137, %140 : vector<8x128xf32>
    %c0_33 = arith.constant 0 : index
    %c8_34 = arith.constant 8 : index
    %142 = memref.load %arg4[%c0_33, %c8_34] : memref<15x15xf32, #tpu.memory_space<smem>>
    %143 = vector.broadcast %142 : f32 to vector<8x128xf32>
    %144 = arith.mulf %68, %143 : vector<8x128xf32>
    %145 = arith.addf %141, %144 : vector<8x128xf32>
    %c0_35 = arith.constant 0 : index
    %c9_36 = arith.constant 9 : index
    %146 = memref.load %arg4[%c0_35, %c9_36] : memref<15x15xf32, #tpu.memory_space<smem>>
    %147 = vector.broadcast %146 : f32 to vector<8x128xf32>
    %148 = arith.mulf %75, %147 : vector<8x128xf32>
    %149 = arith.addf %145, %148 : vector<8x128xf32>
    %c0_37 = arith.constant 0 : index
    %c10_38 = arith.constant 10 : index
    %150 = memref.load %arg4[%c0_37, %c10_38] : memref<15x15xf32, #tpu.memory_space<smem>>
    %151 = vector.broadcast %150 : f32 to vector<8x128xf32>
    %152 = arith.mulf %82, %151 : vector<8x128xf32>
    %153 = arith.addf %149, %152 : vector<8x128xf32>
    %c0_39 = arith.constant 0 : index
    %c11_40 = arith.constant 11 : index
    %154 = memref.load %arg4[%c0_39, %c11_40] : memref<15x15xf32, #tpu.memory_space<smem>>
    %155 = vector.broadcast %154 : f32 to vector<8x128xf32>
    %156 = arith.mulf %89, %155 : vector<8x128xf32>
    %157 = arith.addf %153, %156 : vector<8x128xf32>
    %c0_41 = arith.constant 0 : index
    %c12_42 = arith.constant 12 : index
    %158 = memref.load %arg4[%c0_41, %c12_42] : memref<15x15xf32, #tpu.memory_space<smem>>
    %159 = vector.broadcast %158 : f32 to vector<8x128xf32>
    %160 = arith.mulf %96, %159 : vector<8x128xf32>
    %161 = arith.addf %157, %160 : vector<8x128xf32>
    %c0_43 = arith.constant 0 : index
    %c13_44 = arith.constant 13 : index
    %162 = memref.load %arg4[%c0_43, %c13_44] : memref<15x15xf32, #tpu.memory_space<smem>>
    %163 = vector.broadcast %162 : f32 to vector<8x128xf32>
    %164 = arith.mulf %103, %163 : vector<8x128xf32>
    %165 = arith.addf %161, %164 : vector<8x128xf32>
    %c0_45 = arith.constant 0 : index
    %c14_46 = arith.constant 14 : index
    %166 = memref.load %arg4[%c0_45, %c14_46] : memref<15x15xf32, #tpu.memory_space<smem>>
    %167 = vector.broadcast %166 : f32 to vector<8x128xf32>
    %168 = arith.mulf %110, %167 : vector<8x128xf32>
    %169 = arith.addf %165, %168 : vector<8x128xf32>
    %c0_47 = arith.constant 0 : index
    %170 = memref.load %arg5[%c0_47] : memref<15xf32, #tpu.memory_space<smem>>
    %171 = vector.broadcast %170 : f32 to vector<8x128xf32>
    %172 = arith.addf %169, %171 : vector<8x128xf32>
    %cst = arith.constant 0.000000e+00 : f32
    %173 = vector.broadcast %cst : f32 to vector<8x128xf32>
    %174 = arith.maximumf %172, %173 : vector<8x128xf32>
    %c1_48 = arith.constant 1 : index
    %c0_49 = arith.constant 0 : index
    %175 = memref.load %arg4[%c1_48, %c0_49] : memref<15x15xf32, #tpu.memory_space<smem>>
    %176 = vector.broadcast %175 : f32 to vector<8x128xf32>
    %177 = arith.mulf %12, %176 : vector<8x128xf32>
    %c1_50 = arith.constant 1 : index
    %c1_51 = arith.constant 1 : index
    %178 = memref.load %arg4[%c1_50, %c1_51] : memref<15x15xf32, #tpu.memory_space<smem>>
    %179 = vector.broadcast %178 : f32 to vector<8x128xf32>
    %180 = arith.mulf %19, %179 : vector<8x128xf32>
    %181 = arith.addf %177, %180 : vector<8x128xf32>
    %c1_52 = arith.constant 1 : index
    %c2_53 = arith.constant 2 : index
    %182 = memref.load %arg4[%c1_52, %c2_53] : memref<15x15xf32, #tpu.memory_space<smem>>
    %183 = vector.broadcast %182 : f32 to vector<8x128xf32>
    %184 = arith.mulf %26, %183 : vector<8x128xf32>
    %185 = arith.addf %181, %184 : vector<8x128xf32>
    %c1_54 = arith.constant 1 : index
    %c3_55 = arith.constant 3 : index
    %186 = memref.load %arg4[%c1_54, %c3_55] : memref<15x15xf32, #tpu.memory_space<smem>>
    %187 = vector.broadcast %186 : f32 to vector<8x128xf32>
    %188 = arith.mulf %33, %187 : vector<8x128xf32>
    %189 = arith.addf %185, %188 : vector<8x128xf32>
    %c1_56 = arith.constant 1 : index
    %c4_57 = arith.constant 4 : index
    %190 = memref.load %arg4[%c1_56, %c4_57] : memref<15x15xf32, #tpu.memory_space<smem>>
    %191 = vector.broadcast %190 : f32 to vector<8x128xf32>
    %192 = arith.mulf %40, %191 : vector<8x128xf32>
    %193 = arith.addf %189, %192 : vector<8x128xf32>
    %c1_58 = arith.constant 1 : index
    %c5_59 = arith.constant 5 : index
    %194 = memref.load %arg4[%c1_58, %c5_59] : memref<15x15xf32, #tpu.memory_space<smem>>
    %195 = vector.broadcast %194 : f32 to vector<8x128xf32>
    %196 = arith.mulf %47, %195 : vector<8x128xf32>
    %197 = arith.addf %193, %196 : vector<8x128xf32>
    %c1_60 = arith.constant 1 : index
    %c6_61 = arith.constant 6 : index
    %198 = memref.load %arg4[%c1_60, %c6_61] : memref<15x15xf32, #tpu.memory_space<smem>>
    %199 = vector.broadcast %198 : f32 to vector<8x128xf32>
    %200 = arith.mulf %54, %199 : vector<8x128xf32>
    %201 = arith.addf %197, %200 : vector<8x128xf32>
    %c1_62 = arith.constant 1 : index
    %c7_63 = arith.constant 7 : index
    %202 = memref.load %arg4[%c1_62, %c7_63] : memref<15x15xf32, #tpu.memory_space<smem>>
    %203 = vector.broadcast %202 : f32 to vector<8x128xf32>
    %204 = arith.mulf %61, %203 : vector<8x128xf32>
    %205 = arith.addf %201, %204 : vector<8x128xf32>
    %c1_64 = arith.constant 1 : index
    %c8_65 = arith.constant 8 : index
    %206 = memref.load %arg4[%c1_64, %c8_65] : memref<15x15xf32, #tpu.memory_space<smem>>
    %207 = vector.broadcast %206 : f32 to vector<8x128xf32>
    %208 = arith.mulf %68, %207 : vector<8x128xf32>
    %209 = arith.addf %205, %208 : vector<8x128xf32>
    %c1_66 = arith.constant 1 : index
    %c9_67 = arith.constant 9 : index
    %210 = memref.load %arg4[%c1_66, %c9_67] : memref<15x15xf32, #tpu.memory_space<smem>>
    %211 = vector.broadcast %210 : f32 to vector<8x128xf32>
    %212 = arith.mulf %75, %211 : vector<8x128xf32>
    %213 = arith.addf %209, %212 : vector<8x128xf32>
    %c1_68 = arith.constant 1 : index
    %c10_69 = arith.constant 10 : index
    %214 = memref.load %arg4[%c1_68, %c10_69] : memref<15x15xf32, #tpu.memory_space<smem>>
    %215 = vector.broadcast %214 : f32 to vector<8x128xf32>
    %216 = arith.mulf %82, %215 : vector<8x128xf32>
    %217 = arith.addf %213, %216 : vector<8x128xf32>
    %c1_70 = arith.constant 1 : index
    %c11_71 = arith.constant 11 : index
    %218 = memref.load %arg4[%c1_70, %c11_71] : memref<15x15xf32, #tpu.memory_space<smem>>
    %219 = vector.broadcast %218 : f32 to vector<8x128xf32>
    %220 = arith.mulf %89, %219 : vector<8x128xf32>
    %221 = arith.addf %217, %220 : vector<8x128xf32>
    %c1_72 = arith.constant 1 : index
    %c12_73 = arith.constant 12 : index
    %222 = memref.load %arg4[%c1_72, %c12_73] : memref<15x15xf32, #tpu.memory_space<smem>>
    %223 = vector.broadcast %222 : f32 to vector<8x128xf32>
    %224 = arith.mulf %96, %223 : vector<8x128xf32>
    %225 = arith.addf %221, %224 : vector<8x128xf32>
    %c1_74 = arith.constant 1 : index
    %c13_75 = arith.constant 13 : index
    %226 = memref.load %arg4[%c1_74, %c13_75] : memref<15x15xf32, #tpu.memory_space<smem>>
    %227 = vector.broadcast %226 : f32 to vector<8x128xf32>
    %228 = arith.mulf %103, %227 : vector<8x128xf32>
    %229 = arith.addf %225, %228 : vector<8x128xf32>
    %c1_76 = arith.constant 1 : index
    %c14_77 = arith.constant 14 : index
    %230 = memref.load %arg4[%c1_76, %c14_77] : memref<15x15xf32, #tpu.memory_space<smem>>
    %231 = vector.broadcast %230 : f32 to vector<8x128xf32>
    %232 = arith.mulf %110, %231 : vector<8x128xf32>
    %233 = arith.addf %229, %232 : vector<8x128xf32>
    %c1_78 = arith.constant 1 : index
    %234 = memref.load %arg5[%c1_78] : memref<15xf32, #tpu.memory_space<smem>>
    %235 = vector.broadcast %234 : f32 to vector<8x128xf32>
    %236 = arith.addf %233, %235 : vector<8x128xf32>
    %cst_79 = arith.constant 0.000000e+00 : f32
    %237 = vector.broadcast %cst_79 : f32 to vector<8x128xf32>
    %238 = arith.maximumf %236, %237 : vector<8x128xf32>
    %c2_80 = arith.constant 2 : index
    %c0_81 = arith.constant 0 : index
    %239 = memref.load %arg4[%c2_80, %c0_81] : memref<15x15xf32, #tpu.memory_space<smem>>
    %240 = vector.broadcast %239 : f32 to vector<8x128xf32>
    %241 = arith.mulf %12, %240 : vector<8x128xf32>
    %c2_82 = arith.constant 2 : index
    %c1_83 = arith.constant 1 : index
    %242 = memref.load %arg4[%c2_82, %c1_83] : memref<15x15xf32, #tpu.memory_space<smem>>
    %243 = vector.broadcast %242 : f32 to vector<8x128xf32>
    %244 = arith.mulf %19, %243 : vector<8x128xf32>
    %245 = arith.addf %241, %244 : vector<8x128xf32>
    %c2_84 = arith.constant 2 : index
    %c2_85 = arith.constant 2 : index
    %246 = memref.load %arg4[%c2_84, %c2_85] : memref<15x15xf32, #tpu.memory_space<smem>>
    %247 = vector.broadcast %246 : f32 to vector<8x128xf32>
    %248 = arith.mulf %26, %247 : vector<8x128xf32>
    %249 = arith.addf %245, %248 : vector<8x128xf32>
    %c2_86 = arith.constant 2 : index
    %c3_87 = arith.constant 3 : index
    %250 = memref.load %arg4[%c2_86, %c3_87] : memref<15x15xf32, #tpu.memory_space<smem>>
    %251 = vector.broadcast %250 : f32 to vector<8x128xf32>
    %252 = arith.mulf %33, %251 : vector<8x128xf32>
    %253 = arith.addf %249, %252 : vector<8x128xf32>
    %c2_88 = arith.constant 2 : index
    %c4_89 = arith.constant 4 : index
    %254 = memref.load %arg4[%c2_88, %c4_89] : memref<15x15xf32, #tpu.memory_space<smem>>
    %255 = vector.broadcast %254 : f32 to vector<8x128xf32>
    %256 = arith.mulf %40, %255 : vector<8x128xf32>
    %257 = arith.addf %253, %256 : vector<8x128xf32>
    %c2_90 = arith.constant 2 : index
    %c5_91 = arith.constant 5 : index
    %258 = memref.load %arg4[%c2_90, %c5_91] : memref<15x15xf32, #tpu.memory_space<smem>>
    %259 = vector.broadcast %258 : f32 to vector<8x128xf32>
    %260 = arith.mulf %47, %259 : vector<8x128xf32>
    %261 = arith.addf %257, %260 : vector<8x128xf32>
    %c2_92 = arith.constant 2 : index
    %c6_93 = arith.constant 6 : index
    %262 = memref.load %arg4[%c2_92, %c6_93] : memref<15x15xf32, #tpu.memory_space<smem>>
    %263 = vector.broadcast %262 : f32 to vector<8x128xf32>
    %264 = arith.mulf %54, %263 : vector<8x128xf32>
    %265 = arith.addf %261, %264 : vector<8x128xf32>
    %c2_94 = arith.constant 2 : index
    %c7_95 = arith.constant 7 : index
    %266 = memref.load %arg4[%c2_94, %c7_95] : memref<15x15xf32, #tpu.memory_space<smem>>
    %267 = vector.broadcast %266 : f32 to vector<8x128xf32>
    %268 = arith.mulf %61, %267 : vector<8x128xf32>
    %269 = arith.addf %265, %268 : vector<8x128xf32>
    %c2_96 = arith.constant 2 : index
    %c8_97 = arith.constant 8 : index
    %270 = memref.load %arg4[%c2_96, %c8_97] : memref<15x15xf32, #tpu.memory_space<smem>>
    %271 = vector.broadcast %270 : f32 to vector<8x128xf32>
    %272 = arith.mulf %68, %271 : vector<8x128xf32>
    %273 = arith.addf %269, %272 : vector<8x128xf32>
    %c2_98 = arith.constant 2 : index
    %c9_99 = arith.constant 9 : index
    %274 = memref.load %arg4[%c2_98, %c9_99] : memref<15x15xf32, #tpu.memory_space<smem>>
    %275 = vector.broadcast %274 : f32 to vector<8x128xf32>
    %276 = arith.mulf %75, %275 : vector<8x128xf32>
    %277 = arith.addf %273, %276 : vector<8x128xf32>
    %c2_100 = arith.constant 2 : index
    %c10_101 = arith.constant 10 : index
    %278 = memref.load %arg4[%c2_100, %c10_101] : memref<15x15xf32, #tpu.memory_space<smem>>
    %279 = vector.broadcast %278 : f32 to vector<8x128xf32>
    %280 = arith.mulf %82, %279 : vector<8x128xf32>
    %281 = arith.addf %277, %280 : vector<8x128xf32>
    %c2_102 = arith.constant 2 : index
    %c11_103 = arith.constant 11 : index
    %282 = memref.load %arg4[%c2_102, %c11_103] : memref<15x15xf32, #tpu.memory_space<smem>>
    %283 = vector.broadcast %282 : f32 to vector<8x128xf32>
    %284 = arith.mulf %89, %283 : vector<8x128xf32>
    %285 = arith.addf %281, %284 : vector<8x128xf32>
    %c2_104 = arith.constant 2 : index
    %c12_105 = arith.constant 12 : index
    %286 = memref.load %arg4[%c2_104, %c12_105] : memref<15x15xf32, #tpu.memory_space<smem>>
    %287 = vector.broadcast %286 : f32 to vector<8x128xf32>
    %288 = arith.mulf %96, %287 : vector<8x128xf32>
    %289 = arith.addf %285, %288 : vector<8x128xf32>
    %c2_106 = arith.constant 2 : index
    %c13_107 = arith.constant 13 : index
    %290 = memref.load %arg4[%c2_106, %c13_107] : memref<15x15xf32, #tpu.memory_space<smem>>
    %291 = vector.broadcast %290 : f32 to vector<8x128xf32>
    %292 = arith.mulf %103, %291 : vector<8x128xf32>
    %293 = arith.addf %289, %292 : vector<8x128xf32>
    %c2_108 = arith.constant 2 : index
    %c14_109 = arith.constant 14 : index
    %294 = memref.load %arg4[%c2_108, %c14_109] : memref<15x15xf32, #tpu.memory_space<smem>>
    %295 = vector.broadcast %294 : f32 to vector<8x128xf32>
    %296 = arith.mulf %110, %295 : vector<8x128xf32>
    %297 = arith.addf %293, %296 : vector<8x128xf32>
    %c2_110 = arith.constant 2 : index
    %298 = memref.load %arg5[%c2_110] : memref<15xf32, #tpu.memory_space<smem>>
    %299 = vector.broadcast %298 : f32 to vector<8x128xf32>
    %300 = arith.addf %297, %299 : vector<8x128xf32>
    %cst_111 = arith.constant 0.000000e+00 : f32
    %301 = vector.broadcast %cst_111 : f32 to vector<8x128xf32>
    %302 = arith.maximumf %300, %301 : vector<8x128xf32>
    %c3_112 = arith.constant 3 : index
    %c0_113 = arith.constant 0 : index
    %303 = memref.load %arg4[%c3_112, %c0_113] : memref<15x15xf32, #tpu.memory_space<smem>>
    %304 = vector.broadcast %303 : f32 to vector<8x128xf32>
    %305 = arith.mulf %12, %304 : vector<8x128xf32>
    %c3_114 = arith.constant 3 : index
    %c1_115 = arith.constant 1 : index
    %306 = memref.load %arg4[%c3_114, %c1_115] : memref<15x15xf32, #tpu.memory_space<smem>>
    %307 = vector.broadcast %306 : f32 to vector<8x128xf32>
    %308 = arith.mulf %19, %307 : vector<8x128xf32>
    %309 = arith.addf %305, %308 : vector<8x128xf32>
    %c3_116 = arith.constant 3 : index
    %c2_117 = arith.constant 2 : index
    %310 = memref.load %arg4[%c3_116, %c2_117] : memref<15x15xf32, #tpu.memory_space<smem>>
    %311 = vector.broadcast %310 : f32 to vector<8x128xf32>
    %312 = arith.mulf %26, %311 : vector<8x128xf32>
    %313 = arith.addf %309, %312 : vector<8x128xf32>
    %c3_118 = arith.constant 3 : index
    %c3_119 = arith.constant 3 : index
    %314 = memref.load %arg4[%c3_118, %c3_119] : memref<15x15xf32, #tpu.memory_space<smem>>
    %315 = vector.broadcast %314 : f32 to vector<8x128xf32>
    %316 = arith.mulf %33, %315 : vector<8x128xf32>
    %317 = arith.addf %313, %316 : vector<8x128xf32>
    %c3_120 = arith.constant 3 : index
    %c4_121 = arith.constant 4 : index
    %318 = memref.load %arg4[%c3_120, %c4_121] : memref<15x15xf32, #tpu.memory_space<smem>>
    %319 = vector.broadcast %318 : f32 to vector<8x128xf32>
    %320 = arith.mulf %40, %319 : vector<8x128xf32>
    %321 = arith.addf %317, %320 : vector<8x128xf32>
    %c3_122 = arith.constant 3 : index
    %c5_123 = arith.constant 5 : index
    %322 = memref.load %arg4[%c3_122, %c5_123] : memref<15x15xf32, #tpu.memory_space<smem>>
    %323 = vector.broadcast %322 : f32 to vector<8x128xf32>
    %324 = arith.mulf %47, %323 : vector<8x128xf32>
    %325 = arith.addf %321, %324 : vector<8x128xf32>
    %c3_124 = arith.constant 3 : index
    %c6_125 = arith.constant 6 : index
    %326 = memref.load %arg4[%c3_124, %c6_125] : memref<15x15xf32, #tpu.memory_space<smem>>
    %327 = vector.broadcast %326 : f32 to vector<8x128xf32>
    %328 = arith.mulf %54, %327 : vector<8x128xf32>
    %329 = arith.addf %325, %328 : vector<8x128xf32>
    %c3_126 = arith.constant 3 : index
    %c7_127 = arith.constant 7 : index
    %330 = memref.load %arg4[%c3_126, %c7_127] : memref<15x15xf32, #tpu.memory_space<smem>>
    %331 = vector.broadcast %330 : f32 to vector<8x128xf32>
    %332 = arith.mulf %61, %331 : vector<8x128xf32>
    %333 = arith.addf %329, %332 : vector<8x128xf32>
    %c3_128 = arith.constant 3 : index
    %c8_129 = arith.constant 8 : index
    %334 = memref.load %arg4[%c3_128, %c8_129] : memref<15x15xf32, #tpu.memory_space<smem>>
    %335 = vector.broadcast %334 : f32 to vector<8x128xf32>
    %336 = arith.mulf %68, %335 : vector<8x128xf32>
    %337 = arith.addf %333, %336 : vector<8x128xf32>
    %c3_130 = arith.constant 3 : index
    %c9_131 = arith.constant 9 : index
    %338 = memref.load %arg4[%c3_130, %c9_131] : memref<15x15xf32, #tpu.memory_space<smem>>
    %339 = vector.broadcast %338 : f32 to vector<8x128xf32>
    %340 = arith.mulf %75, %339 : vector<8x128xf32>
    %341 = arith.addf %337, %340 : vector<8x128xf32>
    %c3_132 = arith.constant 3 : index
    %c10_133 = arith.constant 10 : index
    %342 = memref.load %arg4[%c3_132, %c10_133] : memref<15x15xf32, #tpu.memory_space<smem>>
    %343 = vector.broadcast %342 : f32 to vector<8x128xf32>
    %344 = arith.mulf %82, %343 : vector<8x128xf32>
    %345 = arith.addf %341, %344 : vector<8x128xf32>
    %c3_134 = arith.constant 3 : index
    %c11_135 = arith.constant 11 : index
    %346 = memref.load %arg4[%c3_134, %c11_135] : memref<15x15xf32, #tpu.memory_space<smem>>
    %347 = vector.broadcast %346 : f32 to vector<8x128xf32>
    %348 = arith.mulf %89, %347 : vector<8x128xf32>
    %349 = arith.addf %345, %348 : vector<8x128xf32>
    %c3_136 = arith.constant 3 : index
    %c12_137 = arith.constant 12 : index
    %350 = memref.load %arg4[%c3_136, %c12_137] : memref<15x15xf32, #tpu.memory_space<smem>>
    %351 = vector.broadcast %350 : f32 to vector<8x128xf32>
    %352 = arith.mulf %96, %351 : vector<8x128xf32>
    %353 = arith.addf %349, %352 : vector<8x128xf32>
    %c3_138 = arith.constant 3 : index
    %c13_139 = arith.constant 13 : index
    %354 = memref.load %arg4[%c3_138, %c13_139] : memref<15x15xf32, #tpu.memory_space<smem>>
    %355 = vector.broadcast %354 : f32 to vector<8x128xf32>
    %356 = arith.mulf %103, %355 : vector<8x128xf32>
    %357 = arith.addf %353, %356 : vector<8x128xf32>
    %c3_140 = arith.constant 3 : index
    %c14_141 = arith.constant 14 : index
    %358 = memref.load %arg4[%c3_140, %c14_141] : memref<15x15xf32, #tpu.memory_space<smem>>
    %359 = vector.broadcast %358 : f32 to vector<8x128xf32>
    %360 = arith.mulf %110, %359 : vector<8x128xf32>
    %361 = arith.addf %357, %360 : vector<8x128xf32>
    %c3_142 = arith.constant 3 : index
    %362 = memref.load %arg5[%c3_142] : memref<15xf32, #tpu.memory_space<smem>>
    %363 = vector.broadcast %362 : f32 to vector<8x128xf32>
    %364 = arith.addf %361, %363 : vector<8x128xf32>
    %cst_143 = arith.constant 0.000000e+00 : f32
    %365 = vector.broadcast %cst_143 : f32 to vector<8x128xf32>
    %366 = arith.maximumf %364, %365 : vector<8x128xf32>
    %c4_144 = arith.constant 4 : index
    %c0_145 = arith.constant 0 : index
    %367 = memref.load %arg4[%c4_144, %c0_145] : memref<15x15xf32, #tpu.memory_space<smem>>
    %368 = vector.broadcast %367 : f32 to vector<8x128xf32>
    %369 = arith.mulf %12, %368 : vector<8x128xf32>
    %c4_146 = arith.constant 4 : index
    %c1_147 = arith.constant 1 : index
    %370 = memref.load %arg4[%c4_146, %c1_147] : memref<15x15xf32, #tpu.memory_space<smem>>
    %371 = vector.broadcast %370 : f32 to vector<8x128xf32>
    %372 = arith.mulf %19, %371 : vector<8x128xf32>
    %373 = arith.addf %369, %372 : vector<8x128xf32>
    %c4_148 = arith.constant 4 : index
    %c2_149 = arith.constant 2 : index
    %374 = memref.load %arg4[%c4_148, %c2_149] : memref<15x15xf32, #tpu.memory_space<smem>>
    %375 = vector.broadcast %374 : f32 to vector<8x128xf32>
    %376 = arith.mulf %26, %375 : vector<8x128xf32>
    %377 = arith.addf %373, %376 : vector<8x128xf32>
    %c4_150 = arith.constant 4 : index
    %c3_151 = arith.constant 3 : index
    %378 = memref.load %arg4[%c4_150, %c3_151] : memref<15x15xf32, #tpu.memory_space<smem>>
    %379 = vector.broadcast %378 : f32 to vector<8x128xf32>
    %380 = arith.mulf %33, %379 : vector<8x128xf32>
    %381 = arith.addf %377, %380 : vector<8x128xf32>
    %c4_152 = arith.constant 4 : index
    %c4_153 = arith.constant 4 : index
    %382 = memref.load %arg4[%c4_152, %c4_153] : memref<15x15xf32, #tpu.memory_space<smem>>
    %383 = vector.broadcast %382 : f32 to vector<8x128xf32>
    %384 = arith.mulf %40, %383 : vector<8x128xf32>
    %385 = arith.addf %381, %384 : vector<8x128xf32>
    %c4_154 = arith.constant 4 : index
    %c5_155 = arith.constant 5 : index
    %386 = memref.load %arg4[%c4_154, %c5_155] : memref<15x15xf32, #tpu.memory_space<smem>>
    %387 = vector.broadcast %386 : f32 to vector<8x128xf32>
    %388 = arith.mulf %47, %387 : vector<8x128xf32>
    %389 = arith.addf %385, %388 : vector<8x128xf32>
    %c4_156 = arith.constant 4 : index
    %c6_157 = arith.constant 6 : index
    %390 = memref.load %arg4[%c4_156, %c6_157] : memref<15x15xf32, #tpu.memory_space<smem>>
    %391 = vector.broadcast %390 : f32 to vector<8x128xf32>
    %392 = arith.mulf %54, %391 : vector<8x128xf32>
    %393 = arith.addf %389, %392 : vector<8x128xf32>
    %c4_158 = arith.constant 4 : index
    %c7_159 = arith.constant 7 : index
    %394 = memref.load %arg4[%c4_158, %c7_159] : memref<15x15xf32, #tpu.memory_space<smem>>
    %395 = vector.broadcast %394 : f32 to vector<8x128xf32>
    %396 = arith.mulf %61, %395 : vector<8x128xf32>
    %397 = arith.addf %393, %396 : vector<8x128xf32>
    %c4_160 = arith.constant 4 : index
    %c8_161 = arith.constant 8 : index
    %398 = memref.load %arg4[%c4_160, %c8_161] : memref<15x15xf32, #tpu.memory_space<smem>>
    %399 = vector.broadcast %398 : f32 to vector<8x128xf32>
    %400 = arith.mulf %68, %399 : vector<8x128xf32>
    %401 = arith.addf %397, %400 : vector<8x128xf32>
    %c4_162 = arith.constant 4 : index
    %c9_163 = arith.constant 9 : index
    %402 = memref.load %arg4[%c4_162, %c9_163] : memref<15x15xf32, #tpu.memory_space<smem>>
    %403 = vector.broadcast %402 : f32 to vector<8x128xf32>
    %404 = arith.mulf %75, %403 : vector<8x128xf32>
    %405 = arith.addf %401, %404 : vector<8x128xf32>
    %c4_164 = arith.constant 4 : index
    %c10_165 = arith.constant 10 : index
    %406 = memref.load %arg4[%c4_164, %c10_165] : memref<15x15xf32, #tpu.memory_space<smem>>
    %407 = vector.broadcast %406 : f32 to vector<8x128xf32>
    %408 = arith.mulf %82, %407 : vector<8x128xf32>
    %409 = arith.addf %405, %408 : vector<8x128xf32>
    %c4_166 = arith.constant 4 : index
    %c11_167 = arith.constant 11 : index
    %410 = memref.load %arg4[%c4_166, %c11_167] : memref<15x15xf32, #tpu.memory_space<smem>>
    %411 = vector.broadcast %410 : f32 to vector<8x128xf32>
    %412 = arith.mulf %89, %411 : vector<8x128xf32>
    %413 = arith.addf %409, %412 : vector<8x128xf32>
    %c4_168 = arith.constant 4 : index
    %c12_169 = arith.constant 12 : index
    %414 = memref.load %arg4[%c4_168, %c12_169] : memref<15x15xf32, #tpu.memory_space<smem>>
    %415 = vector.broadcast %414 : f32 to vector<8x128xf32>
    %416 = arith.mulf %96, %415 : vector<8x128xf32>
    %417 = arith.addf %413, %416 : vector<8x128xf32>
    %c4_170 = arith.constant 4 : index
    %c13_171 = arith.constant 13 : index
    %418 = memref.load %arg4[%c4_170, %c13_171] : memref<15x15xf32, #tpu.memory_space<smem>>
    %419 = vector.broadcast %418 : f32 to vector<8x128xf32>
    %420 = arith.mulf %103, %419 : vector<8x128xf32>
    %421 = arith.addf %417, %420 : vector<8x128xf32>
    %c4_172 = arith.constant 4 : index
    %c14_173 = arith.constant 14 : index
    %422 = memref.load %arg4[%c4_172, %c14_173] : memref<15x15xf32, #tpu.memory_space<smem>>
    %423 = vector.broadcast %422 : f32 to vector<8x128xf32>
    %424 = arith.mulf %110, %423 : vector<8x128xf32>
    %425 = arith.addf %421, %424 : vector<8x128xf32>
    %c4_174 = arith.constant 4 : index
    %426 = memref.load %arg5[%c4_174] : memref<15xf32, #tpu.memory_space<smem>>
    %427 = vector.broadcast %426 : f32 to vector<8x128xf32>
    %428 = arith.addf %425, %427 : vector<8x128xf32>
    %cst_175 = arith.constant 0.000000e+00 : f32
    %429 = vector.broadcast %cst_175 : f32 to vector<8x128xf32>
    %430 = arith.maximumf %428, %429 : vector<8x128xf32>
    %c5_176 = arith.constant 5 : index
    %c0_177 = arith.constant 0 : index
    %431 = memref.load %arg4[%c5_176, %c0_177] : memref<15x15xf32, #tpu.memory_space<smem>>
    %432 = vector.broadcast %431 : f32 to vector<8x128xf32>
    %433 = arith.mulf %12, %432 : vector<8x128xf32>
    %c5_178 = arith.constant 5 : index
    %c1_179 = arith.constant 1 : index
    %434 = memref.load %arg4[%c5_178, %c1_179] : memref<15x15xf32, #tpu.memory_space<smem>>
    %435 = vector.broadcast %434 : f32 to vector<8x128xf32>
    %436 = arith.mulf %19, %435 : vector<8x128xf32>
    %437 = arith.addf %433, %436 : vector<8x128xf32>
    %c5_180 = arith.constant 5 : index
    %c2_181 = arith.constant 2 : index
    %438 = memref.load %arg4[%c5_180, %c2_181] : memref<15x15xf32, #tpu.memory_space<smem>>
    %439 = vector.broadcast %438 : f32 to vector<8x128xf32>
    %440 = arith.mulf %26, %439 : vector<8x128xf32>
    %441 = arith.addf %437, %440 : vector<8x128xf32>
    %c5_182 = arith.constant 5 : index
    %c3_183 = arith.constant 3 : index
    %442 = memref.load %arg4[%c5_182, %c3_183] : memref<15x15xf32, #tpu.memory_space<smem>>
    %443 = vector.broadcast %442 : f32 to vector<8x128xf32>
    %444 = arith.mulf %33, %443 : vector<8x128xf32>
    %445 = arith.addf %441, %444 : vector<8x128xf32>
    %c5_184 = arith.constant 5 : index
    %c4_185 = arith.constant 4 : index
    %446 = memref.load %arg4[%c5_184, %c4_185] : memref<15x15xf32, #tpu.memory_space<smem>>
    %447 = vector.broadcast %446 : f32 to vector<8x128xf32>
    %448 = arith.mulf %40, %447 : vector<8x128xf32>
    %449 = arith.addf %445, %448 : vector<8x128xf32>
    %c5_186 = arith.constant 5 : index
    %c5_187 = arith.constant 5 : index
    %450 = memref.load %arg4[%c5_186, %c5_187] : memref<15x15xf32, #tpu.memory_space<smem>>
    %451 = vector.broadcast %450 : f32 to vector<8x128xf32>
    %452 = arith.mulf %47, %451 : vector<8x128xf32>
    %453 = arith.addf %449, %452 : vector<8x128xf32>
    %c5_188 = arith.constant 5 : index
    %c6_189 = arith.constant 6 : index
    %454 = memref.load %arg4[%c5_188, %c6_189] : memref<15x15xf32, #tpu.memory_space<smem>>
    %455 = vector.broadcast %454 : f32 to vector<8x128xf32>
    %456 = arith.mulf %54, %455 : vector<8x128xf32>
    %457 = arith.addf %453, %456 : vector<8x128xf32>
    %c5_190 = arith.constant 5 : index
    %c7_191 = arith.constant 7 : index
    %458 = memref.load %arg4[%c5_190, %c7_191] : memref<15x15xf32, #tpu.memory_space<smem>>
    %459 = vector.broadcast %458 : f32 to vector<8x128xf32>
    %460 = arith.mulf %61, %459 : vector<8x128xf32>
    %461 = arith.addf %457, %460 : vector<8x128xf32>
    %c5_192 = arith.constant 5 : index
    %c8_193 = arith.constant 8 : index
    %462 = memref.load %arg4[%c5_192, %c8_193] : memref<15x15xf32, #tpu.memory_space<smem>>
    %463 = vector.broadcast %462 : f32 to vector<8x128xf32>
    %464 = arith.mulf %68, %463 : vector<8x128xf32>
    %465 = arith.addf %461, %464 : vector<8x128xf32>
    %c5_194 = arith.constant 5 : index
    %c9_195 = arith.constant 9 : index
    %466 = memref.load %arg4[%c5_194, %c9_195] : memref<15x15xf32, #tpu.memory_space<smem>>
    %467 = vector.broadcast %466 : f32 to vector<8x128xf32>
    %468 = arith.mulf %75, %467 : vector<8x128xf32>
    %469 = arith.addf %465, %468 : vector<8x128xf32>
    %c5_196 = arith.constant 5 : index
    %c10_197 = arith.constant 10 : index
    %470 = memref.load %arg4[%c5_196, %c10_197] : memref<15x15xf32, #tpu.memory_space<smem>>
    %471 = vector.broadcast %470 : f32 to vector<8x128xf32>
    %472 = arith.mulf %82, %471 : vector<8x128xf32>
    %473 = arith.addf %469, %472 : vector<8x128xf32>
    %c5_198 = arith.constant 5 : index
    %c11_199 = arith.constant 11 : index
    %474 = memref.load %arg4[%c5_198, %c11_199] : memref<15x15xf32, #tpu.memory_space<smem>>
    %475 = vector.broadcast %474 : f32 to vector<8x128xf32>
    %476 = arith.mulf %89, %475 : vector<8x128xf32>
    %477 = arith.addf %473, %476 : vector<8x128xf32>
    %c5_200 = arith.constant 5 : index
    %c12_201 = arith.constant 12 : index
    %478 = memref.load %arg4[%c5_200, %c12_201] : memref<15x15xf32, #tpu.memory_space<smem>>
    %479 = vector.broadcast %478 : f32 to vector<8x128xf32>
    %480 = arith.mulf %96, %479 : vector<8x128xf32>
    %481 = arith.addf %477, %480 : vector<8x128xf32>
    %c5_202 = arith.constant 5 : index
    %c13_203 = arith.constant 13 : index
    %482 = memref.load %arg4[%c5_202, %c13_203] : memref<15x15xf32, #tpu.memory_space<smem>>
    %483 = vector.broadcast %482 : f32 to vector<8x128xf32>
    %484 = arith.mulf %103, %483 : vector<8x128xf32>
    %485 = arith.addf %481, %484 : vector<8x128xf32>
    %c5_204 = arith.constant 5 : index
    %c14_205 = arith.constant 14 : index
    %486 = memref.load %arg4[%c5_204, %c14_205] : memref<15x15xf32, #tpu.memory_space<smem>>
    %487 = vector.broadcast %486 : f32 to vector<8x128xf32>
    %488 = arith.mulf %110, %487 : vector<8x128xf32>
    %489 = arith.addf %485, %488 : vector<8x128xf32>
    %c5_206 = arith.constant 5 : index
    %490 = memref.load %arg5[%c5_206] : memref<15xf32, #tpu.memory_space<smem>>
    %491 = vector.broadcast %490 : f32 to vector<8x128xf32>
    %492 = arith.addf %489, %491 : vector<8x128xf32>
    %cst_207 = arith.constant 0.000000e+00 : f32
    %493 = vector.broadcast %cst_207 : f32 to vector<8x128xf32>
    %494 = arith.maximumf %492, %493 : vector<8x128xf32>
    %c6_208 = arith.constant 6 : index
    %c0_209 = arith.constant 0 : index
    %495 = memref.load %arg4[%c6_208, %c0_209] : memref<15x15xf32, #tpu.memory_space<smem>>
    %496 = vector.broadcast %495 : f32 to vector<8x128xf32>
    %497 = arith.mulf %12, %496 : vector<8x128xf32>
    %c6_210 = arith.constant 6 : index
    %c1_211 = arith.constant 1 : index
    %498 = memref.load %arg4[%c6_210, %c1_211] : memref<15x15xf32, #tpu.memory_space<smem>>
    %499 = vector.broadcast %498 : f32 to vector<8x128xf32>
    %500 = arith.mulf %19, %499 : vector<8x128xf32>
    %501 = arith.addf %497, %500 : vector<8x128xf32>
    %c6_212 = arith.constant 6 : index
    %c2_213 = arith.constant 2 : index
    %502 = memref.load %arg4[%c6_212, %c2_213] : memref<15x15xf32, #tpu.memory_space<smem>>
    %503 = vector.broadcast %502 : f32 to vector<8x128xf32>
    %504 = arith.mulf %26, %503 : vector<8x128xf32>
    %505 = arith.addf %501, %504 : vector<8x128xf32>
    %c6_214 = arith.constant 6 : index
    %c3_215 = arith.constant 3 : index
    %506 = memref.load %arg4[%c6_214, %c3_215] : memref<15x15xf32, #tpu.memory_space<smem>>
    %507 = vector.broadcast %506 : f32 to vector<8x128xf32>
    %508 = arith.mulf %33, %507 : vector<8x128xf32>
    %509 = arith.addf %505, %508 : vector<8x128xf32>
    %c6_216 = arith.constant 6 : index
    %c4_217 = arith.constant 4 : index
    %510 = memref.load %arg4[%c6_216, %c4_217] : memref<15x15xf32, #tpu.memory_space<smem>>
    %511 = vector.broadcast %510 : f32 to vector<8x128xf32>
    %512 = arith.mulf %40, %511 : vector<8x128xf32>
    %513 = arith.addf %509, %512 : vector<8x128xf32>
    %c6_218 = arith.constant 6 : index
    %c5_219 = arith.constant 5 : index
    %514 = memref.load %arg4[%c6_218, %c5_219] : memref<15x15xf32, #tpu.memory_space<smem>>
    %515 = vector.broadcast %514 : f32 to vector<8x128xf32>
    %516 = arith.mulf %47, %515 : vector<8x128xf32>
    %517 = arith.addf %513, %516 : vector<8x128xf32>
    %c6_220 = arith.constant 6 : index
    %c6_221 = arith.constant 6 : index
    %518 = memref.load %arg4[%c6_220, %c6_221] : memref<15x15xf32, #tpu.memory_space<smem>>
    %519 = vector.broadcast %518 : f32 to vector<8x128xf32>
    %520 = arith.mulf %54, %519 : vector<8x128xf32>
    %521 = arith.addf %517, %520 : vector<8x128xf32>
    %c6_222 = arith.constant 6 : index
    %c7_223 = arith.constant 7 : index
    %522 = memref.load %arg4[%c6_222, %c7_223] : memref<15x15xf32, #tpu.memory_space<smem>>
    %523 = vector.broadcast %522 : f32 to vector<8x128xf32>
    %524 = arith.mulf %61, %523 : vector<8x128xf32>
    %525 = arith.addf %521, %524 : vector<8x128xf32>
    %c6_224 = arith.constant 6 : index
    %c8_225 = arith.constant 8 : index
    %526 = memref.load %arg4[%c6_224, %c8_225] : memref<15x15xf32, #tpu.memory_space<smem>>
    %527 = vector.broadcast %526 : f32 to vector<8x128xf32>
    %528 = arith.mulf %68, %527 : vector<8x128xf32>
    %529 = arith.addf %525, %528 : vector<8x128xf32>
    %c6_226 = arith.constant 6 : index
    %c9_227 = arith.constant 9 : index
    %530 = memref.load %arg4[%c6_226, %c9_227] : memref<15x15xf32, #tpu.memory_space<smem>>
    %531 = vector.broadcast %530 : f32 to vector<8x128xf32>
    %532 = arith.mulf %75, %531 : vector<8x128xf32>
    %533 = arith.addf %529, %532 : vector<8x128xf32>
    %c6_228 = arith.constant 6 : index
    %c10_229 = arith.constant 10 : index
    %534 = memref.load %arg4[%c6_228, %c10_229] : memref<15x15xf32, #tpu.memory_space<smem>>
    %535 = vector.broadcast %534 : f32 to vector<8x128xf32>
    %536 = arith.mulf %82, %535 : vector<8x128xf32>
    %537 = arith.addf %533, %536 : vector<8x128xf32>
    %c6_230 = arith.constant 6 : index
    %c11_231 = arith.constant 11 : index
    %538 = memref.load %arg4[%c6_230, %c11_231] : memref<15x15xf32, #tpu.memory_space<smem>>
    %539 = vector.broadcast %538 : f32 to vector<8x128xf32>
    %540 = arith.mulf %89, %539 : vector<8x128xf32>
    %541 = arith.addf %537, %540 : vector<8x128xf32>
    %c6_232 = arith.constant 6 : index
    %c12_233 = arith.constant 12 : index
    %542 = memref.load %arg4[%c6_232, %c12_233] : memref<15x15xf32, #tpu.memory_space<smem>>
    %543 = vector.broadcast %542 : f32 to vector<8x128xf32>
    %544 = arith.mulf %96, %543 : vector<8x128xf32>
    %545 = arith.addf %541, %544 : vector<8x128xf32>
    %c6_234 = arith.constant 6 : index
    %c13_235 = arith.constant 13 : index
    %546 = memref.load %arg4[%c6_234, %c13_235] : memref<15x15xf32, #tpu.memory_space<smem>>
    %547 = vector.broadcast %546 : f32 to vector<8x128xf32>
    %548 = arith.mulf %103, %547 : vector<8x128xf32>
    %549 = arith.addf %545, %548 : vector<8x128xf32>
    %c6_236 = arith.constant 6 : index
    %c14_237 = arith.constant 14 : index
    %550 = memref.load %arg4[%c6_236, %c14_237] : memref<15x15xf32, #tpu.memory_space<smem>>
    %551 = vector.broadcast %550 : f32 to vector<8x128xf32>
    %552 = arith.mulf %110, %551 : vector<8x128xf32>
    %553 = arith.addf %549, %552 : vector<8x128xf32>
    %c6_238 = arith.constant 6 : index
    %554 = memref.load %arg5[%c6_238] : memref<15xf32, #tpu.memory_space<smem>>
    %555 = vector.broadcast %554 : f32 to vector<8x128xf32>
    %556 = arith.addf %553, %555 : vector<8x128xf32>
    %cst_239 = arith.constant 0.000000e+00 : f32
    %557 = vector.broadcast %cst_239 : f32 to vector<8x128xf32>
    %558 = arith.maximumf %556, %557 : vector<8x128xf32>
    %c7_240 = arith.constant 7 : index
    %c0_241 = arith.constant 0 : index
    %559 = memref.load %arg4[%c7_240, %c0_241] : memref<15x15xf32, #tpu.memory_space<smem>>
    %560 = vector.broadcast %559 : f32 to vector<8x128xf32>
    %561 = arith.mulf %12, %560 : vector<8x128xf32>
    %c7_242 = arith.constant 7 : index
    %c1_243 = arith.constant 1 : index
    %562 = memref.load %arg4[%c7_242, %c1_243] : memref<15x15xf32, #tpu.memory_space<smem>>
    %563 = vector.broadcast %562 : f32 to vector<8x128xf32>
    %564 = arith.mulf %19, %563 : vector<8x128xf32>
    %565 = arith.addf %561, %564 : vector<8x128xf32>
    %c7_244 = arith.constant 7 : index
    %c2_245 = arith.constant 2 : index
    %566 = memref.load %arg4[%c7_244, %c2_245] : memref<15x15xf32, #tpu.memory_space<smem>>
    %567 = vector.broadcast %566 : f32 to vector<8x128xf32>
    %568 = arith.mulf %26, %567 : vector<8x128xf32>
    %569 = arith.addf %565, %568 : vector<8x128xf32>
    %c7_246 = arith.constant 7 : index
    %c3_247 = arith.constant 3 : index
    %570 = memref.load %arg4[%c7_246, %c3_247] : memref<15x15xf32, #tpu.memory_space<smem>>
    %571 = vector.broadcast %570 : f32 to vector<8x128xf32>
    %572 = arith.mulf %33, %571 : vector<8x128xf32>
    %573 = arith.addf %569, %572 : vector<8x128xf32>
    %c7_248 = arith.constant 7 : index
    %c4_249 = arith.constant 4 : index
    %574 = memref.load %arg4[%c7_248, %c4_249] : memref<15x15xf32, #tpu.memory_space<smem>>
    %575 = vector.broadcast %574 : f32 to vector<8x128xf32>
    %576 = arith.mulf %40, %575 : vector<8x128xf32>
    %577 = arith.addf %573, %576 : vector<8x128xf32>
    %c7_250 = arith.constant 7 : index
    %c5_251 = arith.constant 5 : index
    %578 = memref.load %arg4[%c7_250, %c5_251] : memref<15x15xf32, #tpu.memory_space<smem>>
    %579 = vector.broadcast %578 : f32 to vector<8x128xf32>
    %580 = arith.mulf %47, %579 : vector<8x128xf32>
    %581 = arith.addf %577, %580 : vector<8x128xf32>
    %c7_252 = arith.constant 7 : index
    %c6_253 = arith.constant 6 : index
    %582 = memref.load %arg4[%c7_252, %c6_253] : memref<15x15xf32, #tpu.memory_space<smem>>
    %583 = vector.broadcast %582 : f32 to vector<8x128xf32>
    %584 = arith.mulf %54, %583 : vector<8x128xf32>
    %585 = arith.addf %581, %584 : vector<8x128xf32>
    %c7_254 = arith.constant 7 : index
    %c7_255 = arith.constant 7 : index
    %586 = memref.load %arg4[%c7_254, %c7_255] : memref<15x15xf32, #tpu.memory_space<smem>>
    %587 = vector.broadcast %586 : f32 to vector<8x128xf32>
    %588 = arith.mulf %61, %587 : vector<8x128xf32>
    %589 = arith.addf %585, %588 : vector<8x128xf32>
    %c7_256 = arith.constant 7 : index
    %c8_257 = arith.constant 8 : index
    %590 = memref.load %arg4[%c7_256, %c8_257] : memref<15x15xf32, #tpu.memory_space<smem>>
    %591 = vector.broadcast %590 : f32 to vector<8x128xf32>
    %592 = arith.mulf %68, %591 : vector<8x128xf32>
    %593 = arith.addf %589, %592 : vector<8x128xf32>
    %c7_258 = arith.constant 7 : index
    %c9_259 = arith.constant 9 : index
    %594 = memref.load %arg4[%c7_258, %c9_259] : memref<15x15xf32, #tpu.memory_space<smem>>
    %595 = vector.broadcast %594 : f32 to vector<8x128xf32>
    %596 = arith.mulf %75, %595 : vector<8x128xf32>
    %597 = arith.addf %593, %596 : vector<8x128xf32>
    %c7_260 = arith.constant 7 : index
    %c10_261 = arith.constant 10 : index
    %598 = memref.load %arg4[%c7_260, %c10_261] : memref<15x15xf32, #tpu.memory_space<smem>>
    %599 = vector.broadcast %598 : f32 to vector<8x128xf32>
    %600 = arith.mulf %82, %599 : vector<8x128xf32>
    %601 = arith.addf %597, %600 : vector<8x128xf32>
    %c7_262 = arith.constant 7 : index
    %c11_263 = arith.constant 11 : index
    %602 = memref.load %arg4[%c7_262, %c11_263] : memref<15x15xf32, #tpu.memory_space<smem>>
    %603 = vector.broadcast %602 : f32 to vector<8x128xf32>
    %604 = arith.mulf %89, %603 : vector<8x128xf32>
    %605 = arith.addf %601, %604 : vector<8x128xf32>
    %c7_264 = arith.constant 7 : index
    %c12_265 = arith.constant 12 : index
    %606 = memref.load %arg4[%c7_264, %c12_265] : memref<15x15xf32, #tpu.memory_space<smem>>
    %607 = vector.broadcast %606 : f32 to vector<8x128xf32>
    %608 = arith.mulf %96, %607 : vector<8x128xf32>
    %609 = arith.addf %605, %608 : vector<8x128xf32>
    %c7_266 = arith.constant 7 : index
    %c13_267 = arith.constant 13 : index
    %610 = memref.load %arg4[%c7_266, %c13_267] : memref<15x15xf32, #tpu.memory_space<smem>>
    %611 = vector.broadcast %610 : f32 to vector<8x128xf32>
    %612 = arith.mulf %103, %611 : vector<8x128xf32>
    %613 = arith.addf %609, %612 : vector<8x128xf32>
    %c7_268 = arith.constant 7 : index
    %c14_269 = arith.constant 14 : index
    %614 = memref.load %arg4[%c7_268, %c14_269] : memref<15x15xf32, #tpu.memory_space<smem>>
    %615 = vector.broadcast %614 : f32 to vector<8x128xf32>
    %616 = arith.mulf %110, %615 : vector<8x128xf32>
    %617 = arith.addf %613, %616 : vector<8x128xf32>
    %c7_270 = arith.constant 7 : index
    %618 = memref.load %arg5[%c7_270] : memref<15xf32, #tpu.memory_space<smem>>
    %619 = vector.broadcast %618 : f32 to vector<8x128xf32>
    %620 = arith.addf %617, %619 : vector<8x128xf32>
    %cst_271 = arith.constant 0.000000e+00 : f32
    %621 = vector.broadcast %cst_271 : f32 to vector<8x128xf32>
    %622 = arith.maximumf %620, %621 : vector<8x128xf32>
    %c8_272 = arith.constant 8 : index
    %c0_273 = arith.constant 0 : index
    %623 = memref.load %arg4[%c8_272, %c0_273] : memref<15x15xf32, #tpu.memory_space<smem>>
    %624 = vector.broadcast %623 : f32 to vector<8x128xf32>
    %625 = arith.mulf %12, %624 : vector<8x128xf32>
    %c8_274 = arith.constant 8 : index
    %c1_275 = arith.constant 1 : index
    %626 = memref.load %arg4[%c8_274, %c1_275] : memref<15x15xf32, #tpu.memory_space<smem>>
    %627 = vector.broadcast %626 : f32 to vector<8x128xf32>
    %628 = arith.mulf %19, %627 : vector<8x128xf32>
    %629 = arith.addf %625, %628 : vector<8x128xf32>
    %c8_276 = arith.constant 8 : index
    %c2_277 = arith.constant 2 : index
    %630 = memref.load %arg4[%c8_276, %c2_277] : memref<15x15xf32, #tpu.memory_space<smem>>
    %631 = vector.broadcast %630 : f32 to vector<8x128xf32>
    %632 = arith.mulf %26, %631 : vector<8x128xf32>
    %633 = arith.addf %629, %632 : vector<8x128xf32>
    %c8_278 = arith.constant 8 : index
    %c3_279 = arith.constant 3 : index
    %634 = memref.load %arg4[%c8_278, %c3_279] : memref<15x15xf32, #tpu.memory_space<smem>>
    %635 = vector.broadcast %634 : f32 to vector<8x128xf32>
    %636 = arith.mulf %33, %635 : vector<8x128xf32>
    %637 = arith.addf %633, %636 : vector<8x128xf32>
    %c8_280 = arith.constant 8 : index
    %c4_281 = arith.constant 4 : index
    %638 = memref.load %arg4[%c8_280, %c4_281] : memref<15x15xf32, #tpu.memory_space<smem>>
    %639 = vector.broadcast %638 : f32 to vector<8x128xf32>
    %640 = arith.mulf %40, %639 : vector<8x128xf32>
    %641 = arith.addf %637, %640 : vector<8x128xf32>
    %c8_282 = arith.constant 8 : index
    %c5_283 = arith.constant 5 : index
    %642 = memref.load %arg4[%c8_282, %c5_283] : memref<15x15xf32, #tpu.memory_space<smem>>
    %643 = vector.broadcast %642 : f32 to vector<8x128xf32>
    %644 = arith.mulf %47, %643 : vector<8x128xf32>
    %645 = arith.addf %641, %644 : vector<8x128xf32>
    %c8_284 = arith.constant 8 : index
    %c6_285 = arith.constant 6 : index
    %646 = memref.load %arg4[%c8_284, %c6_285] : memref<15x15xf32, #tpu.memory_space<smem>>
    %647 = vector.broadcast %646 : f32 to vector<8x128xf32>
    %648 = arith.mulf %54, %647 : vector<8x128xf32>
    %649 = arith.addf %645, %648 : vector<8x128xf32>
    %c8_286 = arith.constant 8 : index
    %c7_287 = arith.constant 7 : index
    %650 = memref.load %arg4[%c8_286, %c7_287] : memref<15x15xf32, #tpu.memory_space<smem>>
    %651 = vector.broadcast %650 : f32 to vector<8x128xf32>
    %652 = arith.mulf %61, %651 : vector<8x128xf32>
    %653 = arith.addf %649, %652 : vector<8x128xf32>
    %c8_288 = arith.constant 8 : index
    %c8_289 = arith.constant 8 : index
    %654 = memref.load %arg4[%c8_288, %c8_289] : memref<15x15xf32, #tpu.memory_space<smem>>
    %655 = vector.broadcast %654 : f32 to vector<8x128xf32>
    %656 = arith.mulf %68, %655 : vector<8x128xf32>
    %657 = arith.addf %653, %656 : vector<8x128xf32>
    %c8_290 = arith.constant 8 : index
    %c9_291 = arith.constant 9 : index
    %658 = memref.load %arg4[%c8_290, %c9_291] : memref<15x15xf32, #tpu.memory_space<smem>>
    %659 = vector.broadcast %658 : f32 to vector<8x128xf32>
    %660 = arith.mulf %75, %659 : vector<8x128xf32>
    %661 = arith.addf %657, %660 : vector<8x128xf32>
    %c8_292 = arith.constant 8 : index
    %c10_293 = arith.constant 10 : index
    %662 = memref.load %arg4[%c8_292, %c10_293] : memref<15x15xf32, #tpu.memory_space<smem>>
    %663 = vector.broadcast %662 : f32 to vector<8x128xf32>
    %664 = arith.mulf %82, %663 : vector<8x128xf32>
    %665 = arith.addf %661, %664 : vector<8x128xf32>
    %c8_294 = arith.constant 8 : index
    %c11_295 = arith.constant 11 : index
    %666 = memref.load %arg4[%c8_294, %c11_295] : memref<15x15xf32, #tpu.memory_space<smem>>
    %667 = vector.broadcast %666 : f32 to vector<8x128xf32>
    %668 = arith.mulf %89, %667 : vector<8x128xf32>
    %669 = arith.addf %665, %668 : vector<8x128xf32>
    %c8_296 = arith.constant 8 : index
    %c12_297 = arith.constant 12 : index
    %670 = memref.load %arg4[%c8_296, %c12_297] : memref<15x15xf32, #tpu.memory_space<smem>>
    %671 = vector.broadcast %670 : f32 to vector<8x128xf32>
    %672 = arith.mulf %96, %671 : vector<8x128xf32>
    %673 = arith.addf %669, %672 : vector<8x128xf32>
    %c8_298 = arith.constant 8 : index
    %c13_299 = arith.constant 13 : index
    %674 = memref.load %arg4[%c8_298, %c13_299] : memref<15x15xf32, #tpu.memory_space<smem>>
    %675 = vector.broadcast %674 : f32 to vector<8x128xf32>
    %676 = arith.mulf %103, %675 : vector<8x128xf32>
    %677 = arith.addf %673, %676 : vector<8x128xf32>
    %c8_300 = arith.constant 8 : index
    %c14_301 = arith.constant 14 : index
    %678 = memref.load %arg4[%c8_300, %c14_301] : memref<15x15xf32, #tpu.memory_space<smem>>
    %679 = vector.broadcast %678 : f32 to vector<8x128xf32>
    %680 = arith.mulf %110, %679 : vector<8x128xf32>
    %681 = arith.addf %677, %680 : vector<8x128xf32>
    %c8_302 = arith.constant 8 : index
    %682 = memref.load %arg5[%c8_302] : memref<15xf32, #tpu.memory_space<smem>>
    %683 = vector.broadcast %682 : f32 to vector<8x128xf32>
    %684 = arith.addf %681, %683 : vector<8x128xf32>
    %cst_303 = arith.constant 0.000000e+00 : f32
    %685 = vector.broadcast %cst_303 : f32 to vector<8x128xf32>
    %686 = arith.maximumf %684, %685 : vector<8x128xf32>
    %c9_304 = arith.constant 9 : index
    %c0_305 = arith.constant 0 : index
    %687 = memref.load %arg4[%c9_304, %c0_305] : memref<15x15xf32, #tpu.memory_space<smem>>
    %688 = vector.broadcast %687 : f32 to vector<8x128xf32>
    %689 = arith.mulf %12, %688 : vector<8x128xf32>
    %c9_306 = arith.constant 9 : index
    %c1_307 = arith.constant 1 : index
    %690 = memref.load %arg4[%c9_306, %c1_307] : memref<15x15xf32, #tpu.memory_space<smem>>
    %691 = vector.broadcast %690 : f32 to vector<8x128xf32>
    %692 = arith.mulf %19, %691 : vector<8x128xf32>
    %693 = arith.addf %689, %692 : vector<8x128xf32>
    %c9_308 = arith.constant 9 : index
    %c2_309 = arith.constant 2 : index
    %694 = memref.load %arg4[%c9_308, %c2_309] : memref<15x15xf32, #tpu.memory_space<smem>>
    %695 = vector.broadcast %694 : f32 to vector<8x128xf32>
    %696 = arith.mulf %26, %695 : vector<8x128xf32>
    %697 = arith.addf %693, %696 : vector<8x128xf32>
    %c9_310 = arith.constant 9 : index
    %c3_311 = arith.constant 3 : index
    %698 = memref.load %arg4[%c9_310, %c3_311] : memref<15x15xf32, #tpu.memory_space<smem>>
    %699 = vector.broadcast %698 : f32 to vector<8x128xf32>
    %700 = arith.mulf %33, %699 : vector<8x128xf32>
    %701 = arith.addf %697, %700 : vector<8x128xf32>
    %c9_312 = arith.constant 9 : index
    %c4_313 = arith.constant 4 : index
    %702 = memref.load %arg4[%c9_312, %c4_313] : memref<15x15xf32, #tpu.memory_space<smem>>
    %703 = vector.broadcast %702 : f32 to vector<8x128xf32>
    %704 = arith.mulf %40, %703 : vector<8x128xf32>
    %705 = arith.addf %701, %704 : vector<8x128xf32>
    %c9_314 = arith.constant 9 : index
    %c5_315 = arith.constant 5 : index
    %706 = memref.load %arg4[%c9_314, %c5_315] : memref<15x15xf32, #tpu.memory_space<smem>>
    %707 = vector.broadcast %706 : f32 to vector<8x128xf32>
    %708 = arith.mulf %47, %707 : vector<8x128xf32>
    %709 = arith.addf %705, %708 : vector<8x128xf32>
    %c9_316 = arith.constant 9 : index
    %c6_317 = arith.constant 6 : index
    %710 = memref.load %arg4[%c9_316, %c6_317] : memref<15x15xf32, #tpu.memory_space<smem>>
    %711 = vector.broadcast %710 : f32 to vector<8x128xf32>
    %712 = arith.mulf %54, %711 : vector<8x128xf32>
    %713 = arith.addf %709, %712 : vector<8x128xf32>
    %c9_318 = arith.constant 9 : index
    %c7_319 = arith.constant 7 : index
    %714 = memref.load %arg4[%c9_318, %c7_319] : memref<15x15xf32, #tpu.memory_space<smem>>
    %715 = vector.broadcast %714 : f32 to vector<8x128xf32>
    %716 = arith.mulf %61, %715 : vector<8x128xf32>
    %717 = arith.addf %713, %716 : vector<8x128xf32>
    %c9_320 = arith.constant 9 : index
    %c8_321 = arith.constant 8 : index
    %718 = memref.load %arg4[%c9_320, %c8_321] : memref<15x15xf32, #tpu.memory_space<smem>>
    %719 = vector.broadcast %718 : f32 to vector<8x128xf32>
    %720 = arith.mulf %68, %719 : vector<8x128xf32>
    %721 = arith.addf %717, %720 : vector<8x128xf32>
    %c9_322 = arith.constant 9 : index
    %c9_323 = arith.constant 9 : index
    %722 = memref.load %arg4[%c9_322, %c9_323] : memref<15x15xf32, #tpu.memory_space<smem>>
    %723 = vector.broadcast %722 : f32 to vector<8x128xf32>
    %724 = arith.mulf %75, %723 : vector<8x128xf32>
    %725 = arith.addf %721, %724 : vector<8x128xf32>
    %c9_324 = arith.constant 9 : index
    %c10_325 = arith.constant 10 : index
    %726 = memref.load %arg4[%c9_324, %c10_325] : memref<15x15xf32, #tpu.memory_space<smem>>
    %727 = vector.broadcast %726 : f32 to vector<8x128xf32>
    %728 = arith.mulf %82, %727 : vector<8x128xf32>
    %729 = arith.addf %725, %728 : vector<8x128xf32>
    %c9_326 = arith.constant 9 : index
    %c11_327 = arith.constant 11 : index
    %730 = memref.load %arg4[%c9_326, %c11_327] : memref<15x15xf32, #tpu.memory_space<smem>>
    %731 = vector.broadcast %730 : f32 to vector<8x128xf32>
    %732 = arith.mulf %89, %731 : vector<8x128xf32>
    %733 = arith.addf %729, %732 : vector<8x128xf32>
    %c9_328 = arith.constant 9 : index
    %c12_329 = arith.constant 12 : index
    %734 = memref.load %arg4[%c9_328, %c12_329] : memref<15x15xf32, #tpu.memory_space<smem>>
    %735 = vector.broadcast %734 : f32 to vector<8x128xf32>
    %736 = arith.mulf %96, %735 : vector<8x128xf32>
    %737 = arith.addf %733, %736 : vector<8x128xf32>
    %c9_330 = arith.constant 9 : index
    %c13_331 = arith.constant 13 : index
    %738 = memref.load %arg4[%c9_330, %c13_331] : memref<15x15xf32, #tpu.memory_space<smem>>
    %739 = vector.broadcast %738 : f32 to vector<8x128xf32>
    %740 = arith.mulf %103, %739 : vector<8x128xf32>
    %741 = arith.addf %737, %740 : vector<8x128xf32>
    %c9_332 = arith.constant 9 : index
    %c14_333 = arith.constant 14 : index
    %742 = memref.load %arg4[%c9_332, %c14_333] : memref<15x15xf32, #tpu.memory_space<smem>>
    %743 = vector.broadcast %742 : f32 to vector<8x128xf32>
    %744 = arith.mulf %110, %743 : vector<8x128xf32>
    %745 = arith.addf %741, %744 : vector<8x128xf32>
    %c9_334 = arith.constant 9 : index
    %746 = memref.load %arg5[%c9_334] : memref<15xf32, #tpu.memory_space<smem>>
    %747 = vector.broadcast %746 : f32 to vector<8x128xf32>
    %748 = arith.addf %745, %747 : vector<8x128xf32>
    %cst_335 = arith.constant 0.000000e+00 : f32
    %749 = vector.broadcast %cst_335 : f32 to vector<8x128xf32>
    %750 = arith.maximumf %748, %749 : vector<8x128xf32>
    %c10_336 = arith.constant 10 : index
    %c0_337 = arith.constant 0 : index
    %751 = memref.load %arg4[%c10_336, %c0_337] : memref<15x15xf32, #tpu.memory_space<smem>>
    %752 = vector.broadcast %751 : f32 to vector<8x128xf32>
    %753 = arith.mulf %12, %752 : vector<8x128xf32>
    %c10_338 = arith.constant 10 : index
    %c1_339 = arith.constant 1 : index
    %754 = memref.load %arg4[%c10_338, %c1_339] : memref<15x15xf32, #tpu.memory_space<smem>>
    %755 = vector.broadcast %754 : f32 to vector<8x128xf32>
    %756 = arith.mulf %19, %755 : vector<8x128xf32>
    %757 = arith.addf %753, %756 : vector<8x128xf32>
    %c10_340 = arith.constant 10 : index
    %c2_341 = arith.constant 2 : index
    %758 = memref.load %arg4[%c10_340, %c2_341] : memref<15x15xf32, #tpu.memory_space<smem>>
    %759 = vector.broadcast %758 : f32 to vector<8x128xf32>
    %760 = arith.mulf %26, %759 : vector<8x128xf32>
    %761 = arith.addf %757, %760 : vector<8x128xf32>
    %c10_342 = arith.constant 10 : index
    %c3_343 = arith.constant 3 : index
    %762 = memref.load %arg4[%c10_342, %c3_343] : memref<15x15xf32, #tpu.memory_space<smem>>
    %763 = vector.broadcast %762 : f32 to vector<8x128xf32>
    %764 = arith.mulf %33, %763 : vector<8x128xf32>
    %765 = arith.addf %761, %764 : vector<8x128xf32>
    %c10_344 = arith.constant 10 : index
    %c4_345 = arith.constant 4 : index
    %766 = memref.load %arg4[%c10_344, %c4_345] : memref<15x15xf32, #tpu.memory_space<smem>>
    %767 = vector.broadcast %766 : f32 to vector<8x128xf32>
    %768 = arith.mulf %40, %767 : vector<8x128xf32>
    %769 = arith.addf %765, %768 : vector<8x128xf32>
    %c10_346 = arith.constant 10 : index
    %c5_347 = arith.constant 5 : index
    %770 = memref.load %arg4[%c10_346, %c5_347] : memref<15x15xf32, #tpu.memory_space<smem>>
    %771 = vector.broadcast %770 : f32 to vector<8x128xf32>
    %772 = arith.mulf %47, %771 : vector<8x128xf32>
    %773 = arith.addf %769, %772 : vector<8x128xf32>
    %c10_348 = arith.constant 10 : index
    %c6_349 = arith.constant 6 : index
    %774 = memref.load %arg4[%c10_348, %c6_349] : memref<15x15xf32, #tpu.memory_space<smem>>
    %775 = vector.broadcast %774 : f32 to vector<8x128xf32>
    %776 = arith.mulf %54, %775 : vector<8x128xf32>
    %777 = arith.addf %773, %776 : vector<8x128xf32>
    %c10_350 = arith.constant 10 : index
    %c7_351 = arith.constant 7 : index
    %778 = memref.load %arg4[%c10_350, %c7_351] : memref<15x15xf32, #tpu.memory_space<smem>>
    %779 = vector.broadcast %778 : f32 to vector<8x128xf32>
    %780 = arith.mulf %61, %779 : vector<8x128xf32>
    %781 = arith.addf %777, %780 : vector<8x128xf32>
    %c10_352 = arith.constant 10 : index
    %c8_353 = arith.constant 8 : index
    %782 = memref.load %arg4[%c10_352, %c8_353] : memref<15x15xf32, #tpu.memory_space<smem>>
    %783 = vector.broadcast %782 : f32 to vector<8x128xf32>
    %784 = arith.mulf %68, %783 : vector<8x128xf32>
    %785 = arith.addf %781, %784 : vector<8x128xf32>
    %c10_354 = arith.constant 10 : index
    %c9_355 = arith.constant 9 : index
    %786 = memref.load %arg4[%c10_354, %c9_355] : memref<15x15xf32, #tpu.memory_space<smem>>
    %787 = vector.broadcast %786 : f32 to vector<8x128xf32>
    %788 = arith.mulf %75, %787 : vector<8x128xf32>
    %789 = arith.addf %785, %788 : vector<8x128xf32>
    %c10_356 = arith.constant 10 : index
    %c10_357 = arith.constant 10 : index
    %790 = memref.load %arg4[%c10_356, %c10_357] : memref<15x15xf32, #tpu.memory_space<smem>>
    %791 = vector.broadcast %790 : f32 to vector<8x128xf32>
    %792 = arith.mulf %82, %791 : vector<8x128xf32>
    %793 = arith.addf %789, %792 : vector<8x128xf32>
    %c10_358 = arith.constant 10 : index
    %c11_359 = arith.constant 11 : index
    %794 = memref.load %arg4[%c10_358, %c11_359] : memref<15x15xf32, #tpu.memory_space<smem>>
    %795 = vector.broadcast %794 : f32 to vector<8x128xf32>
    %796 = arith.mulf %89, %795 : vector<8x128xf32>
    %797 = arith.addf %793, %796 : vector<8x128xf32>
    %c10_360 = arith.constant 10 : index
    %c12_361 = arith.constant 12 : index
    %798 = memref.load %arg4[%c10_360, %c12_361] : memref<15x15xf32, #tpu.memory_space<smem>>
    %799 = vector.broadcast %798 : f32 to vector<8x128xf32>
    %800 = arith.mulf %96, %799 : vector<8x128xf32>
    %801 = arith.addf %797, %800 : vector<8x128xf32>
    %c10_362 = arith.constant 10 : index
    %c13_363 = arith.constant 13 : index
    %802 = memref.load %arg4[%c10_362, %c13_363] : memref<15x15xf32, #tpu.memory_space<smem>>
    %803 = vector.broadcast %802 : f32 to vector<8x128xf32>
    %804 = arith.mulf %103, %803 : vector<8x128xf32>
    %805 = arith.addf %801, %804 : vector<8x128xf32>
    %c10_364 = arith.constant 10 : index
    %c14_365 = arith.constant 14 : index
    %806 = memref.load %arg4[%c10_364, %c14_365] : memref<15x15xf32, #tpu.memory_space<smem>>
    %807 = vector.broadcast %806 : f32 to vector<8x128xf32>
    %808 = arith.mulf %110, %807 : vector<8x128xf32>
    %809 = arith.addf %805, %808 : vector<8x128xf32>
    %c10_366 = arith.constant 10 : index
    %810 = memref.load %arg5[%c10_366] : memref<15xf32, #tpu.memory_space<smem>>
    %811 = vector.broadcast %810 : f32 to vector<8x128xf32>
    %812 = arith.addf %809, %811 : vector<8x128xf32>
    %cst_367 = arith.constant 0.000000e+00 : f32
    %813 = vector.broadcast %cst_367 : f32 to vector<8x128xf32>
    %814 = arith.maximumf %812, %813 : vector<8x128xf32>
    %c11_368 = arith.constant 11 : index
    %c0_369 = arith.constant 0 : index
    %815 = memref.load %arg4[%c11_368, %c0_369] : memref<15x15xf32, #tpu.memory_space<smem>>
    %816 = vector.broadcast %815 : f32 to vector<8x128xf32>
    %817 = arith.mulf %12, %816 : vector<8x128xf32>
    %c11_370 = arith.constant 11 : index
    %c1_371 = arith.constant 1 : index
    %818 = memref.load %arg4[%c11_370, %c1_371] : memref<15x15xf32, #tpu.memory_space<smem>>
    %819 = vector.broadcast %818 : f32 to vector<8x128xf32>
    %820 = arith.mulf %19, %819 : vector<8x128xf32>
    %821 = arith.addf %817, %820 : vector<8x128xf32>
    %c11_372 = arith.constant 11 : index
    %c2_373 = arith.constant 2 : index
    %822 = memref.load %arg4[%c11_372, %c2_373] : memref<15x15xf32, #tpu.memory_space<smem>>
    %823 = vector.broadcast %822 : f32 to vector<8x128xf32>
    %824 = arith.mulf %26, %823 : vector<8x128xf32>
    %825 = arith.addf %821, %824 : vector<8x128xf32>
    %c11_374 = arith.constant 11 : index
    %c3_375 = arith.constant 3 : index
    %826 = memref.load %arg4[%c11_374, %c3_375] : memref<15x15xf32, #tpu.memory_space<smem>>
    %827 = vector.broadcast %826 : f32 to vector<8x128xf32>
    %828 = arith.mulf %33, %827 : vector<8x128xf32>
    %829 = arith.addf %825, %828 : vector<8x128xf32>
    %c11_376 = arith.constant 11 : index
    %c4_377 = arith.constant 4 : index
    %830 = memref.load %arg4[%c11_376, %c4_377] : memref<15x15xf32, #tpu.memory_space<smem>>
    %831 = vector.broadcast %830 : f32 to vector<8x128xf32>
    %832 = arith.mulf %40, %831 : vector<8x128xf32>
    %833 = arith.addf %829, %832 : vector<8x128xf32>
    %c11_378 = arith.constant 11 : index
    %c5_379 = arith.constant 5 : index
    %834 = memref.load %arg4[%c11_378, %c5_379] : memref<15x15xf32, #tpu.memory_space<smem>>
    %835 = vector.broadcast %834 : f32 to vector<8x128xf32>
    %836 = arith.mulf %47, %835 : vector<8x128xf32>
    %837 = arith.addf %833, %836 : vector<8x128xf32>
    %c11_380 = arith.constant 11 : index
    %c6_381 = arith.constant 6 : index
    %838 = memref.load %arg4[%c11_380, %c6_381] : memref<15x15xf32, #tpu.memory_space<smem>>
    %839 = vector.broadcast %838 : f32 to vector<8x128xf32>
    %840 = arith.mulf %54, %839 : vector<8x128xf32>
    %841 = arith.addf %837, %840 : vector<8x128xf32>
    %c11_382 = arith.constant 11 : index
    %c7_383 = arith.constant 7 : index
    %842 = memref.load %arg4[%c11_382, %c7_383] : memref<15x15xf32, #tpu.memory_space<smem>>
    %843 = vector.broadcast %842 : f32 to vector<8x128xf32>
    %844 = arith.mulf %61, %843 : vector<8x128xf32>
    %845 = arith.addf %841, %844 : vector<8x128xf32>
    %c11_384 = arith.constant 11 : index
    %c8_385 = arith.constant 8 : index
    %846 = memref.load %arg4[%c11_384, %c8_385] : memref<15x15xf32, #tpu.memory_space<smem>>
    %847 = vector.broadcast %846 : f32 to vector<8x128xf32>
    %848 = arith.mulf %68, %847 : vector<8x128xf32>
    %849 = arith.addf %845, %848 : vector<8x128xf32>
    %c11_386 = arith.constant 11 : index
    %c9_387 = arith.constant 9 : index
    %850 = memref.load %arg4[%c11_386, %c9_387] : memref<15x15xf32, #tpu.memory_space<smem>>
    %851 = vector.broadcast %850 : f32 to vector<8x128xf32>
    %852 = arith.mulf %75, %851 : vector<8x128xf32>
    %853 = arith.addf %849, %852 : vector<8x128xf32>
    %c11_388 = arith.constant 11 : index
    %c10_389 = arith.constant 10 : index
    %854 = memref.load %arg4[%c11_388, %c10_389] : memref<15x15xf32, #tpu.memory_space<smem>>
    %855 = vector.broadcast %854 : f32 to vector<8x128xf32>
    %856 = arith.mulf %82, %855 : vector<8x128xf32>
    %857 = arith.addf %853, %856 : vector<8x128xf32>
    %c11_390 = arith.constant 11 : index
    %c11_391 = arith.constant 11 : index
    %858 = memref.load %arg4[%c11_390, %c11_391] : memref<15x15xf32, #tpu.memory_space<smem>>
    %859 = vector.broadcast %858 : f32 to vector<8x128xf32>
    %860 = arith.mulf %89, %859 : vector<8x128xf32>
    %861 = arith.addf %857, %860 : vector<8x128xf32>
    %c11_392 = arith.constant 11 : index
    %c12_393 = arith.constant 12 : index
    %862 = memref.load %arg4[%c11_392, %c12_393] : memref<15x15xf32, #tpu.memory_space<smem>>
    %863 = vector.broadcast %862 : f32 to vector<8x128xf32>
    %864 = arith.mulf %96, %863 : vector<8x128xf32>
    %865 = arith.addf %861, %864 : vector<8x128xf32>
    %c11_394 = arith.constant 11 : index
    %c13_395 = arith.constant 13 : index
    %866 = memref.load %arg4[%c11_394, %c13_395] : memref<15x15xf32, #tpu.memory_space<smem>>
    %867 = vector.broadcast %866 : f32 to vector<8x128xf32>
    %868 = arith.mulf %103, %867 : vector<8x128xf32>
    %869 = arith.addf %865, %868 : vector<8x128xf32>
    %c11_396 = arith.constant 11 : index
    %c14_397 = arith.constant 14 : index
    %870 = memref.load %arg4[%c11_396, %c14_397] : memref<15x15xf32, #tpu.memory_space<smem>>
    %871 = vector.broadcast %870 : f32 to vector<8x128xf32>
    %872 = arith.mulf %110, %871 : vector<8x128xf32>
    %873 = arith.addf %869, %872 : vector<8x128xf32>
    %c11_398 = arith.constant 11 : index
    %874 = memref.load %arg5[%c11_398] : memref<15xf32, #tpu.memory_space<smem>>
    %875 = vector.broadcast %874 : f32 to vector<8x128xf32>
    %876 = arith.addf %873, %875 : vector<8x128xf32>
    %cst_399 = arith.constant 0.000000e+00 : f32
    %877 = vector.broadcast %cst_399 : f32 to vector<8x128xf32>
    %878 = arith.maximumf %876, %877 : vector<8x128xf32>
    %c12_400 = arith.constant 12 : index
    %c0_401 = arith.constant 0 : index
    %879 = memref.load %arg4[%c12_400, %c0_401] : memref<15x15xf32, #tpu.memory_space<smem>>
    %880 = vector.broadcast %879 : f32 to vector<8x128xf32>
    %881 = arith.mulf %12, %880 : vector<8x128xf32>
    %c12_402 = arith.constant 12 : index
    %c1_403 = arith.constant 1 : index
    %882 = memref.load %arg4[%c12_402, %c1_403] : memref<15x15xf32, #tpu.memory_space<smem>>
    %883 = vector.broadcast %882 : f32 to vector<8x128xf32>
    %884 = arith.mulf %19, %883 : vector<8x128xf32>
    %885 = arith.addf %881, %884 : vector<8x128xf32>
    %c12_404 = arith.constant 12 : index
    %c2_405 = arith.constant 2 : index
    %886 = memref.load %arg4[%c12_404, %c2_405] : memref<15x15xf32, #tpu.memory_space<smem>>
    %887 = vector.broadcast %886 : f32 to vector<8x128xf32>
    %888 = arith.mulf %26, %887 : vector<8x128xf32>
    %889 = arith.addf %885, %888 : vector<8x128xf32>
    %c12_406 = arith.constant 12 : index
    %c3_407 = arith.constant 3 : index
    %890 = memref.load %arg4[%c12_406, %c3_407] : memref<15x15xf32, #tpu.memory_space<smem>>
    %891 = vector.broadcast %890 : f32 to vector<8x128xf32>
    %892 = arith.mulf %33, %891 : vector<8x128xf32>
    %893 = arith.addf %889, %892 : vector<8x128xf32>
    %c12_408 = arith.constant 12 : index
    %c4_409 = arith.constant 4 : index
    %894 = memref.load %arg4[%c12_408, %c4_409] : memref<15x15xf32, #tpu.memory_space<smem>>
    %895 = vector.broadcast %894 : f32 to vector<8x128xf32>
    %896 = arith.mulf %40, %895 : vector<8x128xf32>
    %897 = arith.addf %893, %896 : vector<8x128xf32>
    %c12_410 = arith.constant 12 : index
    %c5_411 = arith.constant 5 : index
    %898 = memref.load %arg4[%c12_410, %c5_411] : memref<15x15xf32, #tpu.memory_space<smem>>
    %899 = vector.broadcast %898 : f32 to vector<8x128xf32>
    %900 = arith.mulf %47, %899 : vector<8x128xf32>
    %901 = arith.addf %897, %900 : vector<8x128xf32>
    %c12_412 = arith.constant 12 : index
    %c6_413 = arith.constant 6 : index
    %902 = memref.load %arg4[%c12_412, %c6_413] : memref<15x15xf32, #tpu.memory_space<smem>>
    %903 = vector.broadcast %902 : f32 to vector<8x128xf32>
    %904 = arith.mulf %54, %903 : vector<8x128xf32>
    %905 = arith.addf %901, %904 : vector<8x128xf32>
    %c12_414 = arith.constant 12 : index
    %c7_415 = arith.constant 7 : index
    %906 = memref.load %arg4[%c12_414, %c7_415] : memref<15x15xf32, #tpu.memory_space<smem>>
    %907 = vector.broadcast %906 : f32 to vector<8x128xf32>
    %908 = arith.mulf %61, %907 : vector<8x128xf32>
    %909 = arith.addf %905, %908 : vector<8x128xf32>
    %c12_416 = arith.constant 12 : index
    %c8_417 = arith.constant 8 : index
    %910 = memref.load %arg4[%c12_416, %c8_417] : memref<15x15xf32, #tpu.memory_space<smem>>
    %911 = vector.broadcast %910 : f32 to vector<8x128xf32>
    %912 = arith.mulf %68, %911 : vector<8x128xf32>
    %913 = arith.addf %909, %912 : vector<8x128xf32>
    %c12_418 = arith.constant 12 : index
    %c9_419 = arith.constant 9 : index
    %914 = memref.load %arg4[%c12_418, %c9_419] : memref<15x15xf32, #tpu.memory_space<smem>>
    %915 = vector.broadcast %914 : f32 to vector<8x128xf32>
    %916 = arith.mulf %75, %915 : vector<8x128xf32>
    %917 = arith.addf %913, %916 : vector<8x128xf32>
    %c12_420 = arith.constant 12 : index
    %c10_421 = arith.constant 10 : index
    %918 = memref.load %arg4[%c12_420, %c10_421] : memref<15x15xf32, #tpu.memory_space<smem>>
    %919 = vector.broadcast %918 : f32 to vector<8x128xf32>
    %920 = arith.mulf %82, %919 : vector<8x128xf32>
    %921 = arith.addf %917, %920 : vector<8x128xf32>
    %c12_422 = arith.constant 12 : index
    %c11_423 = arith.constant 11 : index
    %922 = memref.load %arg4[%c12_422, %c11_423] : memref<15x15xf32, #tpu.memory_space<smem>>
    %923 = vector.broadcast %922 : f32 to vector<8x128xf32>
    %924 = arith.mulf %89, %923 : vector<8x128xf32>
    %925 = arith.addf %921, %924 : vector<8x128xf32>
    %c12_424 = arith.constant 12 : index
    %c12_425 = arith.constant 12 : index
    %926 = memref.load %arg4[%c12_424, %c12_425] : memref<15x15xf32, #tpu.memory_space<smem>>
    %927 = vector.broadcast %926 : f32 to vector<8x128xf32>
    %928 = arith.mulf %96, %927 : vector<8x128xf32>
    %929 = arith.addf %925, %928 : vector<8x128xf32>
    %c12_426 = arith.constant 12 : index
    %c13_427 = arith.constant 13 : index
    %930 = memref.load %arg4[%c12_426, %c13_427] : memref<15x15xf32, #tpu.memory_space<smem>>
    %931 = vector.broadcast %930 : f32 to vector<8x128xf32>
    %932 = arith.mulf %103, %931 : vector<8x128xf32>
    %933 = arith.addf %929, %932 : vector<8x128xf32>
    %c12_428 = arith.constant 12 : index
    %c14_429 = arith.constant 14 : index
    %934 = memref.load %arg4[%c12_428, %c14_429] : memref<15x15xf32, #tpu.memory_space<smem>>
    %935 = vector.broadcast %934 : f32 to vector<8x128xf32>
    %936 = arith.mulf %110, %935 : vector<8x128xf32>
    %937 = arith.addf %933, %936 : vector<8x128xf32>
    %c12_430 = arith.constant 12 : index
    %938 = memref.load %arg5[%c12_430] : memref<15xf32, #tpu.memory_space<smem>>
    %939 = vector.broadcast %938 : f32 to vector<8x128xf32>
    %940 = arith.addf %937, %939 : vector<8x128xf32>
    %cst_431 = arith.constant 0.000000e+00 : f32
    %941 = vector.broadcast %cst_431 : f32 to vector<8x128xf32>
    %942 = arith.maximumf %940, %941 : vector<8x128xf32>
    %c13_432 = arith.constant 13 : index
    %c0_433 = arith.constant 0 : index
    %943 = memref.load %arg4[%c13_432, %c0_433] : memref<15x15xf32, #tpu.memory_space<smem>>
    %944 = vector.broadcast %943 : f32 to vector<8x128xf32>
    %945 = arith.mulf %12, %944 : vector<8x128xf32>
    %c13_434 = arith.constant 13 : index
    %c1_435 = arith.constant 1 : index
    %946 = memref.load %arg4[%c13_434, %c1_435] : memref<15x15xf32, #tpu.memory_space<smem>>
    %947 = vector.broadcast %946 : f32 to vector<8x128xf32>
    %948 = arith.mulf %19, %947 : vector<8x128xf32>
    %949 = arith.addf %945, %948 : vector<8x128xf32>
    %c13_436 = arith.constant 13 : index
    %c2_437 = arith.constant 2 : index
    %950 = memref.load %arg4[%c13_436, %c2_437] : memref<15x15xf32, #tpu.memory_space<smem>>
    %951 = vector.broadcast %950 : f32 to vector<8x128xf32>
    %952 = arith.mulf %26, %951 : vector<8x128xf32>
    %953 = arith.addf %949, %952 : vector<8x128xf32>
    %c13_438 = arith.constant 13 : index
    %c3_439 = arith.constant 3 : index
    %954 = memref.load %arg4[%c13_438, %c3_439] : memref<15x15xf32, #tpu.memory_space<smem>>
    %955 = vector.broadcast %954 : f32 to vector<8x128xf32>
    %956 = arith.mulf %33, %955 : vector<8x128xf32>
    %957 = arith.addf %953, %956 : vector<8x128xf32>
    %c13_440 = arith.constant 13 : index
    %c4_441 = arith.constant 4 : index
    %958 = memref.load %arg4[%c13_440, %c4_441] : memref<15x15xf32, #tpu.memory_space<smem>>
    %959 = vector.broadcast %958 : f32 to vector<8x128xf32>
    %960 = arith.mulf %40, %959 : vector<8x128xf32>
    %961 = arith.addf %957, %960 : vector<8x128xf32>
    %c13_442 = arith.constant 13 : index
    %c5_443 = arith.constant 5 : index
    %962 = memref.load %arg4[%c13_442, %c5_443] : memref<15x15xf32, #tpu.memory_space<smem>>
    %963 = vector.broadcast %962 : f32 to vector<8x128xf32>
    %964 = arith.mulf %47, %963 : vector<8x128xf32>
    %965 = arith.addf %961, %964 : vector<8x128xf32>
    %c13_444 = arith.constant 13 : index
    %c6_445 = arith.constant 6 : index
    %966 = memref.load %arg4[%c13_444, %c6_445] : memref<15x15xf32, #tpu.memory_space<smem>>
    %967 = vector.broadcast %966 : f32 to vector<8x128xf32>
    %968 = arith.mulf %54, %967 : vector<8x128xf32>
    %969 = arith.addf %965, %968 : vector<8x128xf32>
    %c13_446 = arith.constant 13 : index
    %c7_447 = arith.constant 7 : index
    %970 = memref.load %arg4[%c13_446, %c7_447] : memref<15x15xf32, #tpu.memory_space<smem>>
    %971 = vector.broadcast %970 : f32 to vector<8x128xf32>
    %972 = arith.mulf %61, %971 : vector<8x128xf32>
    %973 = arith.addf %969, %972 : vector<8x128xf32>
    %c13_448 = arith.constant 13 : index
    %c8_449 = arith.constant 8 : index
    %974 = memref.load %arg4[%c13_448, %c8_449] : memref<15x15xf32, #tpu.memory_space<smem>>
    %975 = vector.broadcast %974 : f32 to vector<8x128xf32>
    %976 = arith.mulf %68, %975 : vector<8x128xf32>
    %977 = arith.addf %973, %976 : vector<8x128xf32>
    %c13_450 = arith.constant 13 : index
    %c9_451 = arith.constant 9 : index
    %978 = memref.load %arg4[%c13_450, %c9_451] : memref<15x15xf32, #tpu.memory_space<smem>>
    %979 = vector.broadcast %978 : f32 to vector<8x128xf32>
    %980 = arith.mulf %75, %979 : vector<8x128xf32>
    %981 = arith.addf %977, %980 : vector<8x128xf32>
    %c13_452 = arith.constant 13 : index
    %c10_453 = arith.constant 10 : index
    %982 = memref.load %arg4[%c13_452, %c10_453] : memref<15x15xf32, #tpu.memory_space<smem>>
    %983 = vector.broadcast %982 : f32 to vector<8x128xf32>
    %984 = arith.mulf %82, %983 : vector<8x128xf32>
    %985 = arith.addf %981, %984 : vector<8x128xf32>
    %c13_454 = arith.constant 13 : index
    %c11_455 = arith.constant 11 : index
    %986 = memref.load %arg4[%c13_454, %c11_455] : memref<15x15xf32, #tpu.memory_space<smem>>
    %987 = vector.broadcast %986 : f32 to vector<8x128xf32>
    %988 = arith.mulf %89, %987 : vector<8x128xf32>
    %989 = arith.addf %985, %988 : vector<8x128xf32>
    %c13_456 = arith.constant 13 : index
    %c12_457 = arith.constant 12 : index
    %990 = memref.load %arg4[%c13_456, %c12_457] : memref<15x15xf32, #tpu.memory_space<smem>>
    %991 = vector.broadcast %990 : f32 to vector<8x128xf32>
    %992 = arith.mulf %96, %991 : vector<8x128xf32>
    %993 = arith.addf %989, %992 : vector<8x128xf32>
    %c13_458 = arith.constant 13 : index
    %c13_459 = arith.constant 13 : index
    %994 = memref.load %arg4[%c13_458, %c13_459] : memref<15x15xf32, #tpu.memory_space<smem>>
    %995 = vector.broadcast %994 : f32 to vector<8x128xf32>
    %996 = arith.mulf %103, %995 : vector<8x128xf32>
    %997 = arith.addf %993, %996 : vector<8x128xf32>
    %c13_460 = arith.constant 13 : index
    %c14_461 = arith.constant 14 : index
    %998 = memref.load %arg4[%c13_460, %c14_461] : memref<15x15xf32, #tpu.memory_space<smem>>
    %999 = vector.broadcast %998 : f32 to vector<8x128xf32>
    %1000 = arith.mulf %110, %999 : vector<8x128xf32>
    %1001 = arith.addf %997, %1000 : vector<8x128xf32>
    %c13_462 = arith.constant 13 : index
    %1002 = memref.load %arg5[%c13_462] : memref<15xf32, #tpu.memory_space<smem>>
    %1003 = vector.broadcast %1002 : f32 to vector<8x128xf32>
    %1004 = arith.addf %1001, %1003 : vector<8x128xf32>
    %cst_463 = arith.constant 0.000000e+00 : f32
    %1005 = vector.broadcast %cst_463 : f32 to vector<8x128xf32>
    %1006 = arith.maximumf %1004, %1005 : vector<8x128xf32>
    %c14_464 = arith.constant 14 : index
    %c0_465 = arith.constant 0 : index
    %1007 = memref.load %arg4[%c14_464, %c0_465] : memref<15x15xf32, #tpu.memory_space<smem>>
    %1008 = vector.broadcast %1007 : f32 to vector<8x128xf32>
    %1009 = arith.mulf %12, %1008 : vector<8x128xf32>
    %c14_466 = arith.constant 14 : index
    %c1_467 = arith.constant 1 : index
    %1010 = memref.load %arg4[%c14_466, %c1_467] : memref<15x15xf32, #tpu.memory_space<smem>>
    %1011 = vector.broadcast %1010 : f32 to vector<8x128xf32>
    %1012 = arith.mulf %19, %1011 : vector<8x128xf32>
    %1013 = arith.addf %1009, %1012 : vector<8x128xf32>
    %c14_468 = arith.constant 14 : index
    %c2_469 = arith.constant 2 : index
    %1014 = memref.load %arg4[%c14_468, %c2_469] : memref<15x15xf32, #tpu.memory_space<smem>>
    %1015 = vector.broadcast %1014 : f32 to vector<8x128xf32>
    %1016 = arith.mulf %26, %1015 : vector<8x128xf32>
    %1017 = arith.addf %1013, %1016 : vector<8x128xf32>
    %c14_470 = arith.constant 14 : index
    %c3_471 = arith.constant 3 : index
    %1018 = memref.load %arg4[%c14_470, %c3_471] : memref<15x15xf32, #tpu.memory_space<smem>>
    %1019 = vector.broadcast %1018 : f32 to vector<8x128xf32>
    %1020 = arith.mulf %33, %1019 : vector<8x128xf32>
    %1021 = arith.addf %1017, %1020 : vector<8x128xf32>
    %c14_472 = arith.constant 14 : index
    %c4_473 = arith.constant 4 : index
    %1022 = memref.load %arg4[%c14_472, %c4_473] : memref<15x15xf32, #tpu.memory_space<smem>>
    %1023 = vector.broadcast %1022 : f32 to vector<8x128xf32>
    %1024 = arith.mulf %40, %1023 : vector<8x128xf32>
    %1025 = arith.addf %1021, %1024 : vector<8x128xf32>
    %c14_474 = arith.constant 14 : index
    %c5_475 = arith.constant 5 : index
    %1026 = memref.load %arg4[%c14_474, %c5_475] : memref<15x15xf32, #tpu.memory_space<smem>>
    %1027 = vector.broadcast %1026 : f32 to vector<8x128xf32>
    %1028 = arith.mulf %47, %1027 : vector<8x128xf32>
    %1029 = arith.addf %1025, %1028 : vector<8x128xf32>
    %c14_476 = arith.constant 14 : index
    %c6_477 = arith.constant 6 : index
    %1030 = memref.load %arg4[%c14_476, %c6_477] : memref<15x15xf32, #tpu.memory_space<smem>>
    %1031 = vector.broadcast %1030 : f32 to vector<8x128xf32>
    %1032 = arith.mulf %54, %1031 : vector<8x128xf32>
    %1033 = arith.addf %1029, %1032 : vector<8x128xf32>
    %c14_478 = arith.constant 14 : index
    %c7_479 = arith.constant 7 : index
    %1034 = memref.load %arg4[%c14_478, %c7_479] : memref<15x15xf32, #tpu.memory_space<smem>>
    %1035 = vector.broadcast %1034 : f32 to vector<8x128xf32>
    %1036 = arith.mulf %61, %1035 : vector<8x128xf32>
    %1037 = arith.addf %1033, %1036 : vector<8x128xf32>
    %c14_480 = arith.constant 14 : index
    %c8_481 = arith.constant 8 : index
    %1038 = memref.load %arg4[%c14_480, %c8_481] : memref<15x15xf32, #tpu.memory_space<smem>>
    %1039 = vector.broadcast %1038 : f32 to vector<8x128xf32>
    %1040 = arith.mulf %68, %1039 : vector<8x128xf32>
    %1041 = arith.addf %1037, %1040 : vector<8x128xf32>
    %c14_482 = arith.constant 14 : index
    %c9_483 = arith.constant 9 : index
    %1042 = memref.load %arg4[%c14_482, %c9_483] : memref<15x15xf32, #tpu.memory_space<smem>>
    %1043 = vector.broadcast %1042 : f32 to vector<8x128xf32>
    %1044 = arith.mulf %75, %1043 : vector<8x128xf32>
    %1045 = arith.addf %1041, %1044 : vector<8x128xf32>
    %c14_484 = arith.constant 14 : index
    %c10_485 = arith.constant 10 : index
    %1046 = memref.load %arg4[%c14_484, %c10_485] : memref<15x15xf32, #tpu.memory_space<smem>>
    %1047 = vector.broadcast %1046 : f32 to vector<8x128xf32>
    %1048 = arith.mulf %82, %1047 : vector<8x128xf32>
    %1049 = arith.addf %1045, %1048 : vector<8x128xf32>
    %c14_486 = arith.constant 14 : index
    %c11_487 = arith.constant 11 : index
    %1050 = memref.load %arg4[%c14_486, %c11_487] : memref<15x15xf32, #tpu.memory_space<smem>>
    %1051 = vector.broadcast %1050 : f32 to vector<8x128xf32>
    %1052 = arith.mulf %89, %1051 : vector<8x128xf32>
    %1053 = arith.addf %1049, %1052 : vector<8x128xf32>
    %c14_488 = arith.constant 14 : index
    %c12_489 = arith.constant 12 : index
    %1054 = memref.load %arg4[%c14_488, %c12_489] : memref<15x15xf32, #tpu.memory_space<smem>>
    %1055 = vector.broadcast %1054 : f32 to vector<8x128xf32>
    %1056 = arith.mulf %96, %1055 : vector<8x128xf32>
    %1057 = arith.addf %1053, %1056 : vector<8x128xf32>
    %c14_490 = arith.constant 14 : index
    %c13_491 = arith.constant 13 : index
    %1058 = memref.load %arg4[%c14_490, %c13_491] : memref<15x15xf32, #tpu.memory_space<smem>>
    %1059 = vector.broadcast %1058 : f32 to vector<8x128xf32>
    %1060 = arith.mulf %103, %1059 : vector<8x128xf32>
    %1061 = arith.addf %1057, %1060 : vector<8x128xf32>
    %c14_492 = arith.constant 14 : index
    %c14_493 = arith.constant 14 : index
    %1062 = memref.load %arg4[%c14_492, %c14_493] : memref<15x15xf32, #tpu.memory_space<smem>>
    %1063 = vector.broadcast %1062 : f32 to vector<8x128xf32>
    %1064 = arith.mulf %110, %1063 : vector<8x128xf32>
    %1065 = arith.addf %1061, %1064 : vector<8x128xf32>
    %c14_494 = arith.constant 14 : index
    %1066 = memref.load %arg5[%c14_494] : memref<15xf32, #tpu.memory_space<smem>>
    %1067 = vector.broadcast %1066 : f32 to vector<8x128xf32>
    %1068 = arith.addf %1065, %1067 : vector<8x128xf32>
    %cst_495 = arith.constant 0.000000e+00 : f32
    %1069 = vector.broadcast %cst_495 : f32 to vector<8x128xf32>
    %1070 = arith.maximumf %1068, %1069 : vector<8x128xf32>
    %c0_496 = arith.constant 0 : index
    %c0_497 = arith.constant 0 : index
    %1071 = memref.load %arg6[%c0_496, %c0_497] : memref<15x15xf32, #tpu.memory_space<smem>>
    %1072 = vector.broadcast %1071 : f32 to vector<8x128xf32>
    %1073 = arith.mulf %174, %1072 : vector<8x128xf32>
    %c0_498 = arith.constant 0 : index
    %c1_499 = arith.constant 1 : index
    %1074 = memref.load %arg6[%c0_498, %c1_499] : memref<15x15xf32, #tpu.memory_space<smem>>
    %1075 = vector.broadcast %1074 : f32 to vector<8x128xf32>
    %1076 = arith.mulf %238, %1075 : vector<8x128xf32>
    %1077 = arith.addf %1073, %1076 : vector<8x128xf32>
    %c0_500 = arith.constant 0 : index
    %c2_501 = arith.constant 2 : index
    %1078 = memref.load %arg6[%c0_500, %c2_501] : memref<15x15xf32, #tpu.memory_space<smem>>
    %1079 = vector.broadcast %1078 : f32 to vector<8x128xf32>
    %1080 = arith.mulf %302, %1079 : vector<8x128xf32>
    %1081 = arith.addf %1077, %1080 : vector<8x128xf32>
    %c0_502 = arith.constant 0 : index
    %c3_503 = arith.constant 3 : index
    %1082 = memref.load %arg6[%c0_502, %c3_503] : memref<15x15xf32, #tpu.memory_space<smem>>
    %1083 = vector.broadcast %1082 : f32 to vector<8x128xf32>
    %1084 = arith.mulf %366, %1083 : vector<8x128xf32>
    %1085 = arith.addf %1081, %1084 : vector<8x128xf32>
    %c0_504 = arith.constant 0 : index
    %c4_505 = arith.constant 4 : index
    %1086 = memref.load %arg6[%c0_504, %c4_505] : memref<15x15xf32, #tpu.memory_space<smem>>
    %1087 = vector.broadcast %1086 : f32 to vector<8x128xf32>
    %1088 = arith.mulf %430, %1087 : vector<8x128xf32>
    %1089 = arith.addf %1085, %1088 : vector<8x128xf32>
    %c0_506 = arith.constant 0 : index
    %c5_507 = arith.constant 5 : index
    %1090 = memref.load %arg6[%c0_506, %c5_507] : memref<15x15xf32, #tpu.memory_space<smem>>
    %1091 = vector.broadcast %1090 : f32 to vector<8x128xf32>
    %1092 = arith.mulf %494, %1091 : vector<8x128xf32>
    %1093 = arith.addf %1089, %1092 : vector<8x128xf32>
    %c0_508 = arith.constant 0 : index
    %c6_509 = arith.constant 6 : index
    %1094 = memref.load %arg6[%c0_508, %c6_509] : memref<15x15xf32, #tpu.memory_space<smem>>
    %1095 = vector.broadcast %1094 : f32 to vector<8x128xf32>
    %1096 = arith.mulf %558, %1095 : vector<8x128xf32>
    %1097 = arith.addf %1093, %1096 : vector<8x128xf32>
    %c0_510 = arith.constant 0 : index
    %c7_511 = arith.constant 7 : index
    %1098 = memref.load %arg6[%c0_510, %c7_511] : memref<15x15xf32, #tpu.memory_space<smem>>
    %1099 = vector.broadcast %1098 : f32 to vector<8x128xf32>
    %1100 = arith.mulf %622, %1099 : vector<8x128xf32>
    %1101 = arith.addf %1097, %1100 : vector<8x128xf32>
    %c0_512 = arith.constant 0 : index
    %c8_513 = arith.constant 8 : index
    %1102 = memref.load %arg6[%c0_512, %c8_513] : memref<15x15xf32, #tpu.memory_space<smem>>
    %1103 = vector.broadcast %1102 : f32 to vector<8x128xf32>
    %1104 = arith.mulf %686, %1103 : vector<8x128xf32>
    %1105 = arith.addf %1101, %1104 : vector<8x128xf32>
    %c0_514 = arith.constant 0 : index
    %c9_515 = arith.constant 9 : index
    %1106 = memref.load %arg6[%c0_514, %c9_515] : memref<15x15xf32, #tpu.memory_space<smem>>
    %1107 = vector.broadcast %1106 : f32 to vector<8x128xf32>
    %1108 = arith.mulf %750, %1107 : vector<8x128xf32>
    %1109 = arith.addf %1105, %1108 : vector<8x128xf32>
    %c0_516 = arith.constant 0 : index
    %c10_517 = arith.constant 10 : index
    %1110 = memref.load %arg6[%c0_516, %c10_517] : memref<15x15xf32, #tpu.memory_space<smem>>
    %1111 = vector.broadcast %1110 : f32 to vector<8x128xf32>
    %1112 = arith.mulf %814, %1111 : vector<8x128xf32>
    %1113 = arith.addf %1109, %1112 : vector<8x128xf32>
    %c0_518 = arith.constant 0 : index
    %c11_519 = arith.constant 11 : index
    %1114 = memref.load %arg6[%c0_518, %c11_519] : memref<15x15xf32, #tpu.memory_space<smem>>
    %1115 = vector.broadcast %1114 : f32 to vector<8x128xf32>
    %1116 = arith.mulf %878, %1115 : vector<8x128xf32>
    %1117 = arith.addf %1113, %1116 : vector<8x128xf32>
    %c0_520 = arith.constant 0 : index
    %c12_521 = arith.constant 12 : index
    %1118 = memref.load %arg6[%c0_520, %c12_521] : memref<15x15xf32, #tpu.memory_space<smem>>
    %1119 = vector.broadcast %1118 : f32 to vector<8x128xf32>
    %1120 = arith.mulf %942, %1119 : vector<8x128xf32>
    %1121 = arith.addf %1117, %1120 : vector<8x128xf32>
    %c0_522 = arith.constant 0 : index
    %c13_523 = arith.constant 13 : index
    %1122 = memref.load %arg6[%c0_522, %c13_523] : memref<15x15xf32, #tpu.memory_space<smem>>
    %1123 = vector.broadcast %1122 : f32 to vector<8x128xf32>
    %1124 = arith.mulf %1006, %1123 : vector<8x128xf32>
    %1125 = arith.addf %1121, %1124 : vector<8x128xf32>
    %c0_524 = arith.constant 0 : index
    %c14_525 = arith.constant 14 : index
    %1126 = memref.load %arg6[%c0_524, %c14_525] : memref<15x15xf32, #tpu.memory_space<smem>>
    %1127 = vector.broadcast %1126 : f32 to vector<8x128xf32>
    %1128 = arith.mulf %1070, %1127 : vector<8x128xf32>
    %1129 = arith.addf %1125, %1128 : vector<8x128xf32>
    %c0_526 = arith.constant 0 : index
    %1130 = memref.load %arg7[%c0_526] : memref<15xf32, #tpu.memory_space<smem>>
    %1131 = vector.broadcast %1130 : f32 to vector<8x128xf32>
    %1132 = arith.addf %1129, %1131 : vector<8x128xf32>
    %1133 = math.tanh %1132 : vector<8x128xf32>
    %c1_527 = arith.constant 1 : index
    %c0_528 = arith.constant 0 : index
    %1134 = memref.load %arg6[%c1_527, %c0_528] : memref<15x15xf32, #tpu.memory_space<smem>>
    %1135 = vector.broadcast %1134 : f32 to vector<8x128xf32>
    %1136 = arith.mulf %174, %1135 : vector<8x128xf32>
    %c1_529 = arith.constant 1 : index
    %c1_530 = arith.constant 1 : index
    %1137 = memref.load %arg6[%c1_529, %c1_530] : memref<15x15xf32, #tpu.memory_space<smem>>
    %1138 = vector.broadcast %1137 : f32 to vector<8x128xf32>
    %1139 = arith.mulf %238, %1138 : vector<8x128xf32>
    %1140 = arith.addf %1136, %1139 : vector<8x128xf32>
    %c1_531 = arith.constant 1 : index
    %c2_532 = arith.constant 2 : index
    %1141 = memref.load %arg6[%c1_531, %c2_532] : memref<15x15xf32, #tpu.memory_space<smem>>
    %1142 = vector.broadcast %1141 : f32 to vector<8x128xf32>
    %1143 = arith.mulf %302, %1142 : vector<8x128xf32>
    %1144 = arith.addf %1140, %1143 : vector<8x128xf32>
    %c1_533 = arith.constant 1 : index
    %c3_534 = arith.constant 3 : index
    %1145 = memref.load %arg6[%c1_533, %c3_534] : memref<15x15xf32, #tpu.memory_space<smem>>
    %1146 = vector.broadcast %1145 : f32 to vector<8x128xf32>
    %1147 = arith.mulf %366, %1146 : vector<8x128xf32>
    %1148 = arith.addf %1144, %1147 : vector<8x128xf32>
    %c1_535 = arith.constant 1 : index
    %c4_536 = arith.constant 4 : index
    %1149 = memref.load %arg6[%c1_535, %c4_536] : memref<15x15xf32, #tpu.memory_space<smem>>
    %1150 = vector.broadcast %1149 : f32 to vector<8x128xf32>
    %1151 = arith.mulf %430, %1150 : vector<8x128xf32>
    %1152 = arith.addf %1148, %1151 : vector<8x128xf32>
    %c1_537 = arith.constant 1 : index
    %c5_538 = arith.constant 5 : index
    %1153 = memref.load %arg6[%c1_537, %c5_538] : memref<15x15xf32, #tpu.memory_space<smem>>
    %1154 = vector.broadcast %1153 : f32 to vector<8x128xf32>
    %1155 = arith.mulf %494, %1154 : vector<8x128xf32>
    %1156 = arith.addf %1152, %1155 : vector<8x128xf32>
    %c1_539 = arith.constant 1 : index
    %c6_540 = arith.constant 6 : index
    %1157 = memref.load %arg6[%c1_539, %c6_540] : memref<15x15xf32, #tpu.memory_space<smem>>
    %1158 = vector.broadcast %1157 : f32 to vector<8x128xf32>
    %1159 = arith.mulf %558, %1158 : vector<8x128xf32>
    %1160 = arith.addf %1156, %1159 : vector<8x128xf32>
    %c1_541 = arith.constant 1 : index
    %c7_542 = arith.constant 7 : index
    %1161 = memref.load %arg6[%c1_541, %c7_542] : memref<15x15xf32, #tpu.memory_space<smem>>
    %1162 = vector.broadcast %1161 : f32 to vector<8x128xf32>
    %1163 = arith.mulf %622, %1162 : vector<8x128xf32>
    %1164 = arith.addf %1160, %1163 : vector<8x128xf32>
    %c1_543 = arith.constant 1 : index
    %c8_544 = arith.constant 8 : index
    %1165 = memref.load %arg6[%c1_543, %c8_544] : memref<15x15xf32, #tpu.memory_space<smem>>
    %1166 = vector.broadcast %1165 : f32 to vector<8x128xf32>
    %1167 = arith.mulf %686, %1166 : vector<8x128xf32>
    %1168 = arith.addf %1164, %1167 : vector<8x128xf32>
    %c1_545 = arith.constant 1 : index
    %c9_546 = arith.constant 9 : index
    %1169 = memref.load %arg6[%c1_545, %c9_546] : memref<15x15xf32, #tpu.memory_space<smem>>
    %1170 = vector.broadcast %1169 : f32 to vector<8x128xf32>
    %1171 = arith.mulf %750, %1170 : vector<8x128xf32>
    %1172 = arith.addf %1168, %1171 : vector<8x128xf32>
    %c1_547 = arith.constant 1 : index
    %c10_548 = arith.constant 10 : index
    %1173 = memref.load %arg6[%c1_547, %c10_548] : memref<15x15xf32, #tpu.memory_space<smem>>
    %1174 = vector.broadcast %1173 : f32 to vector<8x128xf32>
    %1175 = arith.mulf %814, %1174 : vector<8x128xf32>
    %1176 = arith.addf %1172, %1175 : vector<8x128xf32>
    %c1_549 = arith.constant 1 : index
    %c11_550 = arith.constant 11 : index
    %1177 = memref.load %arg6[%c1_549, %c11_550] : memref<15x15xf32, #tpu.memory_space<smem>>
    %1178 = vector.broadcast %1177 : f32 to vector<8x128xf32>
    %1179 = arith.mulf %878, %1178 : vector<8x128xf32>
    %1180 = arith.addf %1176, %1179 : vector<8x128xf32>
    %c1_551 = arith.constant 1 : index
    %c12_552 = arith.constant 12 : index
    %1181 = memref.load %arg6[%c1_551, %c12_552] : memref<15x15xf32, #tpu.memory_space<smem>>
    %1182 = vector.broadcast %1181 : f32 to vector<8x128xf32>
    %1183 = arith.mulf %942, %1182 : vector<8x128xf32>
    %1184 = arith.addf %1180, %1183 : vector<8x128xf32>
    %c1_553 = arith.constant 1 : index
    %c13_554 = arith.constant 13 : index
    %1185 = memref.load %arg6[%c1_553, %c13_554] : memref<15x15xf32, #tpu.memory_space<smem>>
    %1186 = vector.broadcast %1185 : f32 to vector<8x128xf32>
    %1187 = arith.mulf %1006, %1186 : vector<8x128xf32>
    %1188 = arith.addf %1184, %1187 : vector<8x128xf32>
    %c1_555 = arith.constant 1 : index
    %c14_556 = arith.constant 14 : index
    %1189 = memref.load %arg6[%c1_555, %c14_556] : memref<15x15xf32, #tpu.memory_space<smem>>
    %1190 = vector.broadcast %1189 : f32 to vector<8x128xf32>
    %1191 = arith.mulf %1070, %1190 : vector<8x128xf32>
    %1192 = arith.addf %1188, %1191 : vector<8x128xf32>
    %c1_557 = arith.constant 1 : index
    %1193 = memref.load %arg7[%c1_557] : memref<15xf32, #tpu.memory_space<smem>>
    %1194 = vector.broadcast %1193 : f32 to vector<8x128xf32>
    %1195 = arith.addf %1192, %1194 : vector<8x128xf32>
    %1196 = math.tanh %1195 : vector<8x128xf32>
    %c2_558 = arith.constant 2 : index
    %c0_559 = arith.constant 0 : index
    %1197 = memref.load %arg6[%c2_558, %c0_559] : memref<15x15xf32, #tpu.memory_space<smem>>
    %1198 = vector.broadcast %1197 : f32 to vector<8x128xf32>
    %1199 = arith.mulf %174, %1198 : vector<8x128xf32>
    %c2_560 = arith.constant 2 : index
    %c1_561 = arith.constant 1 : index
    %1200 = memref.load %arg6[%c2_560, %c1_561] : memref<15x15xf32, #tpu.memory_space<smem>>
    %1201 = vector.broadcast %1200 : f32 to vector<8x128xf32>
    %1202 = arith.mulf %238, %1201 : vector<8x128xf32>
    %1203 = arith.addf %1199, %1202 : vector<8x128xf32>
    %c2_562 = arith.constant 2 : index
    %c2_563 = arith.constant 2 : index
    %1204 = memref.load %arg6[%c2_562, %c2_563] : memref<15x15xf32, #tpu.memory_space<smem>>
    %1205 = vector.broadcast %1204 : f32 to vector<8x128xf32>
    %1206 = arith.mulf %302, %1205 : vector<8x128xf32>
    %1207 = arith.addf %1203, %1206 : vector<8x128xf32>
    %c2_564 = arith.constant 2 : index
    %c3_565 = arith.constant 3 : index
    %1208 = memref.load %arg6[%c2_564, %c3_565] : memref<15x15xf32, #tpu.memory_space<smem>>
    %1209 = vector.broadcast %1208 : f32 to vector<8x128xf32>
    %1210 = arith.mulf %366, %1209 : vector<8x128xf32>
    %1211 = arith.addf %1207, %1210 : vector<8x128xf32>
    %c2_566 = arith.constant 2 : index
    %c4_567 = arith.constant 4 : index
    %1212 = memref.load %arg6[%c2_566, %c4_567] : memref<15x15xf32, #tpu.memory_space<smem>>
    %1213 = vector.broadcast %1212 : f32 to vector<8x128xf32>
    %1214 = arith.mulf %430, %1213 : vector<8x128xf32>
    %1215 = arith.addf %1211, %1214 : vector<8x128xf32>
    %c2_568 = arith.constant 2 : index
    %c5_569 = arith.constant 5 : index
    %1216 = memref.load %arg6[%c2_568, %c5_569] : memref<15x15xf32, #tpu.memory_space<smem>>
    %1217 = vector.broadcast %1216 : f32 to vector<8x128xf32>
    %1218 = arith.mulf %494, %1217 : vector<8x128xf32>
    %1219 = arith.addf %1215, %1218 : vector<8x128xf32>
    %c2_570 = arith.constant 2 : index
    %c6_571 = arith.constant 6 : index
    %1220 = memref.load %arg6[%c2_570, %c6_571] : memref<15x15xf32, #tpu.memory_space<smem>>
    %1221 = vector.broadcast %1220 : f32 to vector<8x128xf32>
    %1222 = arith.mulf %558, %1221 : vector<8x128xf32>
    %1223 = arith.addf %1219, %1222 : vector<8x128xf32>
    %c2_572 = arith.constant 2 : index
    %c7_573 = arith.constant 7 : index
    %1224 = memref.load %arg6[%c2_572, %c7_573] : memref<15x15xf32, #tpu.memory_space<smem>>
    %1225 = vector.broadcast %1224 : f32 to vector<8x128xf32>
    %1226 = arith.mulf %622, %1225 : vector<8x128xf32>
    %1227 = arith.addf %1223, %1226 : vector<8x128xf32>
    %c2_574 = arith.constant 2 : index
    %c8_575 = arith.constant 8 : index
    %1228 = memref.load %arg6[%c2_574, %c8_575] : memref<15x15xf32, #tpu.memory_space<smem>>
    %1229 = vector.broadcast %1228 : f32 to vector<8x128xf32>
    %1230 = arith.mulf %686, %1229 : vector<8x128xf32>
    %1231 = arith.addf %1227, %1230 : vector<8x128xf32>
    %c2_576 = arith.constant 2 : index
    %c9_577 = arith.constant 9 : index
    %1232 = memref.load %arg6[%c2_576, %c9_577] : memref<15x15xf32, #tpu.memory_space<smem>>
    %1233 = vector.broadcast %1232 : f32 to vector<8x128xf32>
    %1234 = arith.mulf %750, %1233 : vector<8x128xf32>
    %1235 = arith.addf %1231, %1234 : vector<8x128xf32>
    %c2_578 = arith.constant 2 : index
    %c10_579 = arith.constant 10 : index
    %1236 = memref.load %arg6[%c2_578, %c10_579] : memref<15x15xf32, #tpu.memory_space<smem>>
    %1237 = vector.broadcast %1236 : f32 to vector<8x128xf32>
    %1238 = arith.mulf %814, %1237 : vector<8x128xf32>
    %1239 = arith.addf %1235, %1238 : vector<8x128xf32>
    %c2_580 = arith.constant 2 : index
    %c11_581 = arith.constant 11 : index
    %1240 = memref.load %arg6[%c2_580, %c11_581] : memref<15x15xf32, #tpu.memory_space<smem>>
    %1241 = vector.broadcast %1240 : f32 to vector<8x128xf32>
    %1242 = arith.mulf %878, %1241 : vector<8x128xf32>
    %1243 = arith.addf %1239, %1242 : vector<8x128xf32>
    %c2_582 = arith.constant 2 : index
    %c12_583 = arith.constant 12 : index
    %1244 = memref.load %arg6[%c2_582, %c12_583] : memref<15x15xf32, #tpu.memory_space<smem>>
    %1245 = vector.broadcast %1244 : f32 to vector<8x128xf32>
    %1246 = arith.mulf %942, %1245 : vector<8x128xf32>
    %1247 = arith.addf %1243, %1246 : vector<8x128xf32>
    %c2_584 = arith.constant 2 : index
    %c13_585 = arith.constant 13 : index
    %1248 = memref.load %arg6[%c2_584, %c13_585] : memref<15x15xf32, #tpu.memory_space<smem>>
    %1249 = vector.broadcast %1248 : f32 to vector<8x128xf32>
    %1250 = arith.mulf %1006, %1249 : vector<8x128xf32>
    %1251 = arith.addf %1247, %1250 : vector<8x128xf32>
    %c2_586 = arith.constant 2 : index
    %c14_587 = arith.constant 14 : index
    %1252 = memref.load %arg6[%c2_586, %c14_587] : memref<15x15xf32, #tpu.memory_space<smem>>
    %1253 = vector.broadcast %1252 : f32 to vector<8x128xf32>
    %1254 = arith.mulf %1070, %1253 : vector<8x128xf32>
    %1255 = arith.addf %1251, %1254 : vector<8x128xf32>
    %c2_588 = arith.constant 2 : index
    %1256 = memref.load %arg7[%c2_588] : memref<15xf32, #tpu.memory_space<smem>>
    %1257 = vector.broadcast %1256 : f32 to vector<8x128xf32>
    %1258 = arith.addf %1255, %1257 : vector<8x128xf32>
    %1259 = math.tanh %1258 : vector<8x128xf32>
    %c3_589 = arith.constant 3 : index
    %c0_590 = arith.constant 0 : index
    %1260 = memref.load %arg6[%c3_589, %c0_590] : memref<15x15xf32, #tpu.memory_space<smem>>
    %1261 = vector.broadcast %1260 : f32 to vector<8x128xf32>
    %1262 = arith.mulf %174, %1261 : vector<8x128xf32>
    %c3_591 = arith.constant 3 : index
    %c1_592 = arith.constant 1 : index
    %1263 = memref.load %arg6[%c3_591, %c1_592] : memref<15x15xf32, #tpu.memory_space<smem>>
    %1264 = vector.broadcast %1263 : f32 to vector<8x128xf32>
    %1265 = arith.mulf %238, %1264 : vector<8x128xf32>
    %1266 = arith.addf %1262, %1265 : vector<8x128xf32>
    %c3_593 = arith.constant 3 : index
    %c2_594 = arith.constant 2 : index
    %1267 = memref.load %arg6[%c3_593, %c2_594] : memref<15x15xf32, #tpu.memory_space<smem>>
    %1268 = vector.broadcast %1267 : f32 to vector<8x128xf32>
    %1269 = arith.mulf %302, %1268 : vector<8x128xf32>
    %1270 = arith.addf %1266, %1269 : vector<8x128xf32>
    %c3_595 = arith.constant 3 : index
    %c3_596 = arith.constant 3 : index
    %1271 = memref.load %arg6[%c3_595, %c3_596] : memref<15x15xf32, #tpu.memory_space<smem>>
    %1272 = vector.broadcast %1271 : f32 to vector<8x128xf32>
    %1273 = arith.mulf %366, %1272 : vector<8x128xf32>
    %1274 = arith.addf %1270, %1273 : vector<8x128xf32>
    %c3_597 = arith.constant 3 : index
    %c4_598 = arith.constant 4 : index
    %1275 = memref.load %arg6[%c3_597, %c4_598] : memref<15x15xf32, #tpu.memory_space<smem>>
    %1276 = vector.broadcast %1275 : f32 to vector<8x128xf32>
    %1277 = arith.mulf %430, %1276 : vector<8x128xf32>
    %1278 = arith.addf %1274, %1277 : vector<8x128xf32>
    %c3_599 = arith.constant 3 : index
    %c5_600 = arith.constant 5 : index
    %1279 = memref.load %arg6[%c3_599, %c5_600] : memref<15x15xf32, #tpu.memory_space<smem>>
    %1280 = vector.broadcast %1279 : f32 to vector<8x128xf32>
    %1281 = arith.mulf %494, %1280 : vector<8x128xf32>
    %1282 = arith.addf %1278, %1281 : vector<8x128xf32>
    %c3_601 = arith.constant 3 : index
    %c6_602 = arith.constant 6 : index
    %1283 = memref.load %arg6[%c3_601, %c6_602] : memref<15x15xf32, #tpu.memory_space<smem>>
    %1284 = vector.broadcast %1283 : f32 to vector<8x128xf32>
    %1285 = arith.mulf %558, %1284 : vector<8x128xf32>
    %1286 = arith.addf %1282, %1285 : vector<8x128xf32>
    %c3_603 = arith.constant 3 : index
    %c7_604 = arith.constant 7 : index
    %1287 = memref.load %arg6[%c3_603, %c7_604] : memref<15x15xf32, #tpu.memory_space<smem>>
    %1288 = vector.broadcast %1287 : f32 to vector<8x128xf32>
    %1289 = arith.mulf %622, %1288 : vector<8x128xf32>
    %1290 = arith.addf %1286, %1289 : vector<8x128xf32>
    %c3_605 = arith.constant 3 : index
    %c8_606 = arith.constant 8 : index
    %1291 = memref.load %arg6[%c3_605, %c8_606] : memref<15x15xf32, #tpu.memory_space<smem>>
    %1292 = vector.broadcast %1291 : f32 to vector<8x128xf32>
    %1293 = arith.mulf %686, %1292 : vector<8x128xf32>
    %1294 = arith.addf %1290, %1293 : vector<8x128xf32>
    %c3_607 = arith.constant 3 : index
    %c9_608 = arith.constant 9 : index
    %1295 = memref.load %arg6[%c3_607, %c9_608] : memref<15x15xf32, #tpu.memory_space<smem>>
    %1296 = vector.broadcast %1295 : f32 to vector<8x128xf32>
    %1297 = arith.mulf %750, %1296 : vector<8x128xf32>
    %1298 = arith.addf %1294, %1297 : vector<8x128xf32>
    %c3_609 = arith.constant 3 : index
    %c10_610 = arith.constant 10 : index
    %1299 = memref.load %arg6[%c3_609, %c10_610] : memref<15x15xf32, #tpu.memory_space<smem>>
    %1300 = vector.broadcast %1299 : f32 to vector<8x128xf32>
    %1301 = arith.mulf %814, %1300 : vector<8x128xf32>
    %1302 = arith.addf %1298, %1301 : vector<8x128xf32>
    %c3_611 = arith.constant 3 : index
    %c11_612 = arith.constant 11 : index
    %1303 = memref.load %arg6[%c3_611, %c11_612] : memref<15x15xf32, #tpu.memory_space<smem>>
    %1304 = vector.broadcast %1303 : f32 to vector<8x128xf32>
    %1305 = arith.mulf %878, %1304 : vector<8x128xf32>
    %1306 = arith.addf %1302, %1305 : vector<8x128xf32>
    %c3_613 = arith.constant 3 : index
    %c12_614 = arith.constant 12 : index
    %1307 = memref.load %arg6[%c3_613, %c12_614] : memref<15x15xf32, #tpu.memory_space<smem>>
    %1308 = vector.broadcast %1307 : f32 to vector<8x128xf32>
    %1309 = arith.mulf %942, %1308 : vector<8x128xf32>
    %1310 = arith.addf %1306, %1309 : vector<8x128xf32>
    %c3_615 = arith.constant 3 : index
    %c13_616 = arith.constant 13 : index
    %1311 = memref.load %arg6[%c3_615, %c13_616] : memref<15x15xf32, #tpu.memory_space<smem>>
    %1312 = vector.broadcast %1311 : f32 to vector<8x128xf32>
    %1313 = arith.mulf %1006, %1312 : vector<8x128xf32>
    %1314 = arith.addf %1310, %1313 : vector<8x128xf32>
    %c3_617 = arith.constant 3 : index
    %c14_618 = arith.constant 14 : index
    %1315 = memref.load %arg6[%c3_617, %c14_618] : memref<15x15xf32, #tpu.memory_space<smem>>
    %1316 = vector.broadcast %1315 : f32 to vector<8x128xf32>
    %1317 = arith.mulf %1070, %1316 : vector<8x128xf32>
    %1318 = arith.addf %1314, %1317 : vector<8x128xf32>
    %c3_619 = arith.constant 3 : index
    %1319 = memref.load %arg7[%c3_619] : memref<15xf32, #tpu.memory_space<smem>>
    %1320 = vector.broadcast %1319 : f32 to vector<8x128xf32>
    %1321 = arith.addf %1318, %1320 : vector<8x128xf32>
    %1322 = math.tanh %1321 : vector<8x128xf32>
    %c4_620 = arith.constant 4 : index
    %c0_621 = arith.constant 0 : index
    %1323 = memref.load %arg6[%c4_620, %c0_621] : memref<15x15xf32, #tpu.memory_space<smem>>
    %1324 = vector.broadcast %1323 : f32 to vector<8x128xf32>
    %1325 = arith.mulf %174, %1324 : vector<8x128xf32>
    %c4_622 = arith.constant 4 : index
    %c1_623 = arith.constant 1 : index
    %1326 = memref.load %arg6[%c4_622, %c1_623] : memref<15x15xf32, #tpu.memory_space<smem>>
    %1327 = vector.broadcast %1326 : f32 to vector<8x128xf32>
    %1328 = arith.mulf %238, %1327 : vector<8x128xf32>
    %1329 = arith.addf %1325, %1328 : vector<8x128xf32>
    %c4_624 = arith.constant 4 : index
    %c2_625 = arith.constant 2 : index
    %1330 = memref.load %arg6[%c4_624, %c2_625] : memref<15x15xf32, #tpu.memory_space<smem>>
    %1331 = vector.broadcast %1330 : f32 to vector<8x128xf32>
    %1332 = arith.mulf %302, %1331 : vector<8x128xf32>
    %1333 = arith.addf %1329, %1332 : vector<8x128xf32>
    %c4_626 = arith.constant 4 : index
    %c3_627 = arith.constant 3 : index
    %1334 = memref.load %arg6[%c4_626, %c3_627] : memref<15x15xf32, #tpu.memory_space<smem>>
    %1335 = vector.broadcast %1334 : f32 to vector<8x128xf32>
    %1336 = arith.mulf %366, %1335 : vector<8x128xf32>
    %1337 = arith.addf %1333, %1336 : vector<8x128xf32>
    %c4_628 = arith.constant 4 : index
    %c4_629 = arith.constant 4 : index
    %1338 = memref.load %arg6[%c4_628, %c4_629] : memref<15x15xf32, #tpu.memory_space<smem>>
    %1339 = vector.broadcast %1338 : f32 to vector<8x128xf32>
    %1340 = arith.mulf %430, %1339 : vector<8x128xf32>
    %1341 = arith.addf %1337, %1340 : vector<8x128xf32>
    %c4_630 = arith.constant 4 : index
    %c5_631 = arith.constant 5 : index
    %1342 = memref.load %arg6[%c4_630, %c5_631] : memref<15x15xf32, #tpu.memory_space<smem>>
    %1343 = vector.broadcast %1342 : f32 to vector<8x128xf32>
    %1344 = arith.mulf %494, %1343 : vector<8x128xf32>
    %1345 = arith.addf %1341, %1344 : vector<8x128xf32>
    %c4_632 = arith.constant 4 : index
    %c6_633 = arith.constant 6 : index
    %1346 = memref.load %arg6[%c4_632, %c6_633] : memref<15x15xf32, #tpu.memory_space<smem>>
    %1347 = vector.broadcast %1346 : f32 to vector<8x128xf32>
    %1348 = arith.mulf %558, %1347 : vector<8x128xf32>
    %1349 = arith.addf %1345, %1348 : vector<8x128xf32>
    %c4_634 = arith.constant 4 : index
    %c7_635 = arith.constant 7 : index
    %1350 = memref.load %arg6[%c4_634, %c7_635] : memref<15x15xf32, #tpu.memory_space<smem>>
    %1351 = vector.broadcast %1350 : f32 to vector<8x128xf32>
    %1352 = arith.mulf %622, %1351 : vector<8x128xf32>
    %1353 = arith.addf %1349, %1352 : vector<8x128xf32>
    %c4_636 = arith.constant 4 : index
    %c8_637 = arith.constant 8 : index
    %1354 = memref.load %arg6[%c4_636, %c8_637] : memref<15x15xf32, #tpu.memory_space<smem>>
    %1355 = vector.broadcast %1354 : f32 to vector<8x128xf32>
    %1356 = arith.mulf %686, %1355 : vector<8x128xf32>
    %1357 = arith.addf %1353, %1356 : vector<8x128xf32>
    %c4_638 = arith.constant 4 : index
    %c9_639 = arith.constant 9 : index
    %1358 = memref.load %arg6[%c4_638, %c9_639] : memref<15x15xf32, #tpu.memory_space<smem>>
    %1359 = vector.broadcast %1358 : f32 to vector<8x128xf32>
    %1360 = arith.mulf %750, %1359 : vector<8x128xf32>
    %1361 = arith.addf %1357, %1360 : vector<8x128xf32>
    %c4_640 = arith.constant 4 : index
    %c10_641 = arith.constant 10 : index
    %1362 = memref.load %arg6[%c4_640, %c10_641] : memref<15x15xf32, #tpu.memory_space<smem>>
    %1363 = vector.broadcast %1362 : f32 to vector<8x128xf32>
    %1364 = arith.mulf %814, %1363 : vector<8x128xf32>
    %1365 = arith.addf %1361, %1364 : vector<8x128xf32>
    %c4_642 = arith.constant 4 : index
    %c11_643 = arith.constant 11 : index
    %1366 = memref.load %arg6[%c4_642, %c11_643] : memref<15x15xf32, #tpu.memory_space<smem>>
    %1367 = vector.broadcast %1366 : f32 to vector<8x128xf32>
    %1368 = arith.mulf %878, %1367 : vector<8x128xf32>
    %1369 = arith.addf %1365, %1368 : vector<8x128xf32>
    %c4_644 = arith.constant 4 : index
    %c12_645 = arith.constant 12 : index
    %1370 = memref.load %arg6[%c4_644, %c12_645] : memref<15x15xf32, #tpu.memory_space<smem>>
    %1371 = vector.broadcast %1370 : f32 to vector<8x128xf32>
    %1372 = arith.mulf %942, %1371 : vector<8x128xf32>
    %1373 = arith.addf %1369, %1372 : vector<8x128xf32>
    %c4_646 = arith.constant 4 : index
    %c13_647 = arith.constant 13 : index
    %1374 = memref.load %arg6[%c4_646, %c13_647] : memref<15x15xf32, #tpu.memory_space<smem>>
    %1375 = vector.broadcast %1374 : f32 to vector<8x128xf32>
    %1376 = arith.mulf %1006, %1375 : vector<8x128xf32>
    %1377 = arith.addf %1373, %1376 : vector<8x128xf32>
    %c4_648 = arith.constant 4 : index
    %c14_649 = arith.constant 14 : index
    %1378 = memref.load %arg6[%c4_648, %c14_649] : memref<15x15xf32, #tpu.memory_space<smem>>
    %1379 = vector.broadcast %1378 : f32 to vector<8x128xf32>
    %1380 = arith.mulf %1070, %1379 : vector<8x128xf32>
    %1381 = arith.addf %1377, %1380 : vector<8x128xf32>
    %c4_650 = arith.constant 4 : index
    %1382 = memref.load %arg7[%c4_650] : memref<15xf32, #tpu.memory_space<smem>>
    %1383 = vector.broadcast %1382 : f32 to vector<8x128xf32>
    %1384 = arith.addf %1381, %1383 : vector<8x128xf32>
    %1385 = math.tanh %1384 : vector<8x128xf32>
    %c5_651 = arith.constant 5 : index
    %c0_652 = arith.constant 0 : index
    %1386 = memref.load %arg6[%c5_651, %c0_652] : memref<15x15xf32, #tpu.memory_space<smem>>
    %1387 = vector.broadcast %1386 : f32 to vector<8x128xf32>
    %1388 = arith.mulf %174, %1387 : vector<8x128xf32>
    %c5_653 = arith.constant 5 : index
    %c1_654 = arith.constant 1 : index
    %1389 = memref.load %arg6[%c5_653, %c1_654] : memref<15x15xf32, #tpu.memory_space<smem>>
    %1390 = vector.broadcast %1389 : f32 to vector<8x128xf32>
    %1391 = arith.mulf %238, %1390 : vector<8x128xf32>
    %1392 = arith.addf %1388, %1391 : vector<8x128xf32>
    %c5_655 = arith.constant 5 : index
    %c2_656 = arith.constant 2 : index
    %1393 = memref.load %arg6[%c5_655, %c2_656] : memref<15x15xf32, #tpu.memory_space<smem>>
    %1394 = vector.broadcast %1393 : f32 to vector<8x128xf32>
    %1395 = arith.mulf %302, %1394 : vector<8x128xf32>
    %1396 = arith.addf %1392, %1395 : vector<8x128xf32>
    %c5_657 = arith.constant 5 : index
    %c3_658 = arith.constant 3 : index
    %1397 = memref.load %arg6[%c5_657, %c3_658] : memref<15x15xf32, #tpu.memory_space<smem>>
    %1398 = vector.broadcast %1397 : f32 to vector<8x128xf32>
    %1399 = arith.mulf %366, %1398 : vector<8x128xf32>
    %1400 = arith.addf %1396, %1399 : vector<8x128xf32>
    %c5_659 = arith.constant 5 : index
    %c4_660 = arith.constant 4 : index
    %1401 = memref.load %arg6[%c5_659, %c4_660] : memref<15x15xf32, #tpu.memory_space<smem>>
    %1402 = vector.broadcast %1401 : f32 to vector<8x128xf32>
    %1403 = arith.mulf %430, %1402 : vector<8x128xf32>
    %1404 = arith.addf %1400, %1403 : vector<8x128xf32>
    %c5_661 = arith.constant 5 : index
    %c5_662 = arith.constant 5 : index
    %1405 = memref.load %arg6[%c5_661, %c5_662] : memref<15x15xf32, #tpu.memory_space<smem>>
    %1406 = vector.broadcast %1405 : f32 to vector<8x128xf32>
    %1407 = arith.mulf %494, %1406 : vector<8x128xf32>
    %1408 = arith.addf %1404, %1407 : vector<8x128xf32>
    %c5_663 = arith.constant 5 : index
    %c6_664 = arith.constant 6 : index
    %1409 = memref.load %arg6[%c5_663, %c6_664] : memref<15x15xf32, #tpu.memory_space<smem>>
    %1410 = vector.broadcast %1409 : f32 to vector<8x128xf32>
    %1411 = arith.mulf %558, %1410 : vector<8x128xf32>
    %1412 = arith.addf %1408, %1411 : vector<8x128xf32>
    %c5_665 = arith.constant 5 : index
    %c7_666 = arith.constant 7 : index
    %1413 = memref.load %arg6[%c5_665, %c7_666] : memref<15x15xf32, #tpu.memory_space<smem>>
    %1414 = vector.broadcast %1413 : f32 to vector<8x128xf32>
    %1415 = arith.mulf %622, %1414 : vector<8x128xf32>
    %1416 = arith.addf %1412, %1415 : vector<8x128xf32>
    %c5_667 = arith.constant 5 : index
    %c8_668 = arith.constant 8 : index
    %1417 = memref.load %arg6[%c5_667, %c8_668] : memref<15x15xf32, #tpu.memory_space<smem>>
    %1418 = vector.broadcast %1417 : f32 to vector<8x128xf32>
    %1419 = arith.mulf %686, %1418 : vector<8x128xf32>
    %1420 = arith.addf %1416, %1419 : vector<8x128xf32>
    %c5_669 = arith.constant 5 : index
    %c9_670 = arith.constant 9 : index
    %1421 = memref.load %arg6[%c5_669, %c9_670] : memref<15x15xf32, #tpu.memory_space<smem>>
    %1422 = vector.broadcast %1421 : f32 to vector<8x128xf32>
    %1423 = arith.mulf %750, %1422 : vector<8x128xf32>
    %1424 = arith.addf %1420, %1423 : vector<8x128xf32>
    %c5_671 = arith.constant 5 : index
    %c10_672 = arith.constant 10 : index
    %1425 = memref.load %arg6[%c5_671, %c10_672] : memref<15x15xf32, #tpu.memory_space<smem>>
    %1426 = vector.broadcast %1425 : f32 to vector<8x128xf32>
    %1427 = arith.mulf %814, %1426 : vector<8x128xf32>
    %1428 = arith.addf %1424, %1427 : vector<8x128xf32>
    %c5_673 = arith.constant 5 : index
    %c11_674 = arith.constant 11 : index
    %1429 = memref.load %arg6[%c5_673, %c11_674] : memref<15x15xf32, #tpu.memory_space<smem>>
    %1430 = vector.broadcast %1429 : f32 to vector<8x128xf32>
    %1431 = arith.mulf %878, %1430 : vector<8x128xf32>
    %1432 = arith.addf %1428, %1431 : vector<8x128xf32>
    %c5_675 = arith.constant 5 : index
    %c12_676 = arith.constant 12 : index
    %1433 = memref.load %arg6[%c5_675, %c12_676] : memref<15x15xf32, #tpu.memory_space<smem>>
    %1434 = vector.broadcast %1433 : f32 to vector<8x128xf32>
    %1435 = arith.mulf %942, %1434 : vector<8x128xf32>
    %1436 = arith.addf %1432, %1435 : vector<8x128xf32>
    %c5_677 = arith.constant 5 : index
    %c13_678 = arith.constant 13 : index
    %1437 = memref.load %arg6[%c5_677, %c13_678] : memref<15x15xf32, #tpu.memory_space<smem>>
    %1438 = vector.broadcast %1437 : f32 to vector<8x128xf32>
    %1439 = arith.mulf %1006, %1438 : vector<8x128xf32>
    %1440 = arith.addf %1436, %1439 : vector<8x128xf32>
    %c5_679 = arith.constant 5 : index
    %c14_680 = arith.constant 14 : index
    %1441 = memref.load %arg6[%c5_679, %c14_680] : memref<15x15xf32, #tpu.memory_space<smem>>
    %1442 = vector.broadcast %1441 : f32 to vector<8x128xf32>
    %1443 = arith.mulf %1070, %1442 : vector<8x128xf32>
    %1444 = arith.addf %1440, %1443 : vector<8x128xf32>
    %c5_681 = arith.constant 5 : index
    %1445 = memref.load %arg7[%c5_681] : memref<15xf32, #tpu.memory_space<smem>>
    %1446 = vector.broadcast %1445 : f32 to vector<8x128xf32>
    %1447 = arith.addf %1444, %1446 : vector<8x128xf32>
    %1448 = math.tanh %1447 : vector<8x128xf32>
    %c6_682 = arith.constant 6 : index
    %c0_683 = arith.constant 0 : index
    %1449 = memref.load %arg6[%c6_682, %c0_683] : memref<15x15xf32, #tpu.memory_space<smem>>
    %1450 = vector.broadcast %1449 : f32 to vector<8x128xf32>
    %1451 = arith.mulf %174, %1450 : vector<8x128xf32>
    %c6_684 = arith.constant 6 : index
    %c1_685 = arith.constant 1 : index
    %1452 = memref.load %arg6[%c6_684, %c1_685] : memref<15x15xf32, #tpu.memory_space<smem>>
    %1453 = vector.broadcast %1452 : f32 to vector<8x128xf32>
    %1454 = arith.mulf %238, %1453 : vector<8x128xf32>
    %1455 = arith.addf %1451, %1454 : vector<8x128xf32>
    %c6_686 = arith.constant 6 : index
    %c2_687 = arith.constant 2 : index
    %1456 = memref.load %arg6[%c6_686, %c2_687] : memref<15x15xf32, #tpu.memory_space<smem>>
    %1457 = vector.broadcast %1456 : f32 to vector<8x128xf32>
    %1458 = arith.mulf %302, %1457 : vector<8x128xf32>
    %1459 = arith.addf %1455, %1458 : vector<8x128xf32>
    %c6_688 = arith.constant 6 : index
    %c3_689 = arith.constant 3 : index
    %1460 = memref.load %arg6[%c6_688, %c3_689] : memref<15x15xf32, #tpu.memory_space<smem>>
    %1461 = vector.broadcast %1460 : f32 to vector<8x128xf32>
    %1462 = arith.mulf %366, %1461 : vector<8x128xf32>
    %1463 = arith.addf %1459, %1462 : vector<8x128xf32>
    %c6_690 = arith.constant 6 : index
    %c4_691 = arith.constant 4 : index
    %1464 = memref.load %arg6[%c6_690, %c4_691] : memref<15x15xf32, #tpu.memory_space<smem>>
    %1465 = vector.broadcast %1464 : f32 to vector<8x128xf32>
    %1466 = arith.mulf %430, %1465 : vector<8x128xf32>
    %1467 = arith.addf %1463, %1466 : vector<8x128xf32>
    %c6_692 = arith.constant 6 : index
    %c5_693 = arith.constant 5 : index
    %1468 = memref.load %arg6[%c6_692, %c5_693] : memref<15x15xf32, #tpu.memory_space<smem>>
    %1469 = vector.broadcast %1468 : f32 to vector<8x128xf32>
    %1470 = arith.mulf %494, %1469 : vector<8x128xf32>
    %1471 = arith.addf %1467, %1470 : vector<8x128xf32>
    %c6_694 = arith.constant 6 : index
    %c6_695 = arith.constant 6 : index
    %1472 = memref.load %arg6[%c6_694, %c6_695] : memref<15x15xf32, #tpu.memory_space<smem>>
    %1473 = vector.broadcast %1472 : f32 to vector<8x128xf32>
    %1474 = arith.mulf %558, %1473 : vector<8x128xf32>
    %1475 = arith.addf %1471, %1474 : vector<8x128xf32>
    %c6_696 = arith.constant 6 : index
    %c7_697 = arith.constant 7 : index
    %1476 = memref.load %arg6[%c6_696, %c7_697] : memref<15x15xf32, #tpu.memory_space<smem>>
    %1477 = vector.broadcast %1476 : f32 to vector<8x128xf32>
    %1478 = arith.mulf %622, %1477 : vector<8x128xf32>
    %1479 = arith.addf %1475, %1478 : vector<8x128xf32>
    %c6_698 = arith.constant 6 : index
    %c8_699 = arith.constant 8 : index
    %1480 = memref.load %arg6[%c6_698, %c8_699] : memref<15x15xf32, #tpu.memory_space<smem>>
    %1481 = vector.broadcast %1480 : f32 to vector<8x128xf32>
    %1482 = arith.mulf %686, %1481 : vector<8x128xf32>
    %1483 = arith.addf %1479, %1482 : vector<8x128xf32>
    %c6_700 = arith.constant 6 : index
    %c9_701 = arith.constant 9 : index
    %1484 = memref.load %arg6[%c6_700, %c9_701] : memref<15x15xf32, #tpu.memory_space<smem>>
    %1485 = vector.broadcast %1484 : f32 to vector<8x128xf32>
    %1486 = arith.mulf %750, %1485 : vector<8x128xf32>
    %1487 = arith.addf %1483, %1486 : vector<8x128xf32>
    %c6_702 = arith.constant 6 : index
    %c10_703 = arith.constant 10 : index
    %1488 = memref.load %arg6[%c6_702, %c10_703] : memref<15x15xf32, #tpu.memory_space<smem>>
    %1489 = vector.broadcast %1488 : f32 to vector<8x128xf32>
    %1490 = arith.mulf %814, %1489 : vector<8x128xf32>
    %1491 = arith.addf %1487, %1490 : vector<8x128xf32>
    %c6_704 = arith.constant 6 : index
    %c11_705 = arith.constant 11 : index
    %1492 = memref.load %arg6[%c6_704, %c11_705] : memref<15x15xf32, #tpu.memory_space<smem>>
    %1493 = vector.broadcast %1492 : f32 to vector<8x128xf32>
    %1494 = arith.mulf %878, %1493 : vector<8x128xf32>
    %1495 = arith.addf %1491, %1494 : vector<8x128xf32>
    %c6_706 = arith.constant 6 : index
    %c12_707 = arith.constant 12 : index
    %1496 = memref.load %arg6[%c6_706, %c12_707] : memref<15x15xf32, #tpu.memory_space<smem>>
    %1497 = vector.broadcast %1496 : f32 to vector<8x128xf32>
    %1498 = arith.mulf %942, %1497 : vector<8x128xf32>
    %1499 = arith.addf %1495, %1498 : vector<8x128xf32>
    %c6_708 = arith.constant 6 : index
    %c13_709 = arith.constant 13 : index
    %1500 = memref.load %arg6[%c6_708, %c13_709] : memref<15x15xf32, #tpu.memory_space<smem>>
    %1501 = vector.broadcast %1500 : f32 to vector<8x128xf32>
    %1502 = arith.mulf %1006, %1501 : vector<8x128xf32>
    %1503 = arith.addf %1499, %1502 : vector<8x128xf32>
    %c6_710 = arith.constant 6 : index
    %c14_711 = arith.constant 14 : index
    %1504 = memref.load %arg6[%c6_710, %c14_711] : memref<15x15xf32, #tpu.memory_space<smem>>
    %1505 = vector.broadcast %1504 : f32 to vector<8x128xf32>
    %1506 = arith.mulf %1070, %1505 : vector<8x128xf32>
    %1507 = arith.addf %1503, %1506 : vector<8x128xf32>
    %c6_712 = arith.constant 6 : index
    %1508 = memref.load %arg7[%c6_712] : memref<15xf32, #tpu.memory_space<smem>>
    %1509 = vector.broadcast %1508 : f32 to vector<8x128xf32>
    %1510 = arith.addf %1507, %1509 : vector<8x128xf32>
    %1511 = math.tanh %1510 : vector<8x128xf32>
    %c7_713 = arith.constant 7 : index
    %c0_714 = arith.constant 0 : index
    %1512 = memref.load %arg6[%c7_713, %c0_714] : memref<15x15xf32, #tpu.memory_space<smem>>
    %1513 = vector.broadcast %1512 : f32 to vector<8x128xf32>
    %1514 = arith.mulf %174, %1513 : vector<8x128xf32>
    %c7_715 = arith.constant 7 : index
    %c1_716 = arith.constant 1 : index
    %1515 = memref.load %arg6[%c7_715, %c1_716] : memref<15x15xf32, #tpu.memory_space<smem>>
    %1516 = vector.broadcast %1515 : f32 to vector<8x128xf32>
    %1517 = arith.mulf %238, %1516 : vector<8x128xf32>
    %1518 = arith.addf %1514, %1517 : vector<8x128xf32>
    %c7_717 = arith.constant 7 : index
    %c2_718 = arith.constant 2 : index
    %1519 = memref.load %arg6[%c7_717, %c2_718] : memref<15x15xf32, #tpu.memory_space<smem>>
    %1520 = vector.broadcast %1519 : f32 to vector<8x128xf32>
    %1521 = arith.mulf %302, %1520 : vector<8x128xf32>
    %1522 = arith.addf %1518, %1521 : vector<8x128xf32>
    %c7_719 = arith.constant 7 : index
    %c3_720 = arith.constant 3 : index
    %1523 = memref.load %arg6[%c7_719, %c3_720] : memref<15x15xf32, #tpu.memory_space<smem>>
    %1524 = vector.broadcast %1523 : f32 to vector<8x128xf32>
    %1525 = arith.mulf %366, %1524 : vector<8x128xf32>
    %1526 = arith.addf %1522, %1525 : vector<8x128xf32>
    %c7_721 = arith.constant 7 : index
    %c4_722 = arith.constant 4 : index
    %1527 = memref.load %arg6[%c7_721, %c4_722] : memref<15x15xf32, #tpu.memory_space<smem>>
    %1528 = vector.broadcast %1527 : f32 to vector<8x128xf32>
    %1529 = arith.mulf %430, %1528 : vector<8x128xf32>
    %1530 = arith.addf %1526, %1529 : vector<8x128xf32>
    %c7_723 = arith.constant 7 : index
    %c5_724 = arith.constant 5 : index
    %1531 = memref.load %arg6[%c7_723, %c5_724] : memref<15x15xf32, #tpu.memory_space<smem>>
    %1532 = vector.broadcast %1531 : f32 to vector<8x128xf32>
    %1533 = arith.mulf %494, %1532 : vector<8x128xf32>
    %1534 = arith.addf %1530, %1533 : vector<8x128xf32>
    %c7_725 = arith.constant 7 : index
    %c6_726 = arith.constant 6 : index
    %1535 = memref.load %arg6[%c7_725, %c6_726] : memref<15x15xf32, #tpu.memory_space<smem>>
    %1536 = vector.broadcast %1535 : f32 to vector<8x128xf32>
    %1537 = arith.mulf %558, %1536 : vector<8x128xf32>
    %1538 = arith.addf %1534, %1537 : vector<8x128xf32>
    %c7_727 = arith.constant 7 : index
    %c7_728 = arith.constant 7 : index
    %1539 = memref.load %arg6[%c7_727, %c7_728] : memref<15x15xf32, #tpu.memory_space<smem>>
    %1540 = vector.broadcast %1539 : f32 to vector<8x128xf32>
    %1541 = arith.mulf %622, %1540 : vector<8x128xf32>
    %1542 = arith.addf %1538, %1541 : vector<8x128xf32>
    %c7_729 = arith.constant 7 : index
    %c8_730 = arith.constant 8 : index
    %1543 = memref.load %arg6[%c7_729, %c8_730] : memref<15x15xf32, #tpu.memory_space<smem>>
    %1544 = vector.broadcast %1543 : f32 to vector<8x128xf32>
    %1545 = arith.mulf %686, %1544 : vector<8x128xf32>
    %1546 = arith.addf %1542, %1545 : vector<8x128xf32>
    %c7_731 = arith.constant 7 : index
    %c9_732 = arith.constant 9 : index
    %1547 = memref.load %arg6[%c7_731, %c9_732] : memref<15x15xf32, #tpu.memory_space<smem>>
    %1548 = vector.broadcast %1547 : f32 to vector<8x128xf32>
    %1549 = arith.mulf %750, %1548 : vector<8x128xf32>
    %1550 = arith.addf %1546, %1549 : vector<8x128xf32>
    %c7_733 = arith.constant 7 : index
    %c10_734 = arith.constant 10 : index
    %1551 = memref.load %arg6[%c7_733, %c10_734] : memref<15x15xf32, #tpu.memory_space<smem>>
    %1552 = vector.broadcast %1551 : f32 to vector<8x128xf32>
    %1553 = arith.mulf %814, %1552 : vector<8x128xf32>
    %1554 = arith.addf %1550, %1553 : vector<8x128xf32>
    %c7_735 = arith.constant 7 : index
    %c11_736 = arith.constant 11 : index
    %1555 = memref.load %arg6[%c7_735, %c11_736] : memref<15x15xf32, #tpu.memory_space<smem>>
    %1556 = vector.broadcast %1555 : f32 to vector<8x128xf32>
    %1557 = arith.mulf %878, %1556 : vector<8x128xf32>
    %1558 = arith.addf %1554, %1557 : vector<8x128xf32>
    %c7_737 = arith.constant 7 : index
    %c12_738 = arith.constant 12 : index
    %1559 = memref.load %arg6[%c7_737, %c12_738] : memref<15x15xf32, #tpu.memory_space<smem>>
    %1560 = vector.broadcast %1559 : f32 to vector<8x128xf32>
    %1561 = arith.mulf %942, %1560 : vector<8x128xf32>
    %1562 = arith.addf %1558, %1561 : vector<8x128xf32>
    %c7_739 = arith.constant 7 : index
    %c13_740 = arith.constant 13 : index
    %1563 = memref.load %arg6[%c7_739, %c13_740] : memref<15x15xf32, #tpu.memory_space<smem>>
    %1564 = vector.broadcast %1563 : f32 to vector<8x128xf32>
    %1565 = arith.mulf %1006, %1564 : vector<8x128xf32>
    %1566 = arith.addf %1562, %1565 : vector<8x128xf32>
    %c7_741 = arith.constant 7 : index
    %c14_742 = arith.constant 14 : index
    %1567 = memref.load %arg6[%c7_741, %c14_742] : memref<15x15xf32, #tpu.memory_space<smem>>
    %1568 = vector.broadcast %1567 : f32 to vector<8x128xf32>
    %1569 = arith.mulf %1070, %1568 : vector<8x128xf32>
    %1570 = arith.addf %1566, %1569 : vector<8x128xf32>
    %c7_743 = arith.constant 7 : index
    %1571 = memref.load %arg7[%c7_743] : memref<15xf32, #tpu.memory_space<smem>>
    %1572 = vector.broadcast %1571 : f32 to vector<8x128xf32>
    %1573 = arith.addf %1570, %1572 : vector<8x128xf32>
    %1574 = math.tanh %1573 : vector<8x128xf32>
    %c8_744 = arith.constant 8 : index
    %c0_745 = arith.constant 0 : index
    %1575 = memref.load %arg6[%c8_744, %c0_745] : memref<15x15xf32, #tpu.memory_space<smem>>
    %1576 = vector.broadcast %1575 : f32 to vector<8x128xf32>
    %1577 = arith.mulf %174, %1576 : vector<8x128xf32>
    %c8_746 = arith.constant 8 : index
    %c1_747 = arith.constant 1 : index
    %1578 = memref.load %arg6[%c8_746, %c1_747] : memref<15x15xf32, #tpu.memory_space<smem>>
    %1579 = vector.broadcast %1578 : f32 to vector<8x128xf32>
    %1580 = arith.mulf %238, %1579 : vector<8x128xf32>
    %1581 = arith.addf %1577, %1580 : vector<8x128xf32>
    %c8_748 = arith.constant 8 : index
    %c2_749 = arith.constant 2 : index
    %1582 = memref.load %arg6[%c8_748, %c2_749] : memref<15x15xf32, #tpu.memory_space<smem>>
    %1583 = vector.broadcast %1582 : f32 to vector<8x128xf32>
    %1584 = arith.mulf %302, %1583 : vector<8x128xf32>
    %1585 = arith.addf %1581, %1584 : vector<8x128xf32>
    %c8_750 = arith.constant 8 : index
    %c3_751 = arith.constant 3 : index
    %1586 = memref.load %arg6[%c8_750, %c3_751] : memref<15x15xf32, #tpu.memory_space<smem>>
    %1587 = vector.broadcast %1586 : f32 to vector<8x128xf32>
    %1588 = arith.mulf %366, %1587 : vector<8x128xf32>
    %1589 = arith.addf %1585, %1588 : vector<8x128xf32>
    %c8_752 = arith.constant 8 : index
    %c4_753 = arith.constant 4 : index
    %1590 = memref.load %arg6[%c8_752, %c4_753] : memref<15x15xf32, #tpu.memory_space<smem>>
    %1591 = vector.broadcast %1590 : f32 to vector<8x128xf32>
    %1592 = arith.mulf %430, %1591 : vector<8x128xf32>
    %1593 = arith.addf %1589, %1592 : vector<8x128xf32>
    %c8_754 = arith.constant 8 : index
    %c5_755 = arith.constant 5 : index
    %1594 = memref.load %arg6[%c8_754, %c5_755] : memref<15x15xf32, #tpu.memory_space<smem>>
    %1595 = vector.broadcast %1594 : f32 to vector<8x128xf32>
    %1596 = arith.mulf %494, %1595 : vector<8x128xf32>
    %1597 = arith.addf %1593, %1596 : vector<8x128xf32>
    %c8_756 = arith.constant 8 : index
    %c6_757 = arith.constant 6 : index
    %1598 = memref.load %arg6[%c8_756, %c6_757] : memref<15x15xf32, #tpu.memory_space<smem>>
    %1599 = vector.broadcast %1598 : f32 to vector<8x128xf32>
    %1600 = arith.mulf %558, %1599 : vector<8x128xf32>
    %1601 = arith.addf %1597, %1600 : vector<8x128xf32>
    %c8_758 = arith.constant 8 : index
    %c7_759 = arith.constant 7 : index
    %1602 = memref.load %arg6[%c8_758, %c7_759] : memref<15x15xf32, #tpu.memory_space<smem>>
    %1603 = vector.broadcast %1602 : f32 to vector<8x128xf32>
    %1604 = arith.mulf %622, %1603 : vector<8x128xf32>
    %1605 = arith.addf %1601, %1604 : vector<8x128xf32>
    %c8_760 = arith.constant 8 : index
    %c8_761 = arith.constant 8 : index
    %1606 = memref.load %arg6[%c8_760, %c8_761] : memref<15x15xf32, #tpu.memory_space<smem>>
    %1607 = vector.broadcast %1606 : f32 to vector<8x128xf32>
    %1608 = arith.mulf %686, %1607 : vector<8x128xf32>
    %1609 = arith.addf %1605, %1608 : vector<8x128xf32>
    %c8_762 = arith.constant 8 : index
    %c9_763 = arith.constant 9 : index
    %1610 = memref.load %arg6[%c8_762, %c9_763] : memref<15x15xf32, #tpu.memory_space<smem>>
    %1611 = vector.broadcast %1610 : f32 to vector<8x128xf32>
    %1612 = arith.mulf %750, %1611 : vector<8x128xf32>
    %1613 = arith.addf %1609, %1612 : vector<8x128xf32>
    %c8_764 = arith.constant 8 : index
    %c10_765 = arith.constant 10 : index
    %1614 = memref.load %arg6[%c8_764, %c10_765] : memref<15x15xf32, #tpu.memory_space<smem>>
    %1615 = vector.broadcast %1614 : f32 to vector<8x128xf32>
    %1616 = arith.mulf %814, %1615 : vector<8x128xf32>
    %1617 = arith.addf %1613, %1616 : vector<8x128xf32>
    %c8_766 = arith.constant 8 : index
    %c11_767 = arith.constant 11 : index
    %1618 = memref.load %arg6[%c8_766, %c11_767] : memref<15x15xf32, #tpu.memory_space<smem>>
    %1619 = vector.broadcast %1618 : f32 to vector<8x128xf32>
    %1620 = arith.mulf %878, %1619 : vector<8x128xf32>
    %1621 = arith.addf %1617, %1620 : vector<8x128xf32>
    %c8_768 = arith.constant 8 : index
    %c12_769 = arith.constant 12 : index
    %1622 = memref.load %arg6[%c8_768, %c12_769] : memref<15x15xf32, #tpu.memory_space<smem>>
    %1623 = vector.broadcast %1622 : f32 to vector<8x128xf32>
    %1624 = arith.mulf %942, %1623 : vector<8x128xf32>
    %1625 = arith.addf %1621, %1624 : vector<8x128xf32>
    %c8_770 = arith.constant 8 : index
    %c13_771 = arith.constant 13 : index
    %1626 = memref.load %arg6[%c8_770, %c13_771] : memref<15x15xf32, #tpu.memory_space<smem>>
    %1627 = vector.broadcast %1626 : f32 to vector<8x128xf32>
    %1628 = arith.mulf %1006, %1627 : vector<8x128xf32>
    %1629 = arith.addf %1625, %1628 : vector<8x128xf32>
    %c8_772 = arith.constant 8 : index
    %c14_773 = arith.constant 14 : index
    %1630 = memref.load %arg6[%c8_772, %c14_773] : memref<15x15xf32, #tpu.memory_space<smem>>
    %1631 = vector.broadcast %1630 : f32 to vector<8x128xf32>
    %1632 = arith.mulf %1070, %1631 : vector<8x128xf32>
    %1633 = arith.addf %1629, %1632 : vector<8x128xf32>
    %c8_774 = arith.constant 8 : index
    %1634 = memref.load %arg7[%c8_774] : memref<15xf32, #tpu.memory_space<smem>>
    %1635 = vector.broadcast %1634 : f32 to vector<8x128xf32>
    %1636 = arith.addf %1633, %1635 : vector<8x128xf32>
    %1637 = math.tanh %1636 : vector<8x128xf32>
    %c9_775 = arith.constant 9 : index
    %c0_776 = arith.constant 0 : index
    %1638 = memref.load %arg6[%c9_775, %c0_776] : memref<15x15xf32, #tpu.memory_space<smem>>
    %1639 = vector.broadcast %1638 : f32 to vector<8x128xf32>
    %1640 = arith.mulf %174, %1639 : vector<8x128xf32>
    %c9_777 = arith.constant 9 : index
    %c1_778 = arith.constant 1 : index
    %1641 = memref.load %arg6[%c9_777, %c1_778] : memref<15x15xf32, #tpu.memory_space<smem>>
    %1642 = vector.broadcast %1641 : f32 to vector<8x128xf32>
    %1643 = arith.mulf %238, %1642 : vector<8x128xf32>
    %1644 = arith.addf %1640, %1643 : vector<8x128xf32>
    %c9_779 = arith.constant 9 : index
    %c2_780 = arith.constant 2 : index
    %1645 = memref.load %arg6[%c9_779, %c2_780] : memref<15x15xf32, #tpu.memory_space<smem>>
    %1646 = vector.broadcast %1645 : f32 to vector<8x128xf32>
    %1647 = arith.mulf %302, %1646 : vector<8x128xf32>
    %1648 = arith.addf %1644, %1647 : vector<8x128xf32>
    %c9_781 = arith.constant 9 : index
    %c3_782 = arith.constant 3 : index
    %1649 = memref.load %arg6[%c9_781, %c3_782] : memref<15x15xf32, #tpu.memory_space<smem>>
    %1650 = vector.broadcast %1649 : f32 to vector<8x128xf32>
    %1651 = arith.mulf %366, %1650 : vector<8x128xf32>
    %1652 = arith.addf %1648, %1651 : vector<8x128xf32>
    %c9_783 = arith.constant 9 : index
    %c4_784 = arith.constant 4 : index
    %1653 = memref.load %arg6[%c9_783, %c4_784] : memref<15x15xf32, #tpu.memory_space<smem>>
    %1654 = vector.broadcast %1653 : f32 to vector<8x128xf32>
    %1655 = arith.mulf %430, %1654 : vector<8x128xf32>
    %1656 = arith.addf %1652, %1655 : vector<8x128xf32>
    %c9_785 = arith.constant 9 : index
    %c5_786 = arith.constant 5 : index
    %1657 = memref.load %arg6[%c9_785, %c5_786] : memref<15x15xf32, #tpu.memory_space<smem>>
    %1658 = vector.broadcast %1657 : f32 to vector<8x128xf32>
    %1659 = arith.mulf %494, %1658 : vector<8x128xf32>
    %1660 = arith.addf %1656, %1659 : vector<8x128xf32>
    %c9_787 = arith.constant 9 : index
    %c6_788 = arith.constant 6 : index
    %1661 = memref.load %arg6[%c9_787, %c6_788] : memref<15x15xf32, #tpu.memory_space<smem>>
    %1662 = vector.broadcast %1661 : f32 to vector<8x128xf32>
    %1663 = arith.mulf %558, %1662 : vector<8x128xf32>
    %1664 = arith.addf %1660, %1663 : vector<8x128xf32>
    %c9_789 = arith.constant 9 : index
    %c7_790 = arith.constant 7 : index
    %1665 = memref.load %arg6[%c9_789, %c7_790] : memref<15x15xf32, #tpu.memory_space<smem>>
    %1666 = vector.broadcast %1665 : f32 to vector<8x128xf32>
    %1667 = arith.mulf %622, %1666 : vector<8x128xf32>
    %1668 = arith.addf %1664, %1667 : vector<8x128xf32>
    %c9_791 = arith.constant 9 : index
    %c8_792 = arith.constant 8 : index
    %1669 = memref.load %arg6[%c9_791, %c8_792] : memref<15x15xf32, #tpu.memory_space<smem>>
    %1670 = vector.broadcast %1669 : f32 to vector<8x128xf32>
    %1671 = arith.mulf %686, %1670 : vector<8x128xf32>
    %1672 = arith.addf %1668, %1671 : vector<8x128xf32>
    %c9_793 = arith.constant 9 : index
    %c9_794 = arith.constant 9 : index
    %1673 = memref.load %arg6[%c9_793, %c9_794] : memref<15x15xf32, #tpu.memory_space<smem>>
    %1674 = vector.broadcast %1673 : f32 to vector<8x128xf32>
    %1675 = arith.mulf %750, %1674 : vector<8x128xf32>
    %1676 = arith.addf %1672, %1675 : vector<8x128xf32>
    %c9_795 = arith.constant 9 : index
    %c10_796 = arith.constant 10 : index
    %1677 = memref.load %arg6[%c9_795, %c10_796] : memref<15x15xf32, #tpu.memory_space<smem>>
    %1678 = vector.broadcast %1677 : f32 to vector<8x128xf32>
    %1679 = arith.mulf %814, %1678 : vector<8x128xf32>
    %1680 = arith.addf %1676, %1679 : vector<8x128xf32>
    %c9_797 = arith.constant 9 : index
    %c11_798 = arith.constant 11 : index
    %1681 = memref.load %arg6[%c9_797, %c11_798] : memref<15x15xf32, #tpu.memory_space<smem>>
    %1682 = vector.broadcast %1681 : f32 to vector<8x128xf32>
    %1683 = arith.mulf %878, %1682 : vector<8x128xf32>
    %1684 = arith.addf %1680, %1683 : vector<8x128xf32>
    %c9_799 = arith.constant 9 : index
    %c12_800 = arith.constant 12 : index
    %1685 = memref.load %arg6[%c9_799, %c12_800] : memref<15x15xf32, #tpu.memory_space<smem>>
    %1686 = vector.broadcast %1685 : f32 to vector<8x128xf32>
    %1687 = arith.mulf %942, %1686 : vector<8x128xf32>
    %1688 = arith.addf %1684, %1687 : vector<8x128xf32>
    %c9_801 = arith.constant 9 : index
    %c13_802 = arith.constant 13 : index
    %1689 = memref.load %arg6[%c9_801, %c13_802] : memref<15x15xf32, #tpu.memory_space<smem>>
    %1690 = vector.broadcast %1689 : f32 to vector<8x128xf32>
    %1691 = arith.mulf %1006, %1690 : vector<8x128xf32>
    %1692 = arith.addf %1688, %1691 : vector<8x128xf32>
    %c9_803 = arith.constant 9 : index
    %c14_804 = arith.constant 14 : index
    %1693 = memref.load %arg6[%c9_803, %c14_804] : memref<15x15xf32, #tpu.memory_space<smem>>
    %1694 = vector.broadcast %1693 : f32 to vector<8x128xf32>
    %1695 = arith.mulf %1070, %1694 : vector<8x128xf32>
    %1696 = arith.addf %1692, %1695 : vector<8x128xf32>
    %c9_805 = arith.constant 9 : index
    %1697 = memref.load %arg7[%c9_805] : memref<15xf32, #tpu.memory_space<smem>>
    %1698 = vector.broadcast %1697 : f32 to vector<8x128xf32>
    %1699 = arith.addf %1696, %1698 : vector<8x128xf32>
    %1700 = math.tanh %1699 : vector<8x128xf32>
    %c10_806 = arith.constant 10 : index
    %c0_807 = arith.constant 0 : index
    %1701 = memref.load %arg6[%c10_806, %c0_807] : memref<15x15xf32, #tpu.memory_space<smem>>
    %1702 = vector.broadcast %1701 : f32 to vector<8x128xf32>
    %1703 = arith.mulf %174, %1702 : vector<8x128xf32>
    %c10_808 = arith.constant 10 : index
    %c1_809 = arith.constant 1 : index
    %1704 = memref.load %arg6[%c10_808, %c1_809] : memref<15x15xf32, #tpu.memory_space<smem>>
    %1705 = vector.broadcast %1704 : f32 to vector<8x128xf32>
    %1706 = arith.mulf %238, %1705 : vector<8x128xf32>
    %1707 = arith.addf %1703, %1706 : vector<8x128xf32>
    %c10_810 = arith.constant 10 : index
    %c2_811 = arith.constant 2 : index
    %1708 = memref.load %arg6[%c10_810, %c2_811] : memref<15x15xf32, #tpu.memory_space<smem>>
    %1709 = vector.broadcast %1708 : f32 to vector<8x128xf32>
    %1710 = arith.mulf %302, %1709 : vector<8x128xf32>
    %1711 = arith.addf %1707, %1710 : vector<8x128xf32>
    %c10_812 = arith.constant 10 : index
    %c3_813 = arith.constant 3 : index
    %1712 = memref.load %arg6[%c10_812, %c3_813] : memref<15x15xf32, #tpu.memory_space<smem>>
    %1713 = vector.broadcast %1712 : f32 to vector<8x128xf32>
    %1714 = arith.mulf %366, %1713 : vector<8x128xf32>
    %1715 = arith.addf %1711, %1714 : vector<8x128xf32>
    %c10_814 = arith.constant 10 : index
    %c4_815 = arith.constant 4 : index
    %1716 = memref.load %arg6[%c10_814, %c4_815] : memref<15x15xf32, #tpu.memory_space<smem>>
    %1717 = vector.broadcast %1716 : f32 to vector<8x128xf32>
    %1718 = arith.mulf %430, %1717 : vector<8x128xf32>
    %1719 = arith.addf %1715, %1718 : vector<8x128xf32>
    %c10_816 = arith.constant 10 : index
    %c5_817 = arith.constant 5 : index
    %1720 = memref.load %arg6[%c10_816, %c5_817] : memref<15x15xf32, #tpu.memory_space<smem>>
    %1721 = vector.broadcast %1720 : f32 to vector<8x128xf32>
    %1722 = arith.mulf %494, %1721 : vector<8x128xf32>
    %1723 = arith.addf %1719, %1722 : vector<8x128xf32>
    %c10_818 = arith.constant 10 : index
    %c6_819 = arith.constant 6 : index
    %1724 = memref.load %arg6[%c10_818, %c6_819] : memref<15x15xf32, #tpu.memory_space<smem>>
    %1725 = vector.broadcast %1724 : f32 to vector<8x128xf32>
    %1726 = arith.mulf %558, %1725 : vector<8x128xf32>
    %1727 = arith.addf %1723, %1726 : vector<8x128xf32>
    %c10_820 = arith.constant 10 : index
    %c7_821 = arith.constant 7 : index
    %1728 = memref.load %arg6[%c10_820, %c7_821] : memref<15x15xf32, #tpu.memory_space<smem>>
    %1729 = vector.broadcast %1728 : f32 to vector<8x128xf32>
    %1730 = arith.mulf %622, %1729 : vector<8x128xf32>
    %1731 = arith.addf %1727, %1730 : vector<8x128xf32>
    %c10_822 = arith.constant 10 : index
    %c8_823 = arith.constant 8 : index
    %1732 = memref.load %arg6[%c10_822, %c8_823] : memref<15x15xf32, #tpu.memory_space<smem>>
    %1733 = vector.broadcast %1732 : f32 to vector<8x128xf32>
    %1734 = arith.mulf %686, %1733 : vector<8x128xf32>
    %1735 = arith.addf %1731, %1734 : vector<8x128xf32>
    %c10_824 = arith.constant 10 : index
    %c9_825 = arith.constant 9 : index
    %1736 = memref.load %arg6[%c10_824, %c9_825] : memref<15x15xf32, #tpu.memory_space<smem>>
    %1737 = vector.broadcast %1736 : f32 to vector<8x128xf32>
    %1738 = arith.mulf %750, %1737 : vector<8x128xf32>
    %1739 = arith.addf %1735, %1738 : vector<8x128xf32>
    %c10_826 = arith.constant 10 : index
    %c10_827 = arith.constant 10 : index
    %1740 = memref.load %arg6[%c10_826, %c10_827] : memref<15x15xf32, #tpu.memory_space<smem>>
    %1741 = vector.broadcast %1740 : f32 to vector<8x128xf32>
    %1742 = arith.mulf %814, %1741 : vector<8x128xf32>
    %1743 = arith.addf %1739, %1742 : vector<8x128xf32>
    %c10_828 = arith.constant 10 : index
    %c11_829 = arith.constant 11 : index
    %1744 = memref.load %arg6[%c10_828, %c11_829] : memref<15x15xf32, #tpu.memory_space<smem>>
    %1745 = vector.broadcast %1744 : f32 to vector<8x128xf32>
    %1746 = arith.mulf %878, %1745 : vector<8x128xf32>
    %1747 = arith.addf %1743, %1746 : vector<8x128xf32>
    %c10_830 = arith.constant 10 : index
    %c12_831 = arith.constant 12 : index
    %1748 = memref.load %arg6[%c10_830, %c12_831] : memref<15x15xf32, #tpu.memory_space<smem>>
    %1749 = vector.broadcast %1748 : f32 to vector<8x128xf32>
    %1750 = arith.mulf %942, %1749 : vector<8x128xf32>
    %1751 = arith.addf %1747, %1750 : vector<8x128xf32>
    %c10_832 = arith.constant 10 : index
    %c13_833 = arith.constant 13 : index
    %1752 = memref.load %arg6[%c10_832, %c13_833] : memref<15x15xf32, #tpu.memory_space<smem>>
    %1753 = vector.broadcast %1752 : f32 to vector<8x128xf32>
    %1754 = arith.mulf %1006, %1753 : vector<8x128xf32>
    %1755 = arith.addf %1751, %1754 : vector<8x128xf32>
    %c10_834 = arith.constant 10 : index
    %c14_835 = arith.constant 14 : index
    %1756 = memref.load %arg6[%c10_834, %c14_835] : memref<15x15xf32, #tpu.memory_space<smem>>
    %1757 = vector.broadcast %1756 : f32 to vector<8x128xf32>
    %1758 = arith.mulf %1070, %1757 : vector<8x128xf32>
    %1759 = arith.addf %1755, %1758 : vector<8x128xf32>
    %c10_836 = arith.constant 10 : index
    %1760 = memref.load %arg7[%c10_836] : memref<15xf32, #tpu.memory_space<smem>>
    %1761 = vector.broadcast %1760 : f32 to vector<8x128xf32>
    %1762 = arith.addf %1759, %1761 : vector<8x128xf32>
    %1763 = math.tanh %1762 : vector<8x128xf32>
    %c11_837 = arith.constant 11 : index
    %c0_838 = arith.constant 0 : index
    %1764 = memref.load %arg6[%c11_837, %c0_838] : memref<15x15xf32, #tpu.memory_space<smem>>
    %1765 = vector.broadcast %1764 : f32 to vector<8x128xf32>
    %1766 = arith.mulf %174, %1765 : vector<8x128xf32>
    %c11_839 = arith.constant 11 : index
    %c1_840 = arith.constant 1 : index
    %1767 = memref.load %arg6[%c11_839, %c1_840] : memref<15x15xf32, #tpu.memory_space<smem>>
    %1768 = vector.broadcast %1767 : f32 to vector<8x128xf32>
    %1769 = arith.mulf %238, %1768 : vector<8x128xf32>
    %1770 = arith.addf %1766, %1769 : vector<8x128xf32>
    %c11_841 = arith.constant 11 : index
    %c2_842 = arith.constant 2 : index
    %1771 = memref.load %arg6[%c11_841, %c2_842] : memref<15x15xf32, #tpu.memory_space<smem>>
    %1772 = vector.broadcast %1771 : f32 to vector<8x128xf32>
    %1773 = arith.mulf %302, %1772 : vector<8x128xf32>
    %1774 = arith.addf %1770, %1773 : vector<8x128xf32>
    %c11_843 = arith.constant 11 : index
    %c3_844 = arith.constant 3 : index
    %1775 = memref.load %arg6[%c11_843, %c3_844] : memref<15x15xf32, #tpu.memory_space<smem>>
    %1776 = vector.broadcast %1775 : f32 to vector<8x128xf32>
    %1777 = arith.mulf %366, %1776 : vector<8x128xf32>
    %1778 = arith.addf %1774, %1777 : vector<8x128xf32>
    %c11_845 = arith.constant 11 : index
    %c4_846 = arith.constant 4 : index
    %1779 = memref.load %arg6[%c11_845, %c4_846] : memref<15x15xf32, #tpu.memory_space<smem>>
    %1780 = vector.broadcast %1779 : f32 to vector<8x128xf32>
    %1781 = arith.mulf %430, %1780 : vector<8x128xf32>
    %1782 = arith.addf %1778, %1781 : vector<8x128xf32>
    %c11_847 = arith.constant 11 : index
    %c5_848 = arith.constant 5 : index
    %1783 = memref.load %arg6[%c11_847, %c5_848] : memref<15x15xf32, #tpu.memory_space<smem>>
    %1784 = vector.broadcast %1783 : f32 to vector<8x128xf32>
    %1785 = arith.mulf %494, %1784 : vector<8x128xf32>
    %1786 = arith.addf %1782, %1785 : vector<8x128xf32>
    %c11_849 = arith.constant 11 : index
    %c6_850 = arith.constant 6 : index
    %1787 = memref.load %arg6[%c11_849, %c6_850] : memref<15x15xf32, #tpu.memory_space<smem>>
    %1788 = vector.broadcast %1787 : f32 to vector<8x128xf32>
    %1789 = arith.mulf %558, %1788 : vector<8x128xf32>
    %1790 = arith.addf %1786, %1789 : vector<8x128xf32>
    %c11_851 = arith.constant 11 : index
    %c7_852 = arith.constant 7 : index
    %1791 = memref.load %arg6[%c11_851, %c7_852] : memref<15x15xf32, #tpu.memory_space<smem>>
    %1792 = vector.broadcast %1791 : f32 to vector<8x128xf32>
    %1793 = arith.mulf %622, %1792 : vector<8x128xf32>
    %1794 = arith.addf %1790, %1793 : vector<8x128xf32>
    %c11_853 = arith.constant 11 : index
    %c8_854 = arith.constant 8 : index
    %1795 = memref.load %arg6[%c11_853, %c8_854] : memref<15x15xf32, #tpu.memory_space<smem>>
    %1796 = vector.broadcast %1795 : f32 to vector<8x128xf32>
    %1797 = arith.mulf %686, %1796 : vector<8x128xf32>
    %1798 = arith.addf %1794, %1797 : vector<8x128xf32>
    %c11_855 = arith.constant 11 : index
    %c9_856 = arith.constant 9 : index
    %1799 = memref.load %arg6[%c11_855, %c9_856] : memref<15x15xf32, #tpu.memory_space<smem>>
    %1800 = vector.broadcast %1799 : f32 to vector<8x128xf32>
    %1801 = arith.mulf %750, %1800 : vector<8x128xf32>
    %1802 = arith.addf %1798, %1801 : vector<8x128xf32>
    %c11_857 = arith.constant 11 : index
    %c10_858 = arith.constant 10 : index
    %1803 = memref.load %arg6[%c11_857, %c10_858] : memref<15x15xf32, #tpu.memory_space<smem>>
    %1804 = vector.broadcast %1803 : f32 to vector<8x128xf32>
    %1805 = arith.mulf %814, %1804 : vector<8x128xf32>
    %1806 = arith.addf %1802, %1805 : vector<8x128xf32>
    %c11_859 = arith.constant 11 : index
    %c11_860 = arith.constant 11 : index
    %1807 = memref.load %arg6[%c11_859, %c11_860] : memref<15x15xf32, #tpu.memory_space<smem>>
    %1808 = vector.broadcast %1807 : f32 to vector<8x128xf32>
    %1809 = arith.mulf %878, %1808 : vector<8x128xf32>
    %1810 = arith.addf %1806, %1809 : vector<8x128xf32>
    %c11_861 = arith.constant 11 : index
    %c12_862 = arith.constant 12 : index
    %1811 = memref.load %arg6[%c11_861, %c12_862] : memref<15x15xf32, #tpu.memory_space<smem>>
    %1812 = vector.broadcast %1811 : f32 to vector<8x128xf32>
    %1813 = arith.mulf %942, %1812 : vector<8x128xf32>
    %1814 = arith.addf %1810, %1813 : vector<8x128xf32>
    %c11_863 = arith.constant 11 : index
    %c13_864 = arith.constant 13 : index
    %1815 = memref.load %arg6[%c11_863, %c13_864] : memref<15x15xf32, #tpu.memory_space<smem>>
    %1816 = vector.broadcast %1815 : f32 to vector<8x128xf32>
    %1817 = arith.mulf %1006, %1816 : vector<8x128xf32>
    %1818 = arith.addf %1814, %1817 : vector<8x128xf32>
    %c11_865 = arith.constant 11 : index
    %c14_866 = arith.constant 14 : index
    %1819 = memref.load %arg6[%c11_865, %c14_866] : memref<15x15xf32, #tpu.memory_space<smem>>
    %1820 = vector.broadcast %1819 : f32 to vector<8x128xf32>
    %1821 = arith.mulf %1070, %1820 : vector<8x128xf32>
    %1822 = arith.addf %1818, %1821 : vector<8x128xf32>
    %c11_867 = arith.constant 11 : index
    %1823 = memref.load %arg7[%c11_867] : memref<15xf32, #tpu.memory_space<smem>>
    %1824 = vector.broadcast %1823 : f32 to vector<8x128xf32>
    %1825 = arith.addf %1822, %1824 : vector<8x128xf32>
    %1826 = math.tanh %1825 : vector<8x128xf32>
    %c12_868 = arith.constant 12 : index
    %c0_869 = arith.constant 0 : index
    %1827 = memref.load %arg6[%c12_868, %c0_869] : memref<15x15xf32, #tpu.memory_space<smem>>
    %1828 = vector.broadcast %1827 : f32 to vector<8x128xf32>
    %1829 = arith.mulf %174, %1828 : vector<8x128xf32>
    %c12_870 = arith.constant 12 : index
    %c1_871 = arith.constant 1 : index
    %1830 = memref.load %arg6[%c12_870, %c1_871] : memref<15x15xf32, #tpu.memory_space<smem>>
    %1831 = vector.broadcast %1830 : f32 to vector<8x128xf32>
    %1832 = arith.mulf %238, %1831 : vector<8x128xf32>
    %1833 = arith.addf %1829, %1832 : vector<8x128xf32>
    %c12_872 = arith.constant 12 : index
    %c2_873 = arith.constant 2 : index
    %1834 = memref.load %arg6[%c12_872, %c2_873] : memref<15x15xf32, #tpu.memory_space<smem>>
    %1835 = vector.broadcast %1834 : f32 to vector<8x128xf32>
    %1836 = arith.mulf %302, %1835 : vector<8x128xf32>
    %1837 = arith.addf %1833, %1836 : vector<8x128xf32>
    %c12_874 = arith.constant 12 : index
    %c3_875 = arith.constant 3 : index
    %1838 = memref.load %arg6[%c12_874, %c3_875] : memref<15x15xf32, #tpu.memory_space<smem>>
    %1839 = vector.broadcast %1838 : f32 to vector<8x128xf32>
    %1840 = arith.mulf %366, %1839 : vector<8x128xf32>
    %1841 = arith.addf %1837, %1840 : vector<8x128xf32>
    %c12_876 = arith.constant 12 : index
    %c4_877 = arith.constant 4 : index
    %1842 = memref.load %arg6[%c12_876, %c4_877] : memref<15x15xf32, #tpu.memory_space<smem>>
    %1843 = vector.broadcast %1842 : f32 to vector<8x128xf32>
    %1844 = arith.mulf %430, %1843 : vector<8x128xf32>
    %1845 = arith.addf %1841, %1844 : vector<8x128xf32>
    %c12_878 = arith.constant 12 : index
    %c5_879 = arith.constant 5 : index
    %1846 = memref.load %arg6[%c12_878, %c5_879] : memref<15x15xf32, #tpu.memory_space<smem>>
    %1847 = vector.broadcast %1846 : f32 to vector<8x128xf32>
    %1848 = arith.mulf %494, %1847 : vector<8x128xf32>
    %1849 = arith.addf %1845, %1848 : vector<8x128xf32>
    %c12_880 = arith.constant 12 : index
    %c6_881 = arith.constant 6 : index
    %1850 = memref.load %arg6[%c12_880, %c6_881] : memref<15x15xf32, #tpu.memory_space<smem>>
    %1851 = vector.broadcast %1850 : f32 to vector<8x128xf32>
    %1852 = arith.mulf %558, %1851 : vector<8x128xf32>
    %1853 = arith.addf %1849, %1852 : vector<8x128xf32>
    %c12_882 = arith.constant 12 : index
    %c7_883 = arith.constant 7 : index
    %1854 = memref.load %arg6[%c12_882, %c7_883] : memref<15x15xf32, #tpu.memory_space<smem>>
    %1855 = vector.broadcast %1854 : f32 to vector<8x128xf32>
    %1856 = arith.mulf %622, %1855 : vector<8x128xf32>
    %1857 = arith.addf %1853, %1856 : vector<8x128xf32>
    %c12_884 = arith.constant 12 : index
    %c8_885 = arith.constant 8 : index
    %1858 = memref.load %arg6[%c12_884, %c8_885] : memref<15x15xf32, #tpu.memory_space<smem>>
    %1859 = vector.broadcast %1858 : f32 to vector<8x128xf32>
    %1860 = arith.mulf %686, %1859 : vector<8x128xf32>
    %1861 = arith.addf %1857, %1860 : vector<8x128xf32>
    %c12_886 = arith.constant 12 : index
    %c9_887 = arith.constant 9 : index
    %1862 = memref.load %arg6[%c12_886, %c9_887] : memref<15x15xf32, #tpu.memory_space<smem>>
    %1863 = vector.broadcast %1862 : f32 to vector<8x128xf32>
    %1864 = arith.mulf %750, %1863 : vector<8x128xf32>
    %1865 = arith.addf %1861, %1864 : vector<8x128xf32>
    %c12_888 = arith.constant 12 : index
    %c10_889 = arith.constant 10 : index
    %1866 = memref.load %arg6[%c12_888, %c10_889] : memref<15x15xf32, #tpu.memory_space<smem>>
    %1867 = vector.broadcast %1866 : f32 to vector<8x128xf32>
    %1868 = arith.mulf %814, %1867 : vector<8x128xf32>
    %1869 = arith.addf %1865, %1868 : vector<8x128xf32>
    %c12_890 = arith.constant 12 : index
    %c11_891 = arith.constant 11 : index
    %1870 = memref.load %arg6[%c12_890, %c11_891] : memref<15x15xf32, #tpu.memory_space<smem>>
    %1871 = vector.broadcast %1870 : f32 to vector<8x128xf32>
    %1872 = arith.mulf %878, %1871 : vector<8x128xf32>
    %1873 = arith.addf %1869, %1872 : vector<8x128xf32>
    %c12_892 = arith.constant 12 : index
    %c12_893 = arith.constant 12 : index
    %1874 = memref.load %arg6[%c12_892, %c12_893] : memref<15x15xf32, #tpu.memory_space<smem>>
    %1875 = vector.broadcast %1874 : f32 to vector<8x128xf32>
    %1876 = arith.mulf %942, %1875 : vector<8x128xf32>
    %1877 = arith.addf %1873, %1876 : vector<8x128xf32>
    %c12_894 = arith.constant 12 : index
    %c13_895 = arith.constant 13 : index
    %1878 = memref.load %arg6[%c12_894, %c13_895] : memref<15x15xf32, #tpu.memory_space<smem>>
    %1879 = vector.broadcast %1878 : f32 to vector<8x128xf32>
    %1880 = arith.mulf %1006, %1879 : vector<8x128xf32>
    %1881 = arith.addf %1877, %1880 : vector<8x128xf32>
    %c12_896 = arith.constant 12 : index
    %c14_897 = arith.constant 14 : index
    %1882 = memref.load %arg6[%c12_896, %c14_897] : memref<15x15xf32, #tpu.memory_space<smem>>
    %1883 = vector.broadcast %1882 : f32 to vector<8x128xf32>
    %1884 = arith.mulf %1070, %1883 : vector<8x128xf32>
    %1885 = arith.addf %1881, %1884 : vector<8x128xf32>
    %c12_898 = arith.constant 12 : index
    %1886 = memref.load %arg7[%c12_898] : memref<15xf32, #tpu.memory_space<smem>>
    %1887 = vector.broadcast %1886 : f32 to vector<8x128xf32>
    %1888 = arith.addf %1885, %1887 : vector<8x128xf32>
    %1889 = math.tanh %1888 : vector<8x128xf32>
    %c13_899 = arith.constant 13 : index
    %c0_900 = arith.constant 0 : index
    %1890 = memref.load %arg6[%c13_899, %c0_900] : memref<15x15xf32, #tpu.memory_space<smem>>
    %1891 = vector.broadcast %1890 : f32 to vector<8x128xf32>
    %1892 = arith.mulf %174, %1891 : vector<8x128xf32>
    %c13_901 = arith.constant 13 : index
    %c1_902 = arith.constant 1 : index
    %1893 = memref.load %arg6[%c13_901, %c1_902] : memref<15x15xf32, #tpu.memory_space<smem>>
    %1894 = vector.broadcast %1893 : f32 to vector<8x128xf32>
    %1895 = arith.mulf %238, %1894 : vector<8x128xf32>
    %1896 = arith.addf %1892, %1895 : vector<8x128xf32>
    %c13_903 = arith.constant 13 : index
    %c2_904 = arith.constant 2 : index
    %1897 = memref.load %arg6[%c13_903, %c2_904] : memref<15x15xf32, #tpu.memory_space<smem>>
    %1898 = vector.broadcast %1897 : f32 to vector<8x128xf32>
    %1899 = arith.mulf %302, %1898 : vector<8x128xf32>
    %1900 = arith.addf %1896, %1899 : vector<8x128xf32>
    %c13_905 = arith.constant 13 : index
    %c3_906 = arith.constant 3 : index
    %1901 = memref.load %arg6[%c13_905, %c3_906] : memref<15x15xf32, #tpu.memory_space<smem>>
    %1902 = vector.broadcast %1901 : f32 to vector<8x128xf32>
    %1903 = arith.mulf %366, %1902 : vector<8x128xf32>
    %1904 = arith.addf %1900, %1903 : vector<8x128xf32>
    %c13_907 = arith.constant 13 : index
    %c4_908 = arith.constant 4 : index
    %1905 = memref.load %arg6[%c13_907, %c4_908] : memref<15x15xf32, #tpu.memory_space<smem>>
    %1906 = vector.broadcast %1905 : f32 to vector<8x128xf32>
    %1907 = arith.mulf %430, %1906 : vector<8x128xf32>
    %1908 = arith.addf %1904, %1907 : vector<8x128xf32>
    %c13_909 = arith.constant 13 : index
    %c5_910 = arith.constant 5 : index
    %1909 = memref.load %arg6[%c13_909, %c5_910] : memref<15x15xf32, #tpu.memory_space<smem>>
    %1910 = vector.broadcast %1909 : f32 to vector<8x128xf32>
    %1911 = arith.mulf %494, %1910 : vector<8x128xf32>
    %1912 = arith.addf %1908, %1911 : vector<8x128xf32>
    %c13_911 = arith.constant 13 : index
    %c6_912 = arith.constant 6 : index
    %1913 = memref.load %arg6[%c13_911, %c6_912] : memref<15x15xf32, #tpu.memory_space<smem>>
    %1914 = vector.broadcast %1913 : f32 to vector<8x128xf32>
    %1915 = arith.mulf %558, %1914 : vector<8x128xf32>
    %1916 = arith.addf %1912, %1915 : vector<8x128xf32>
    %c13_913 = arith.constant 13 : index
    %c7_914 = arith.constant 7 : index
    %1917 = memref.load %arg6[%c13_913, %c7_914] : memref<15x15xf32, #tpu.memory_space<smem>>
    %1918 = vector.broadcast %1917 : f32 to vector<8x128xf32>
    %1919 = arith.mulf %622, %1918 : vector<8x128xf32>
    %1920 = arith.addf %1916, %1919 : vector<8x128xf32>
    %c13_915 = arith.constant 13 : index
    %c8_916 = arith.constant 8 : index
    %1921 = memref.load %arg6[%c13_915, %c8_916] : memref<15x15xf32, #tpu.memory_space<smem>>
    %1922 = vector.broadcast %1921 : f32 to vector<8x128xf32>
    %1923 = arith.mulf %686, %1922 : vector<8x128xf32>
    %1924 = arith.addf %1920, %1923 : vector<8x128xf32>
    %c13_917 = arith.constant 13 : index
    %c9_918 = arith.constant 9 : index
    %1925 = memref.load %arg6[%c13_917, %c9_918] : memref<15x15xf32, #tpu.memory_space<smem>>
    %1926 = vector.broadcast %1925 : f32 to vector<8x128xf32>
    %1927 = arith.mulf %750, %1926 : vector<8x128xf32>
    %1928 = arith.addf %1924, %1927 : vector<8x128xf32>
    %c13_919 = arith.constant 13 : index
    %c10_920 = arith.constant 10 : index
    %1929 = memref.load %arg6[%c13_919, %c10_920] : memref<15x15xf32, #tpu.memory_space<smem>>
    %1930 = vector.broadcast %1929 : f32 to vector<8x128xf32>
    %1931 = arith.mulf %814, %1930 : vector<8x128xf32>
    %1932 = arith.addf %1928, %1931 : vector<8x128xf32>
    %c13_921 = arith.constant 13 : index
    %c11_922 = arith.constant 11 : index
    %1933 = memref.load %arg6[%c13_921, %c11_922] : memref<15x15xf32, #tpu.memory_space<smem>>
    %1934 = vector.broadcast %1933 : f32 to vector<8x128xf32>
    %1935 = arith.mulf %878, %1934 : vector<8x128xf32>
    %1936 = arith.addf %1932, %1935 : vector<8x128xf32>
    %c13_923 = arith.constant 13 : index
    %c12_924 = arith.constant 12 : index
    %1937 = memref.load %arg6[%c13_923, %c12_924] : memref<15x15xf32, #tpu.memory_space<smem>>
    %1938 = vector.broadcast %1937 : f32 to vector<8x128xf32>
    %1939 = arith.mulf %942, %1938 : vector<8x128xf32>
    %1940 = arith.addf %1936, %1939 : vector<8x128xf32>
    %c13_925 = arith.constant 13 : index
    %c13_926 = arith.constant 13 : index
    %1941 = memref.load %arg6[%c13_925, %c13_926] : memref<15x15xf32, #tpu.memory_space<smem>>
    %1942 = vector.broadcast %1941 : f32 to vector<8x128xf32>
    %1943 = arith.mulf %1006, %1942 : vector<8x128xf32>
    %1944 = arith.addf %1940, %1943 : vector<8x128xf32>
    %c13_927 = arith.constant 13 : index
    %c14_928 = arith.constant 14 : index
    %1945 = memref.load %arg6[%c13_927, %c14_928] : memref<15x15xf32, #tpu.memory_space<smem>>
    %1946 = vector.broadcast %1945 : f32 to vector<8x128xf32>
    %1947 = arith.mulf %1070, %1946 : vector<8x128xf32>
    %1948 = arith.addf %1944, %1947 : vector<8x128xf32>
    %c13_929 = arith.constant 13 : index
    %1949 = memref.load %arg7[%c13_929] : memref<15xf32, #tpu.memory_space<smem>>
    %1950 = vector.broadcast %1949 : f32 to vector<8x128xf32>
    %1951 = arith.addf %1948, %1950 : vector<8x128xf32>
    %1952 = math.tanh %1951 : vector<8x128xf32>
    %c14_930 = arith.constant 14 : index
    %c0_931 = arith.constant 0 : index
    %1953 = memref.load %arg6[%c14_930, %c0_931] : memref<15x15xf32, #tpu.memory_space<smem>>
    %1954 = vector.broadcast %1953 : f32 to vector<8x128xf32>
    %1955 = arith.mulf %174, %1954 : vector<8x128xf32>
    %c14_932 = arith.constant 14 : index
    %c1_933 = arith.constant 1 : index
    %1956 = memref.load %arg6[%c14_932, %c1_933] : memref<15x15xf32, #tpu.memory_space<smem>>
    %1957 = vector.broadcast %1956 : f32 to vector<8x128xf32>
    %1958 = arith.mulf %238, %1957 : vector<8x128xf32>
    %1959 = arith.addf %1955, %1958 : vector<8x128xf32>
    %c14_934 = arith.constant 14 : index
    %c2_935 = arith.constant 2 : index
    %1960 = memref.load %arg6[%c14_934, %c2_935] : memref<15x15xf32, #tpu.memory_space<smem>>
    %1961 = vector.broadcast %1960 : f32 to vector<8x128xf32>
    %1962 = arith.mulf %302, %1961 : vector<8x128xf32>
    %1963 = arith.addf %1959, %1962 : vector<8x128xf32>
    %c14_936 = arith.constant 14 : index
    %c3_937 = arith.constant 3 : index
    %1964 = memref.load %arg6[%c14_936, %c3_937] : memref<15x15xf32, #tpu.memory_space<smem>>
    %1965 = vector.broadcast %1964 : f32 to vector<8x128xf32>
    %1966 = arith.mulf %366, %1965 : vector<8x128xf32>
    %1967 = arith.addf %1963, %1966 : vector<8x128xf32>
    %c14_938 = arith.constant 14 : index
    %c4_939 = arith.constant 4 : index
    %1968 = memref.load %arg6[%c14_938, %c4_939] : memref<15x15xf32, #tpu.memory_space<smem>>
    %1969 = vector.broadcast %1968 : f32 to vector<8x128xf32>
    %1970 = arith.mulf %430, %1969 : vector<8x128xf32>
    %1971 = arith.addf %1967, %1970 : vector<8x128xf32>
    %c14_940 = arith.constant 14 : index
    %c5_941 = arith.constant 5 : index
    %1972 = memref.load %arg6[%c14_940, %c5_941] : memref<15x15xf32, #tpu.memory_space<smem>>
    %1973 = vector.broadcast %1972 : f32 to vector<8x128xf32>
    %1974 = arith.mulf %494, %1973 : vector<8x128xf32>
    %1975 = arith.addf %1971, %1974 : vector<8x128xf32>
    %c14_942 = arith.constant 14 : index
    %c6_943 = arith.constant 6 : index
    %1976 = memref.load %arg6[%c14_942, %c6_943] : memref<15x15xf32, #tpu.memory_space<smem>>
    %1977 = vector.broadcast %1976 : f32 to vector<8x128xf32>
    %1978 = arith.mulf %558, %1977 : vector<8x128xf32>
    %1979 = arith.addf %1975, %1978 : vector<8x128xf32>
    %c14_944 = arith.constant 14 : index
    %c7_945 = arith.constant 7 : index
    %1980 = memref.load %arg6[%c14_944, %c7_945] : memref<15x15xf32, #tpu.memory_space<smem>>
    %1981 = vector.broadcast %1980 : f32 to vector<8x128xf32>
    %1982 = arith.mulf %622, %1981 : vector<8x128xf32>
    %1983 = arith.addf %1979, %1982 : vector<8x128xf32>
    %c14_946 = arith.constant 14 : index
    %c8_947 = arith.constant 8 : index
    %1984 = memref.load %arg6[%c14_946, %c8_947] : memref<15x15xf32, #tpu.memory_space<smem>>
    %1985 = vector.broadcast %1984 : f32 to vector<8x128xf32>
    %1986 = arith.mulf %686, %1985 : vector<8x128xf32>
    %1987 = arith.addf %1983, %1986 : vector<8x128xf32>
    %c14_948 = arith.constant 14 : index
    %c9_949 = arith.constant 9 : index
    %1988 = memref.load %arg6[%c14_948, %c9_949] : memref<15x15xf32, #tpu.memory_space<smem>>
    %1989 = vector.broadcast %1988 : f32 to vector<8x128xf32>
    %1990 = arith.mulf %750, %1989 : vector<8x128xf32>
    %1991 = arith.addf %1987, %1990 : vector<8x128xf32>
    %c14_950 = arith.constant 14 : index
    %c10_951 = arith.constant 10 : index
    %1992 = memref.load %arg6[%c14_950, %c10_951] : memref<15x15xf32, #tpu.memory_space<smem>>
    %1993 = vector.broadcast %1992 : f32 to vector<8x128xf32>
    %1994 = arith.mulf %814, %1993 : vector<8x128xf32>
    %1995 = arith.addf %1991, %1994 : vector<8x128xf32>
    %c14_952 = arith.constant 14 : index
    %c11_953 = arith.constant 11 : index
    %1996 = memref.load %arg6[%c14_952, %c11_953] : memref<15x15xf32, #tpu.memory_space<smem>>
    %1997 = vector.broadcast %1996 : f32 to vector<8x128xf32>
    %1998 = arith.mulf %878, %1997 : vector<8x128xf32>
    %1999 = arith.addf %1995, %1998 : vector<8x128xf32>
    %c14_954 = arith.constant 14 : index
    %c12_955 = arith.constant 12 : index
    %2000 = memref.load %arg6[%c14_954, %c12_955] : memref<15x15xf32, #tpu.memory_space<smem>>
    %2001 = vector.broadcast %2000 : f32 to vector<8x128xf32>
    %2002 = arith.mulf %942, %2001 : vector<8x128xf32>
    %2003 = arith.addf %1999, %2002 : vector<8x128xf32>
    %c14_956 = arith.constant 14 : index
    %c13_957 = arith.constant 13 : index
    %2004 = memref.load %arg6[%c14_956, %c13_957] : memref<15x15xf32, #tpu.memory_space<smem>>
    %2005 = vector.broadcast %2004 : f32 to vector<8x128xf32>
    %2006 = arith.mulf %1006, %2005 : vector<8x128xf32>
    %2007 = arith.addf %2003, %2006 : vector<8x128xf32>
    %c14_958 = arith.constant 14 : index
    %c14_959 = arith.constant 14 : index
    %2008 = memref.load %arg6[%c14_958, %c14_959] : memref<15x15xf32, #tpu.memory_space<smem>>
    %2009 = vector.broadcast %2008 : f32 to vector<8x128xf32>
    %2010 = arith.mulf %1070, %2009 : vector<8x128xf32>
    %2011 = arith.addf %2007, %2010 : vector<8x128xf32>
    %c14_960 = arith.constant 14 : index
    %2012 = memref.load %arg7[%c14_960] : memref<15xf32, #tpu.memory_space<smem>>
    %2013 = vector.broadcast %2012 : f32 to vector<8x128xf32>
    %2014 = arith.addf %2011, %2013 : vector<8x128xf32>
    %2015 = math.tanh %2014 : vector<8x128xf32>
    %c0_961 = arith.constant 0 : index
    %2016 = memref.load %arg8[%c0_961] : memref<15xf32, #tpu.memory_space<smem>>
    %2017 = vector.broadcast %2016 : f32 to vector<8x128xf32>
    %2018 = arith.mulf %1133, %2017 : vector<8x128xf32>
    %c1_962 = arith.constant 1 : index
    %2019 = memref.load %arg8[%c1_962] : memref<15xf32, #tpu.memory_space<smem>>
    %2020 = vector.broadcast %2019 : f32 to vector<8x128xf32>
    %2021 = arith.mulf %1196, %2020 : vector<8x128xf32>
    %2022 = arith.addf %2018, %2021 : vector<8x128xf32>
    %c2_963 = arith.constant 2 : index
    %2023 = memref.load %arg8[%c2_963] : memref<15xf32, #tpu.memory_space<smem>>
    %2024 = vector.broadcast %2023 : f32 to vector<8x128xf32>
    %2025 = arith.mulf %1259, %2024 : vector<8x128xf32>
    %2026 = arith.addf %2022, %2025 : vector<8x128xf32>
    %c3_964 = arith.constant 3 : index
    %2027 = memref.load %arg8[%c3_964] : memref<15xf32, #tpu.memory_space<smem>>
    %2028 = vector.broadcast %2027 : f32 to vector<8x128xf32>
    %2029 = arith.mulf %1322, %2028 : vector<8x128xf32>
    %2030 = arith.addf %2026, %2029 : vector<8x128xf32>
    %c4_965 = arith.constant 4 : index
    %2031 = memref.load %arg8[%c4_965] : memref<15xf32, #tpu.memory_space<smem>>
    %2032 = vector.broadcast %2031 : f32 to vector<8x128xf32>
    %2033 = arith.mulf %1385, %2032 : vector<8x128xf32>
    %2034 = arith.addf %2030, %2033 : vector<8x128xf32>
    %c5_966 = arith.constant 5 : index
    %2035 = memref.load %arg8[%c5_966] : memref<15xf32, #tpu.memory_space<smem>>
    %2036 = vector.broadcast %2035 : f32 to vector<8x128xf32>
    %2037 = arith.mulf %1448, %2036 : vector<8x128xf32>
    %2038 = arith.addf %2034, %2037 : vector<8x128xf32>
    %c6_967 = arith.constant 6 : index
    %2039 = memref.load %arg8[%c6_967] : memref<15xf32, #tpu.memory_space<smem>>
    %2040 = vector.broadcast %2039 : f32 to vector<8x128xf32>
    %2041 = arith.mulf %1511, %2040 : vector<8x128xf32>
    %2042 = arith.addf %2038, %2041 : vector<8x128xf32>
    %c7_968 = arith.constant 7 : index
    %2043 = memref.load %arg8[%c7_968] : memref<15xf32, #tpu.memory_space<smem>>
    %2044 = vector.broadcast %2043 : f32 to vector<8x128xf32>
    %2045 = arith.mulf %1574, %2044 : vector<8x128xf32>
    %2046 = arith.addf %2042, %2045 : vector<8x128xf32>
    %c8_969 = arith.constant 8 : index
    %2047 = memref.load %arg8[%c8_969] : memref<15xf32, #tpu.memory_space<smem>>
    %2048 = vector.broadcast %2047 : f32 to vector<8x128xf32>
    %2049 = arith.mulf %1637, %2048 : vector<8x128xf32>
    %2050 = arith.addf %2046, %2049 : vector<8x128xf32>
    %c9_970 = arith.constant 9 : index
    %2051 = memref.load %arg8[%c9_970] : memref<15xf32, #tpu.memory_space<smem>>
    %2052 = vector.broadcast %2051 : f32 to vector<8x128xf32>
    %2053 = arith.mulf %1700, %2052 : vector<8x128xf32>
    %2054 = arith.addf %2050, %2053 : vector<8x128xf32>
    %c10_971 = arith.constant 10 : index
    %2055 = memref.load %arg8[%c10_971] : memref<15xf32, #tpu.memory_space<smem>>
    %2056 = vector.broadcast %2055 : f32 to vector<8x128xf32>
    %2057 = arith.mulf %1763, %2056 : vector<8x128xf32>
    %2058 = arith.addf %2054, %2057 : vector<8x128xf32>
    %c11_972 = arith.constant 11 : index
    %2059 = memref.load %arg8[%c11_972] : memref<15xf32, #tpu.memory_space<smem>>
    %2060 = vector.broadcast %2059 : f32 to vector<8x128xf32>
    %2061 = arith.mulf %1826, %2060 : vector<8x128xf32>
    %2062 = arith.addf %2058, %2061 : vector<8x128xf32>
    %c12_973 = arith.constant 12 : index
    %2063 = memref.load %arg8[%c12_973] : memref<15xf32, #tpu.memory_space<smem>>
    %2064 = vector.broadcast %2063 : f32 to vector<8x128xf32>
    %2065 = arith.mulf %1889, %2064 : vector<8x128xf32>
    %2066 = arith.addf %2062, %2065 : vector<8x128xf32>
    %c13_974 = arith.constant 13 : index
    %2067 = memref.load %arg8[%c13_974] : memref<15xf32, #tpu.memory_space<smem>>
    %2068 = vector.broadcast %2067 : f32 to vector<8x128xf32>
    %2069 = arith.mulf %1952, %2068 : vector<8x128xf32>
    %2070 = arith.addf %2066, %2069 : vector<8x128xf32>
    %c14_975 = arith.constant 14 : index
    %2071 = memref.load %arg8[%c14_975] : memref<15xf32, #tpu.memory_space<smem>>
    %2072 = vector.broadcast %2071 : f32 to vector<8x128xf32>
    %2073 = arith.mulf %2015, %2072 : vector<8x128xf32>
    %2074 = arith.addf %2070, %2073 : vector<8x128xf32>
    %c0_976 = arith.constant 0 : index
    %2075 = memref.load %arg9[%c0_976] : memref<1xf32, #tpu.memory_space<smem>>
    %2076 = vector.broadcast %2075 : f32 to vector<8x128xf32>
    %2077 = arith.addf %2074, %2076 : vector<8x128xf32>
    %2078 = arith.index_cast %3 : i32 to index
    %c0_977 = arith.constant 0 : index
    %2079 = vector.load %arg10[%2078, %c0_977] : memref<8x128xf32, #tpu.memory_space<vmem>>, vector<8x128xf32>
    tpu.vector_store %arg10[%2078, %c0_977], %2077 {strides = array<i32>} : memref<8x128xf32, #tpu.memory_space<vmem>>, vector<8x128xf32>,
    %c1_i32_978 = arith.constant 1 : i32
    return
  }
  func.func @transform_0(%arg0: i32) -> (i32, i32) {
    %c0_i32 = arith.constant 0 : i32
    %c0_i32_0 = arith.constant 0 : i32
    return %arg0, %c0_i32 : i32, i32
  }
  func.func @transform_1(%arg0: i32) -> i32 {
    %c0_i32 = arith.constant 0 : i32
    %c0_i32_0 = arith.constant 0 : i32
    return %c0_i32 : i32
  }
  func.func @transform_2(%arg0: i32) -> i32 {
    %c0_i32 = arith.constant 0 : i32
    %c0_i32_0 = arith.constant 0 : i32
    return %c0_i32 : i32
  }
  func.func @transform_3(%arg0: i32) -> (i32, i32) {
    %c0_i32 = arith.constant 0 : i32
    %c0_i32_0 = arith.constant 0 : i32
    %c0_i32_1 = arith.constant 0 : i32
    return %c0_i32, %c0_i32_0 : i32, i32
  }
  func.func @transform_4(%arg0: i32) -> i32 {
    %c0_i32 = arith.constant 0 : i32
    %c0_i32_0 = arith.constant 0 : i32
    return %c0_i32 : i32
  }
  func.func @transform_5(%arg0: i32) -> (i32, i32) {
    %c0_i32 = arith.constant 0 : i32
    %c0_i32_0 = arith.constant 0 : i32
    %c0_i32_1 = arith.constant 0 : i32
    return %c0_i32, %c0_i32_0 : i32, i32
  }
  func.func @transform_6(%arg0: i32) -> i32 {
    %c0_i32 = arith.constant 0 : i32
    %c0_i32_0 = arith.constant 0 : i32
    return %c0_i32 : i32
  }
  func.func @transform_7(%arg0: i32) -> i32 {
    %c0_i32 = arith.constant 0 : i32
    %c0_i32_0 = arith.constant 0 : i32
    return %c0_i32 : i32
  }
  func.func @transform_8(%arg0: i32) -> i32 {
    %c0_i32 = arith.constant 0 : i32
    %c0_i32_0 = arith.constant 0 : i32
    return %c0_i32 : i32
  }
  func.func @transform_9(%arg0: i32) -> (i32, i32) {
    %c0_i32 = arith.constant 0 : i32
    %c0_i32_0 = arith.constant 0 : i32
    return %arg0, %c0_i32 : i32, i32
  }
}

</mosaic_0001>

<llo_original>
// kernel: net_hgr_forward.1
$region0: #{net_hgr_forward.1}
  #allocation0 [shape = 'u32[]', space=smem, size = 0x4, offset = 0x4, fixed_abs, tag = 'smem constant byte address 0x4 - core index']
  #allocation1 [shape = 'u32[144,128]{1,0:T(1,128)}', space=vmem, size = 0x12000, scoped, tag = 'internal scratch']
  #allocation2 [shape = 'f32[1]{0:T(128)S(6)}', space=smem, size = 0x200, scoped, tag = 'scoped memory for net_hgr_forward.1']
  %s0 = inlined_call_operand.vmem [shape: f32[8,128], index: 0, kind: input, shape index: {}]
  %s1 = inlined_call_operand.vmem [shape: f32[15], index: 1, kind: input, shape index: {}]
  %s2 = inlined_call_operand.vmem [shape: f32[15], index: 2, kind: input, shape index: {}]
  %s3 = inlined_call_operand.vmem [shape: f32[15,15], index: 3, kind: input, shape index: {}]
  %s4 = inlined_call_operand.vmem [shape: f32[15], index: 4, kind: input, shape index: {}]
  %s5 = inlined_call_operand.vmem [shape: f32[15,15], index: 5, kind: input, shape index: {}]
  %s6 = inlined_call_operand.hbm [shape: f32[15], index: 6, kind: input, shape index: {}]
  %s7 = inlined_call_operand.vmem [shape: f32[15], index: 7, kind: input, shape index: {}]
  %s8 = inlined_call_operand.<no memory space> [shape: f32[1], index: 8, kind: input, shape index: {}]
  %s9 = inlined_call_operand.vmem [shape: f32[8,128], index: 9, kind: output, shape index: {}]
  %s10 = sld [smem:[#allocation0]]
  $region74: #{net_hgr_forward.1} parent=0
    _
  %s12 = ssub.s32 1, %s10
  %s13 = scalar_select 0, %s12, %s10
  %14 = sst [smem:[#allocation2]] %s8
  $region1: #{net_hgr_forward.1} parent=0
    #allocation3 [shape = 'u8[512]{0}', space=smem, size = 0x200, scoped, tag = 'input window, operand 1, single buffered']
    #allocation4 [shape = 's32[1]{0}', space=sflag, size = 0x4, scoped, tag = 'scoped memory for net_hgr_forward.1']
    #allocation5 [shape = 's32[1]{0}', space=sflag, size = 0x4, scoped, tag = 'scoped memory for net_hgr_forward.1']
    #allocation6 [shape = 'u8[512]{0}', space=smem, size = 0x200, scoped, tag = 'input window, operand 2, single buffered']
    #allocation7 [shape = 's32[1]{0}', space=sflag, size = 0x4, scoped, tag = 'scoped memory for net_hgr_forward.1']
    #allocation8 [shape = 'u8[8192]{0}', space=smem, size = 0x2000, scoped, tag = 'input window, operand 3, single buffered']
    #allocation9 [shape = 'u8[512]{0}', space=smem, size = 0x200, scoped, tag = 'input window, operand 4, single buffered']
    #allocation10 [shape = 's32[1]{0}', space=sflag, size = 0x4, scoped, tag = 'scoped memory for net_hgr_forward.1']
    #allocation11 [shape = 'u8[8192]{0}', space=smem, size = 0x2000, scoped, tag = 'input window, operand 5, single buffered']
    #allocation12 [shape = 'u8[512]{0}', space=smem, size = 0x200, scoped, tag = 'input window, operand 6, single buffered']
    #allocation13 [shape = 'u8[512]{0}', space=smem, size = 0x200, scoped, tag = 'input window, operand 7, single buffered']
    #allocation14 [shape = 's32[1]{0}', space=sflag, size = 0x4, scoped, tag = 'scoped memory for net_hgr_forward.1']
    %15 = vsyncpa [#allocation5], 0
    %16 = vsyncpa [#allocation7], 0
    %17 = vsyncpa [#allocation10], 0
    %18 = vsyncpa [#allocation4], 0
    %19 = vsyncpa [#allocation14], 0
    // Predicated region
    $region2: #{net_hgr_forward.1} parent=1 // pred_check
      _
    $region3: #{net_hgr_forward.1} parent=1 // pred_check_branch
      %21 = sbr.rel (0) target = $region5
    $region4: #{net_hgr_forward.1} parent=1 // pred_region
      _
    $region5: #{net_hgr_forward.1} parent=1 // pred_fallthru
      _
    // Predicated region
    $region6: #{net_hgr_forward.1} parent=1 // pred_check
      _
    $region7: #{net_hgr_forward.1} parent=1 // pred_check_branch
      %23 = sbr.rel (0) target = $region9
    $region8: #{net_hgr_forward.1} parent=1 // pred_region
      %s25 = ssub.s32 16, 16
      %26 = vsyncadd [#allocation5], %s25
      %s28 = sshll.u32 %s1, 4
      %s29 = int_to_ptr.vmem [resolvable:$true] %s28
      %31 = dma.vmem_to_smem %s29, 16, [#allocation3], [#allocation5]
    $region9: #{net_hgr_forward.1} parent=1 // pred_fallthru
      _
    // Predicated region
    $region10: #{net_hgr_forward.1} parent=1 // pred_check
      _
    $region11: #{net_hgr_forward.1} parent=1 // pred_check_branch
      %33 = sbr.rel (0) target = $region13
    $region12: #{net_hgr_forward.1} parent=1 // pred_region
      %s35 = ssub.s32 16, 16
      %36 = vsyncadd [#allocation7], %s35
      %s38 = sshll.u32 %s2, 4
      %s39 = int_to_ptr.vmem [resolvable:$true] %s38
      %41 = dma.vmem_to_smem %s39, 16, [#allocation6], [#allocation7]
    $region13: #{net_hgr_forward.1} parent=1 // pred_fallthru
      _
    // Predicated region
    $region14: #{net_hgr_forward.1} parent=1 // pred_check
      _
    $region15: #{net_hgr_forward.1} parent=1 // pred_check_branch
      %43 = sbr.rel (0) target = $region17
    $region16: #{net_hgr_forward.1} parent=1 // pred_region
      %s45 = ssub.s32 256, 256
      %46 = vsyncadd [#allocation7], %s45
      %s47 = sshll.u32 %s3, 4
      %s48 = int_to_ptr.vmem [resolvable:$true] %s47
      %53 = dma.vmem_to_smem %s48, 256, [#allocation8], [#allocation7], 128, 128, 8
    $region17: #{net_hgr_forward.1} parent=1 // pred_fallthru
      _
    // Predicated region
    $region18: #{net_hgr_forward.1} parent=1 // pred_check
      _
    $region19: #{net_hgr_forward.1} parent=1 // pred_check_branch
      %55 = sbr.rel (0) target = $region21
    $region20: #{net_hgr_forward.1} parent=1 // pred_region
      %s57 = ssub.s32 16, 16
      %58 = vsyncadd [#allocation10], %s57
      %s60 = sshll.u32 %s4, 4
      %s61 = int_to_ptr.vmem [resolvable:$true] %s60
      %63 = dma.vmem_to_smem %s61, 16, [#allocation9], [#allocation10]
    $region21: #{net_hgr_forward.1} parent=1 // pred_fallthru
      _
    // Predicated region
    $region22: #{net_hgr_forward.1} parent=1 // pred_check
      _
    $region23: #{net_hgr_forward.1} parent=1 // pred_check_branch
      %65 = sbr.rel (0) target = $region25
    $region24: #{net_hgr_forward.1} parent=1 // pred_region
      %s67 = ssub.s32 256, 256
      %68 = vsyncadd [#allocation10], %s67
      %s69 = sshll.u32 %s5, 4
      %s70 = int_to_ptr.vmem [resolvable:$true] %s69
      %75 = dma.vmem_to_smem %s70, 256, [#allocation11], [#allocation10], 128, 128, 8
    $region25: #{net_hgr_forward.1} parent=1 // pred_fallthru
      _
    // Predicated region
    $region26: #{net_hgr_forward.1} parent=1 // pred_check
      _
    $region27: #{net_hgr_forward.1} parent=1 // pred_check_branch
      %77 = sbr.rel (0) target = $region29
    $region28: #{net_hgr_forward.1} parent=1 // pred_region
      %s79 = ssub.s32 16, 16
      %80 = vsyncadd [#allocation4], %s79
      %83 = dma.hbm_to_smem %s6, 16, [#allocation12], [#allocation4]
    $region29: #{net_hgr_forward.1} parent=1 // pred_fallthru
      _
    // Predicated region
    $region30: #{net_hgr_forward.1} parent=1 // pred_check
      _
    $region31: #{net_hgr_forward.1} parent=1 // pred_check_branch
      %85 = sbr.rel (0) target = $region33
    $region32: #{net_hgr_forward.1} parent=1 // pred_region
      %s87 = ssub.s32 16, 16
      %88 = vsyncadd [#allocation14], %s87
      %s90 = sshll.u32 %s7, 4
      %s91 = int_to_ptr.vmem [resolvable:$true] %s90
      %93 = dma.vmem_to_smem %s91, 16, [#allocation13], [#allocation14]
    $region33: #{net_hgr_forward.1} parent=1 // pred_fallthru
      _
    // Predicated region
    $region34: #{net_hgr_forward.1} parent=1 // pred_check
      _
    $region35: #{net_hgr_forward.1} parent=1 // pred_check_branch
      %95 = sbr.rel (0) target = $region37
    $region36: #{net_hgr_forward.1} parent=1 // pred_region
      _
    $region37: #{net_hgr_forward.1} parent=1 // pred_fallthru
      _
    // Predicated region
    $region38: #{net_hgr_forward.1} parent=1 // pred_check
      _
    $region39: #{net_hgr_forward.1} parent=1 // pred_check_branch
      %97 = sbr.rel (0) target = $region41
    $region40: #{net_hgr_forward.1} parent=1 // pred_region
      %98 = dma.done [#allocation5], 16
    $region41: #{net_hgr_forward.1} parent=1 // pred_fallthru
      _
    // Predicated region
    $region42: #{net_hgr_forward.1} parent=1 // pred_check
      _
    $region43: #{net_hgr_forward.1} parent=1 // pred_check_branch
      %100 = sbr.rel (0) target = $region45
    $region44: #{net_hgr_forward.1} parent=1 // pred_region
      %101 = dma.done [#allocation7], 16
    $region45: #{net_hgr_forward.1} parent=1 // pred_fallthru
      _
    // Predicated region
    $region46: #{net_hgr_forward.1} parent=1 // pred_check
      _
    $region47: #{net_hgr_forward.1} parent=1 // pred_check_branch
      %103 = sbr.rel (0) target = $region49
    $region48: #{net_hgr_forward.1} parent=1 // pred_region
      %104 = dma.done [#allocation7], 256
    $region49: #{net_hgr_forward.1} parent=1 // pred_fallthru
      _
    // Predicated region
    $region50: #{net_hgr_forward.1} parent=1 // pred_check
      _
    $region51: #{net_hgr_forward.1} parent=1 // pred_check_branch
      %106 = sbr.rel (0) target = $region53
    $region52: #{net_hgr_forward.1} parent=1 // pred_region
      %107 = dma.done [#allocation10], 16
    $region53: #{net_hgr_forward.1} parent=1 // pred_fallthru
      _
    // Predicated region
    $region54: #{net_hgr_forward.1} parent=1 // pred_check
      _
    $region55: #{net_hgr_forward.1} parent=1 // pred_check_branch
      %109 = sbr.rel (0) target = $region57
    $region56: #{net_hgr_forward.1} parent=1 // pred_region
      %110 = dma.done [#allocation10], 256
    $region57: #{net_hgr_forward.1} parent=1 // pred_fallthru
      _
    // Predicated region
    $region58: #{net_hgr_forward.1} parent=1 // pred_check
      _
    $region59: #{net_hgr_forward.1} parent=1 // pred_check_branch
      %112 = sbr.rel (0) target = $region61
    $region60: #{net_hgr_forward.1} parent=1 // pred_region
      %113 = dma.done [#allocation4], 16
    $region61: #{net_hgr_forward.1} parent=1 // pred_fallthru
      _
    // Predicated region
    $region62: #{net_hgr_forward.1} parent=1 // pred_check
      _
    $region63: #{net_hgr_forward.1} parent=1 // pred_check_branch
      %115 = sbr.rel (0) target = $region65
    $region64: #{net_hgr_forward.1} parent=1 // pred_region
      %116 = dma.done [#allocation14], 16
    $region65: #{net_hgr_forward.1} parent=1 // pred_fallthru
      _
    %117 = sfence
    %v118 = vld [vmem:[%s0] sm:$0xff]
    %s119 = sld [smem:[#allocation3]]
    %v120 = vstv %s119
    %v121 = vmul.f32 %v118, %v120
    %s122 = sld [smem:[#allocation6]]
    %v123 = vstv %s122
    %v124 = vadd.f32 %v121, %v123
    %v125 = vtanh.pop %v124
    %s126 = sld [smem:[#allocation3 + $0x1]]
    %v127 = vstv %s126
    %v128 = vmul.f32 %v118, %v127
    %s129 = sld [smem:[#allocation6 + $0x1]]
    %v130 = vstv %s129
    %v131 = vadd.f32 %v128, %v130
    %v132 = vtanh.pop %v131
    %s133 = sld [smem:[#allocation3 + $0x2]]
    %v134 = vstv %s133
    %v135 = vmul.f32 %v118, %v134
    %s136 = sld [smem:[#allocation6 + $0x2]]
    %v137 = vstv %s136
    %v138 = vadd.f32 %v135, %v137
    %v139 = vtanh.pop %v138
    %s140 = sld [smem:[#allocation3 + $0x3]]
    %v141 = vstv %s140
    %v142 = vmul.f32 %v118, %v141
    %s143 = sld [smem:[#allocation6 + $0x3]]
    %v144 = vstv %s143
    %v145 = vadd.f32 %v142, %v144
    %v146 = vtanh.pop %v145
    %s147 = sld [smem:[#allocation3 + $0x4]]
    %v148 = vstv %s147
    %v149 = vmul.f32 %v118, %v148
    %s150 = sld [smem:[#allocation6 + $0x4]]
    %v151 = vstv %s150
    %v152 = vadd.f32 %v149, %v151
    %v153 = vtanh.pop %v152
    %s154 = sld [smem:[#allocation3 + $0x5]]
    %v155 = vstv %s154
    %v156 = vmul.f32 %v118, %v155
    %s157 = sld [smem:[#allocation6 + $0x5]]
    %v158 = vstv %s157
    %v159 = vadd.f32 %v156, %v158
    %v160 = vtanh.pop %v159
    %s161 = sld [smem:[#allocation3 + $0x6]]
    %v162 = vstv %s161
    %v163 = vmul.f32 %v118, %v162
    %s164 = sld [smem:[#allocation6 + $0x6]]
    %v165 = vstv %s164
    %v166 = vadd.f32 %v163, %v165
    %v167 = vtanh.pop %v166
    %s168 = sld [smem:[#allocation3 + $0x7]]
    %v169 = vstv %s168
    %v170 = vmul.f32 %v118, %v169
    %s171 = sld [smem:[#allocation6 + $0x7]]
    %v172 = vstv %s171
    %v173 = vadd.f32 %v170, %v172
    %v174 = vtanh.pop %v173
    %s175 = sld [smem:[#allocation3 + $0x8]]
    %v176 = vstv %s175
    %v177 = vmul.f32 %v118, %v176
    %s178 = sld [smem:[#allocation6 + $0x8]]
    %v179 = vstv %s178
    %v180 = vadd.f32 %v177, %v179
    %v181 = vtanh.pop %v180
    %s182 = sld [smem:[#allocation3 + $0x9]]
    %v183 = vstv %s182
    %v184 = vmul.f32 %v118, %v183
    %s185 = sld [smem:[#allocation6 + $0x9]]
    %v186 = vstv %s185
    %v187 = vadd.f32 %v184, %v186
    %v188 = vtanh.pop %v187
    %s189 = sld [smem:[#allocation3 + $0xa]]
    %v190 = vstv %s189
    %v191 = vmul.f32 %v118, %v190
    %s192 = sld [smem:[#allocation6 + $0xa]]
    %v193 = vstv %s192
    %v194 = vadd.f32 %v191, %v193
    %v195 = vtanh.pop %v194
    %s196 = sld [smem:[#allocation3 + $0xb]]
    %v197 = vstv %s196
    %v198 = vmul.f32 %v118, %v197
    %s199 = sld [smem:[#allocation6 + $0xb]]
    %v200 = vstv %s199
    %v201 = vadd.f32 %v198, %v200
    %v202 = vtanh.pop %v201
    %s203 = sld [smem:[#allocation3 + $0xc]]
    %v204 = vstv %s203
    %v205 = vmul.f32 %v118, %v204
    %s206 = sld [smem:[#allocation6 + $0xc]]
    %v207 = vstv %s206
    %v208 = vadd.f32 %v205, %v207
    %v209 = vtanh.pop %v208
    %s210 = sld [smem:[#allocation3 + $0xd]]
    %v211 = vstv %s210
    %v212 = vmul.f32 %v118, %v211
    %s213 = sld [smem:[#allocation6 + $0xd]]
    %v214 = vstv %s213
    %v215 = vadd.f32 %v212, %v214
    %v216 = vtanh.pop %v215
    %s217 = sld [smem:[#allocation3 + $0xe]]
    %v218 = vstv %s217
    %v219 = vmul.f32 %v118, %v218
    %s220 = sld [smem:[#allocation6 + $0xe]]
    %v221 = vstv %s220
    %v222 = vadd.f32 %v219, %v221
    %v223 = vtanh.pop %v222
    %s224 = sld [smem:[#allocation8]]
    %v225 = vstv %s224
    %v226 = vmul.f32 %v125, %v225
    %s227 = sld [smem:[#allocation8 + $0x1]]
    %v228 = vstv %s227
    %v229 = vmul.f32 %v132, %v228
    %v230 = vadd.f32 %v226, %v229
    %s231 = sld [smem:[#allocation8 + $0x2]]
    %v232 = vstv %s231
    %v233 = vmul.f32 %v139, %v232
    %v234 = vadd.f32 %v230, %v233
    %s235 = sld [smem:[#allocation8 + $0x3]]
    %v236 = vstv %s235
    %v237 = vmul.f32 %v146, %v236
    %v238 = vadd.f32 %v234, %v237
    %s239 = sld [smem:[#allocation8 + $0x4]]
    %v240 = vstv %s239
    %v241 = vmul.f32 %v153, %v240
    %v242 = vadd.f32 %v238, %v241
    %s243 = sld [smem:[#allocation8 + $0x5]]
    %v244 = vstv %s243
    %v245 = vmul.f32 %v160, %v244
    %v246 = vadd.f32 %v242, %v245
    %s247 = sld [smem:[#allocation8 + $0x6]]
    %v248 = vstv %s247
    %v249 = vmul.f32 %v167, %v248
    %v250 = vadd.f32 %v246, %v249
    %s251 = sld [smem:[#allocation8 + $0x7]]
    %v252 = vstv %s251
    %v253 = vmul.f32 %v174, %v252
    %v254 = vadd.f32 %v250, %v253
    %s255 = sld [smem:[#allocation8 + $0x8]]
    %v256 = vstv %s255
    %v257 = vmul.f32 %v181, %v256
    %v258 = vadd.f32 %v254, %v257
    %s259 = sld [smem:[#allocation8 + $0x9]]
    %v260 = vstv %s259
    %v261 = vmul.f32 %v188, %v260
    %v262 = vadd.f32 %v258, %v261
    %s263 = sld [smem:[#allocation8 + $0xa]]
    %v264 = vstv %s263
    %v265 = vmul.f32 %v195, %v264
    %v266 = vadd.f32 %v262, %v265
    %s267 = sld [smem:[#allocation8 + $0xb]]
    %v268 = vstv %s267
    %v269 = vmul.f32 %v202, %v268
    %v270 = vadd.f32 %v266, %v269
    %s271 = sld [smem:[#allocation8 + $0xc]]
    %v272 = vstv %s271
    %v273 = vmul.f32 %v209, %v272
    %v274 = vadd.f32 %v270, %v273
    %s275 = sld [smem:[#allocation8 + $0xd]]
    %v276 = vstv %s275
    %v277 = vmul.f32 %v216, %v276
    %v278 = vadd.f32 %v274, %v277
    %s279 = sld [smem:[#allocation8 + $0xe]]
    %v280 = vstv %s279
    %v281 = vmul.f32 %v223, %v280
    %v282 = vadd.f32 %v278, %v281
    %s283 = sld [smem:[#allocation9]]
    %v284 = vstv %s283
    %v285 = vadd.f32 %v282, %v284
    %v286 = vmax.f32 %v285, 0.0
    %s287 = sld [smem:[#allocation8 + $0x80]]
    %v288 = vstv %s287
    %v289 = vmul.f32 %v125, %v288
    %s290 = sld [smem:[#allocation8 + $0x81]]
    %v291 = vstv %s290
    %v292 = vmul.f32 %v132, %v291
    %v293 = vadd.f32 %v289, %v292
    %s294 = sld [smem:[#allocation8 + $0x82]]
    %v295 = vstv %s294
    %v296 = vmul.f32 %v139, %v295
    %v297 = vadd.f32 %v293, %v296
    %s298 = sld [smem:[#allocation8 + $0x83]]
    %v299 = vstv %s298
    %v300 = vmul.f32 %v146, %v299
    %v301 = vadd.f32 %v297, %v300
    %s302 = sld [smem:[#allocation8 + $0x84]]
    %v303 = vstv %s302
    %v304 = vmul.f32 %v153, %v303
    %v305 = vadd.f32 %v301, %v304
    %s306 = sld [smem:[#allocation8 + $0x85]]
    %v307 = vstv %s306
    %v308 = vmul.f32 %v160, %v307
    %v309 = vadd.f32 %v305, %v308
    %s310 = sld [smem:[#allocation8 + $0x86]]
    %v311 = vstv %s310
    %v312 = vmul.f32 %v167, %v311
    %v313 = vadd.f32 %v309, %v312
    %s314 = sld [smem:[#allocation8 + $0x87]]
    %v315 = vstv %s314
    %v316 = vmul.f32 %v174, %v315
    %v317 = vadd.f32 %v313, %v316
    %s318 = sld [smem:[#allocation8 + $0x88]]
    %v319 = vstv %s318
    %v320 = vmul.f32 %v181, %v319
    %v321 = vadd.f32 %v317, %v320
    %s322 = sld [smem:[#allocation8 + $0x89]]
    %v323 = vstv %s322
    %v324 = vmul.f32 %v188, %v323
    %v325 = vadd.f32 %v321, %v324
    %s326 = sld [smem:[#allocation8 + $0x8a]]
    %v327 = vstv %s326
    %v328 = vmul.f32 %v195, %v327
    %v329 = vadd.f32 %v325, %v328
    %s330 = sld [smem:[#allocation8 + $0x8b]]
    %v331 = vstv %s330
    %v332 = vmul.f32 %v202, %v331
    %v333 = vadd.f32 %v329, %v332
    %s334 = sld [smem:[#allocation8 + $0x8c]]
    %v335 = vstv %s334
    %v336 = vmul.f32 %v209, %v335
    %v337 = vadd.f32 %v333, %v336
    %s338 = sld [smem:[#allocation8 + $0x8d]]
    %v339 = vstv %s338
    %v340 = vmul.f32 %v216, %v339
    %v341 = vadd.f32 %v337, %v340
    %s342 = sld [smem:[#allocation8 + $0x8e]]
    %v343 = vstv %s342
    %v344 = vmul.f32 %v223, %v343
    %v345 = vadd.f32 %v341, %v344
    %s346 = sld [smem:[#allocation9 + $0x1]]
    %v347 = vstv %s346
    %v348 = vadd.f32 %v345, %v347
    %v349 = vmax.f32 %v348, 0.0
    %s350 = sld [smem:[#allocation8 + $0x100]]
    %v351 = vstv %s350
    %v352 = vmul.f32 %v125, %v351
    %s353 = sld [smem:[#allocation8 + $0x101]]
    %v354 = vstv %s353
    %v355 = vmul.f32 %v132, %v354
    %v356 = vadd.f32 %v352, %v355
    %s357 = sld [smem:[#allocation8 + $0x102]]
    %v358 = vstv %s357
    %v359 = vmul.f32 %v139, %v358
    %v360 = vadd.f32 %v356, %v359
    %s361 = sld [smem:[#allocation8 + $0x103]]
    %v362 = vstv %s361
    %v363 = vmul.f32 %v146, %v362
    %v364 = vadd.f32 %v360, %v363
    %s365 = sld [smem:[#allocation8 + $0x104]]
    %v366 = vstv %s365
    %v367 = vmul.f32 %v153, %v366
    %v368 = vadd.f32 %v364, %v367
    %s369 = sld [smem:[#allocation8 + $0x105]]
    %v370 = vstv %s369
    %v371 = vmul.f32 %v160, %v370
    %v372 = vadd.f32 %v368, %v371
    %s373 = sld [smem:[#allocation8 + $0x106]]
    %v374 = vstv %s373
    %v375 = vmul.f32 %v167, %v374
    %v376 = vadd.f32 %v372, %v375
    %s377 = sld [smem:[#allocation8 + $0x107]]
    %v378 = vstv %s377
    %v379 = vmul.f32 %v174, %v378
    %v380 = vadd.f32 %v376, %v379
    %s381 = sld [smem:[#allocation8 + $0x108]]
    %v382 = vstv %s381
    %v383 = vmul.f32 %v181, %v382
    %v384 = vadd.f32 %v380, %v383
    %s385 = sld [smem:[#allocation8 + $0x109]]
    %v386 = vstv %s385
    %v387 = vmul.f32 %v188, %v386
    %v388 = vadd.f32 %v384, %v387
    %s389 = sld [smem:[#allocation8 + $0x10a]]
    %v390 = vstv %s389
    %v391 = vmul.f32 %v195, %v390
    %v392 = vadd.f32 %v388, %v391
    %s393 = sld [smem:[#allocation8 + $0x10b]]
    %v394 = vstv %s393
    %v395 = vmul.f32 %v202, %v394
    %v396 = vadd.f32 %v392, %v395
    %s397 = sld [smem:[#allocation8 + $0x10c]]
    %v398 = vstv %s397
    %v399 = vmul.f32 %v209, %v398
    %v400 = vadd.f32 %v396, %v399
    %s401 = sld [smem:[#allocation8 + $0x10d]]
    %v402 = vstv %s401
    %v403 = vmul.f32 %v216, %v402
    %v404 = vadd.f32 %v400, %v403
    %s405 = sld [smem:[#allocation8 + $0x10e]]
    %v406 = vstv %s405
    %v407 = vmul.f32 %v223, %v406
    %v408 = vadd.f32 %v404, %v407
    %s409 = sld [smem:[#allocation9 + $0x2]]
    %v410 = vstv %s409
    %v411 = vadd.f32 %v408, %v410
    %v412 = vmax.f32 %v411, 0.0
    %s413 = sld [smem:[#allocation8 + $0x180]]
    %v414 = vstv %s413
    %v415 = vmul.f32 %v125, %v414
    %s416 = sld [smem:[#allocation8 + $0x181]]
    %v417 = vstv %s416
    %v418 = vmul.f32 %v132, %v417
    %v419 = vadd.f32 %v415, %v418
    %s420 = sld [smem:[#allocation8 + $0x182]]
    %v421 = vstv %s420
    %v422 = vmul.f32 %v139, %v421
    %v423 = vadd.f32 %v419, %v422
    %s424 = sld [smem:[#allocation8 + $0x183]]
    %v425 = vstv %s424
    %v426 = vmul.f32 %v146, %v425
    %v427 = vadd.f32 %v423, %v426
    %s428 = sld [smem:[#allocation8 + $0x184]]
    %v429 = vstv %s428
    %v430 = vmul.f32 %v153, %v429
    %v431 = vadd.f32 %v427, %v430
    %s432 = sld [smem:[#allocation8 + $0x185]]
    %v433 = vstv %s432
    %v434 = vmul.f32 %v160, %v433
    %v435 = vadd.f32 %v431, %v434
    %s436 = sld [smem:[#allocation8 + $0x186]]
    %v437 = vstv %s436
    %v438 = vmul.f32 %v167, %v437
    %v439 = vadd.f32 %v435, %v438
    %s440 = sld [smem:[#allocation8 + $0x187]]
    %v441 = vstv %s440
    %v442 = vmul.f32 %v174, %v441
    %v443 = vadd.f32 %v439, %v442
    %s444 = sld [smem:[#allocation8 + $0x188]]
    %v445 = vstv %s444
    %v446 = vmul.f32 %v181, %v445
    %v447 = vadd.f32 %v443, %v446
    %s448 = sld [smem:[#allocation8 + $0x189]]
    %v449 = vstv %s448
    %v450 = vmul.f32 %v188, %v449
    %v451 = vadd.f32 %v447, %v450
    %s452 = sld [smem:[#allocation8 + $0x18a]]
    %v453 = vstv %s452
    %v454 = vmul.f32 %v195, %v453
    %v455 = vadd.f32 %v451, %v454
    %s456 = sld [smem:[#allocation8 + $0x18b]]
    %v457 = vstv %s456
    %v458 = vmul.f32 %v202, %v457
    %v459 = vadd.f32 %v455, %v458
    %s460 = sld [smem:[#allocation8 + $0x18c]]
    %v461 = vstv %s460
    %v462 = vmul.f32 %v209, %v461
    %v463 = vadd.f32 %v459, %v462
    %s464 = sld [smem:[#allocation8 + $0x18d]]
    %v465 = vstv %s464
    %v466 = vmul.f32 %v216, %v465
    %v467 = vadd.f32 %v463, %v466
    %s468 = sld [smem:[#allocation8 + $0x18e]]
    %v469 = vstv %s468
    %v470 = vmul.f32 %v223, %v469
    %v471 = vadd.f32 %v467, %v470
    %s472 = sld [smem:[#allocation9 + $0x3]]
    %v473 = vstv %s472
    %v474 = vadd.f32 %v471, %v473
    %v475 = vmax.f32 %v474, 0.0
    %s476 = sld [smem:[#allocation8 + $0x200]]
    %v477 = vstv %s476
    %v478 = vmul.f32 %v125, %v477
    %s479 = sld [smem:[#allocation8 + $0x201]]
    %v480 = vstv %s479
    %v481 = vmul.f32 %v132, %v480
    %v482 = vadd.f32 %v478, %v481
    %s483 = sld [smem:[#allocation8 + $0x202]]
    %v484 = vstv %s483
    %v485 = vmul.f32 %v139, %v484
    %v486 = vadd.f32 %v482, %v485
    %s487 = sld [smem:[#allocation8 + $0x203]]
    %v488 = vstv %s487
    %v489 = vmul.f32 %v146, %v488
    %v490 = vadd.f32 %v486, %v489
    %s491 = sld [smem:[#allocation8 + $0x204]]
    %v492 = vstv %s491
    %v493 = vmul.f32 %v153, %v492
    %v494 = vadd.f32 %v490, %v493
    %s495 = sld [smem:[#allocation8 + $0x205]]
    %v496 = vstv %s495
    %v497 = vmul.f32 %v160, %v496
    %v498 = vadd.f32 %v494, %v497
    %s499 = sld [smem:[#allocation8 + $0x206]]
    %v500 = vstv %s499
    %v501 = vmul.f32 %v167, %v500
    %v502 = vadd.f32 %v498, %v501
    %s503 = sld [smem:[#allocation8 + $0x207]]
    %v504 = vstv %s503
    %v505 = vmul.f32 %v174, %v504
    %v506 = vadd.f32 %v502, %v505
    %s507 = sld [smem:[#allocation8 + $0x208]]
    %v508 = vstv %s507
    %v509 = vmul.f32 %v181, %v508
    %v510 = vadd.f32 %v506, %v509
    %s511 = sld [smem:[#allocation8 + $0x209]]
    %v512 = vstv %s511
    %v513 = vmul.f32 %v188, %v512
    %v514 = vadd.f32 %v510, %v513
    %s515 = sld [smem:[#allocation8 + $0x20a]]
    %v516 = vstv %s515
    %v517 = vmul.f32 %v195, %v516
    %v518 = vadd.f32 %v514, %v517
    %s519 = sld [smem:[#allocation8 + $0x20b]]
    %v520 = vstv %s519
    %v521 = vmul.f32 %v202, %v520
    %v522 = vadd.f32 %v518, %v521
    %s523 = sld [smem:[#allocation8 + $0x20c]]
    %v524 = vstv %s523
    %v525 = vmul.f32 %v209, %v524
    %v526 = vadd.f32 %v522, %v525
    %s527 = sld [smem:[#allocation8 + $0x20d]]
    %v528 = vstv %s527
    %v529 = vmul.f32 %v216, %v528
    %v530 = vadd.f32 %v526, %v529
    %s531 = sld [smem:[#allocation8 + $0x20e]]
    %v532 = vstv %s531
    %v533 = vmul.f32 %v223, %v532
    %v534 = vadd.f32 %v530, %v533
    %s535 = sld [smem:[#allocation9 + $0x4]]
    %v536 = vstv %s535
    %v537 = vadd.f32 %v534, %v536
    %v538 = vmax.f32 %v537, 0.0
    %s539 = sld [smem:[#allocation8 + $0x280]]
    %v540 = vstv %s539
    %v541 = vmul.f32 %v125, %v540
    %s542 = sld [smem:[#allocation8 + $0x281]]
    %v543 = vstv %s542
    %v544 = vmul.f32 %v132, %v543
    %v545 = vadd.f32 %v541, %v544
    %s546 = sld [smem:[#allocation8 + $0x282]]
    %v547 = vstv %s546
    %v548 = vmul.f32 %v139, %v547
    %v549 = vadd.f32 %v545, %v548
    %s550 = sld [smem:[#allocation8 + $0x283]]
    %v551 = vstv %s550
    %v552 = vmul.f32 %v146, %v551
    %v553 = vadd.f32 %v549, %v552
    %s554 = sld [smem:[#allocation8 + $0x284]]
    %v555 = vstv %s554
    %v556 = vmul.f32 %v153, %v555
    %v557 = vadd.f32 %v553, %v556
    %s558 = sld [smem:[#allocation8 + $0x285]]
    %v559 = vstv %s558
    %v560 = vmul.f32 %v160, %v559
    %v561 = vadd.f32 %v557, %v560
    %s562 = sld [smem:[#allocation8 + $0x286]]
    %v563 = vstv %s562
    %v564 = vmul.f32 %v167, %v563
    %v565 = vadd.f32 %v561, %v564
    %s566 = sld [smem:[#allocation8 + $0x287]]
    %v567 = vstv %s566
    %v568 = vmul.f32 %v174, %v567
    %v569 = vadd.f32 %v565, %v568
    %s570 = sld [smem:[#allocation8 + $0x288]]
    %v571 = vstv %s570
    %v572 = vmul.f32 %v181, %v571
    %v573 = vadd.f32 %v569, %v572
    %s574 = sld [smem:[#allocation8 + $0x289]]
    %v575 = vstv %s574
    %v576 = vmul.f32 %v188, %v575
    %v577 = vadd.f32 %v573, %v576
    %s578 = sld [smem:[#allocation8 + $0x28a]]
    %v579 = vstv %s578
    %v580 = vmul.f32 %v195, %v579
    %v581 = vadd.f32 %v577, %v580
    %s582 = sld [smem:[#allocation8 + $0x28b]]
    %v583 = vstv %s582
    %v584 = vmul.f32 %v202, %v583
    %v585 = vadd.f32 %v581, %v584
    %s586 = sld [smem:[#allocation8 + $0x28c]]
    %v587 = vstv %s586
    %v588 = vmul.f32 %v209, %v587
    %v589 = vadd.f32 %v585, %v588
    %s590 = sld [smem:[#allocation8 + $0x28d]]
    %v591 = vstv %s590
    %v592 = vmul.f32 %v216, %v591
    %v593 = vadd.f32 %v589, %v592
    %s594 = sld [smem:[#allocation8 + $0x28e]]
    %v595 = vstv %s594
    %v596 = vmul.f32 %v223, %v595
    %v597 = vadd.f32 %v593, %v596
    %s598 = sld [smem:[#allocation9 + $0x5]]
    %v599 = vstv %s598
    %v600 = vadd.f32 %v597, %v599
    %v601 = vmax.f32 %v600, 0.0
    %s602 = sld [smem:[#allocation8 + $0x300]]
    %v603 = vstv %s602
    %v604 = vmul.f32 %v125, %v603
    %s605 = sld [smem:[#allocation8 + $0x301]]
    %v606 = vstv %s605
    %v607 = vmul.f32 %v132, %v606
    %v608 = vadd.f32 %v604, %v607
    %s609 = sld [smem:[#allocation8 + $0x302]]
    %v610 = vstv %s609
    %v611 = vmul.f32 %v139, %v610
    %v612 = vadd.f32 %v608, %v611
    %s613 = sld [smem:[#allocation8 + $0x303]]
    %v614 = vstv %s613
    %v615 = vmul.f32 %v146, %v614
    %v616 = vadd.f32 %v612, %v615
    %s617 = sld [smem:[#allocation8 + $0x304]]
    %v618 = vstv %s617
    %v619 = vmul.f32 %v153, %v618
    %v620 = vadd.f32 %v616, %v619
    %s621 = sld [smem:[#allocation8 + $0x305]]
    %v622 = vstv %s621
    %v623 = vmul.f32 %v160, %v622
    %v624 = vadd.f32 %v620, %v623
    %s625 = sld [smem:[#allocation8 + $0x306]]
    %v626 = vstv %s625
    %v627 = vmul.f32 %v167, %v626
    %v628 = vadd.f32 %v624, %v627
    %s629 = sld [smem:[#allocation8 + $0x307]]
    %v630 = vstv %s629
    %v631 = vmul.f32 %v174, %v630
    %v632 = vadd.f32 %v628, %v631
    %s633 = sld [smem:[#allocation8 + $0x308]]
    %v634 = vstv %s633
    %v635 = vmul.f32 %v181, %v634
    %v636 = vadd.f32 %v632, %v635
    %s637 = sld [smem:[#allocation8 + $0x309]]
    %v638 = vstv %s637
    %v639 = vmul.f32 %v188, %v638
    %v640 = vadd.f32 %v636, %v639
    %s641 = sld [smem:[#allocation8 + $0x30a]]
    %v642 = vstv %s641
    %v643 = vmul.f32 %v195, %v642
    %v644 = vadd.f32 %v640, %v643
    %s645 = sld [smem:[#allocation8 + $0x30b]]
    %v646 = vstv %s645
    %v647 = vmul.f32 %v202, %v646
    %v648 = vadd.f32 %v644, %v647
    %s649 = sld [smem:[#allocation8 + $0x30c]]
    %v650 = vstv %s649
    %v651 = vmul.f32 %v209, %v650
    %v652 = vadd.f32 %v648, %v651
    %s653 = sld [smem:[#allocation8 + $0x30d]]
    %v654 = vstv %s653
    %v655 = vmul.f32 %v216, %v654
    %v656 = vadd.f32 %v652, %v655
    %s657 = sld [smem:[#allocation8 + $0x30e]]
    %v658 = vstv %s657
    %v659 = vmul.f32 %v223, %v658
    %v660 = vadd.f32 %v656, %v659
    %s661 = sld [smem:[#allocation9 + $0x6]]
    %v662 = vstv %s661
    %v663 = vadd.f32 %v660, %v662
    %v664 = vmax.f32 %v663, 0.0
    %s665 = sld [smem:[#allocation8 + $0x380]]
    %v666 = vstv %s665
    %v667 = vmul.f32 %v125, %v666
    %s668 = sld [smem:[#allocation8 + $0x381]]
    %v669 = vstv %s668
    %v670 = vmul.f32 %v132, %v669
    %v671 = vadd.f32 %v667, %v670
    %s672 = sld [smem:[#allocation8 + $0x382]]
    %v673 = vstv %s672
    %v674 = vmul.f32 %v139, %v673
    %v675 = vadd.f32 %v671, %v674
    %s676 = sld [smem:[#allocation8 + $0x383]]
    %v677 = vstv %s676
    %v678 = vmul.f32 %v146, %v677
    %v679 = vadd.f32 %v675, %v678
    %s680 = sld [smem:[#allocation8 + $0x384]]
    %v681 = vstv %s680
    %v682 = vmul.f32 %v153, %v681
    %v683 = vadd.f32 %v679, %v682
    %s684 = sld [smem:[#allocation8 + $0x385]]
    %v685 = vstv %s684
    %v686 = vmul.f32 %v160, %v685
    %v687 = vadd.f32 %v683, %v686
    %s688 = sld [smem:[#allocation8 + $0x386]]
    %v689 = vstv %s688
    %v690 = vmul.f32 %v167, %v689
    %v691 = vadd.f32 %v687, %v690
    %s692 = sld [smem:[#allocation8 + $0x387]]
    %v693 = vstv %s692
    %v694 = vmul.f32 %v174, %v693
    %v695 = vadd.f32 %v691, %v694
    %s696 = sld [smem:[#allocation8 + $0x388]]
    %v697 = vstv %s696
    %v698 = vmul.f32 %v181, %v697
    %v699 = vadd.f32 %v695, %v698
    %s700 = sld [smem:[#allocation8 + $0x389]]
    %v701 = vstv %s700
    %v702 = vmul.f32 %v188, %v701
    %v703 = vadd.f32 %v699, %v702
    %s704 = sld [smem:[#allocation8 + $0x38a]]
    %v705 = vstv %s704
    %v706 = vmul.f32 %v195, %v705
    %v707 = vadd.f32 %v703, %v706
    %s708 = sld [smem:[#allocation8 + $0x38b]]
    %v709 = vstv %s708
    %v710 = vmul.f32 %v202, %v709
    %v711 = vadd.f32 %v707, %v710
    %s712 = sld [smem:[#allocation8 + $0x38c]]
    %v713 = vstv %s712
    %v714 = vmul.f32 %v209, %v713
    %v715 = vadd.f32 %v711, %v714
    %s716 = sld [smem:[#allocation8 + $0x38d]]
    %v717 = vstv %s716
    %v718 = vmul.f32 %v216, %v717
    %v719 = vadd.f32 %v715, %v718
    %s720 = sld [smem:[#allocation8 + $0x38e]]
    %v721 = vstv %s720
    %v722 = vmul.f32 %v223, %v721
    %v723 = vadd.f32 %v719, %v722
    %s724 = sld [smem:[#allocation9 + $0x7]]
    %v725 = vstv %s724
    %v726 = vadd.f32 %v723, %v725
    %v727 = vmax.f32 %v726, 0.0
    %s728 = sld [smem:[#allocation8 + $0x400]]
    %v729 = vstv %s728
    %v730 = vmul.f32 %v125, %v729
    %s731 = sld [smem:[#allocation8 + $0x401]]
    %v732 = vstv %s731
    %v733 = vmul.f32 %v132, %v732
    %v734 = vadd.f32 %v730, %v733
    %s735 = sld [smem:[#allocation8 + $0x402]]
    %v736 = vstv %s735
    %v737 = vmul.f32 %v139, %v736
    %v738 = vadd.f32 %v734, %v737
    %s739 = sld [smem:[#allocation8 + $0x403]]
    %v740 = vstv %s739
    %v741 = vmul.f32 %v146, %v740
    %v742 = vadd.f32 %v738, %v741
    %s743 = sld [smem:[#allocation8 + $0x404]]
    %v744 = vstv %s743
    %v745 = vmul.f32 %v153, %v744
    %v746 = vadd.f32 %v742, %v745
    %s747 = sld [smem:[#allocation8 + $0x405]]
    %v748 = vstv %s747
    %v749 = vmul.f32 %v160, %v748
    %v750 = vadd.f32 %v746, %v749
    %s751 = sld [smem:[#allocation8 + $0x406]]
    %v752 = vstv %s751
    %v753 = vmul.f32 %v167, %v752
    %v754 = vadd.f32 %v750, %v753
    %s755 = sld [smem:[#allocation8 + $0x407]]
    %v756 = vstv %s755
    %v757 = vmul.f32 %v174, %v756
    %v758 = vadd.f32 %v754, %v757
    %s759 = sld [smem:[#allocation8 + $0x408]]
    %v760 = vstv %s759
    %v761 = vmul.f32 %v181, %v760
    %v762 = vadd.f32 %v758, %v761
    %s763 = sld [smem:[#allocation8 + $0x409]]
    %v764 = vstv %s763
    %v765 = vmul.f32 %v188, %v764
    %v766 = vadd.f32 %v762, %v765
    %s767 = sld [smem:[#allocation8 + $0x40a]]
    %v768 = vstv %s767
    %v769 = vmul.f32 %v195, %v768
    %v770 = vadd.f32 %v766, %v769
    %s771 = sld [smem:[#allocation8 + $0x40b]]
    %v772 = vstv %s771
    %v773 = vmul.f32 %v202, %v772
    %v774 = vadd.f32 %v770, %v773
    %s775 = sld [smem:[#allocation8 + $0x40c]]
    %v776 = vstv %s775
    %v777 = vmul.f32 %v209, %v776
    %v778 = vadd.f32 %v774, %v777
    %s779 = sld [smem:[#allocation8 + $0x40d]]
    %v780 = vstv %s779
    %v781 = vmul.f32 %v216, %v780
    %v782 = vadd.f32 %v778, %v781
    %s783 = sld [smem:[#allocation8 + $0x40e]]
    %v784 = vstv %s783
    %v785 = vmul.f32 %v223, %v784
    %v786 = vadd.f32 %v782, %v785
    %s787 = sld [smem:[#allocation9 + $0x8]]
    %v788 = vstv %s787
    %v789 = vadd.f32 %v786, %v788
    %v790 = vmax.f32 %v789, 0.0
    %s791 = sld [smem:[#allocation8 + $0x480]]
    %v792 = vstv %s791
    %v793 = vmul.f32 %v125, %v792
    %s794 = sld [smem:[#allocation8 + $0x481]]
    %v795 = vstv %s794
    %v796 = vmul.f32 %v132, %v795
    %v797 = vadd.f32 %v793, %v796
    %s798 = sld [smem:[#allocation8 + $0x482]]
    %v799 = vstv %s798
    %v800 = vmul.f32 %v139, %v799
    %v801 = vadd.f32 %v797, %v800
    %s802 = sld [smem:[#allocation8 + $0x483]]
    %v803 = vstv %s802
    %v804 = vmul.f32 %v146, %v803
    %v805 = vadd.f32 %v801, %v804
    %s806 = sld [smem:[#allocation8 + $0x484]]
    %v807 = vstv %s806
    %v808 = vmul.f32 %v153, %v807
    %v809 = vadd.f32 %v805, %v808
    %s810 = sld [smem:[#allocation8 + $0x485]]
    %v811 = vstv %s810
    %v812 = vmul.f32 %v160, %v811
    %v813 = vadd.f32 %v809, %v812
    %s814 = sld [smem:[#allocation8 + $0x486]]
    %v815 = vstv %s814
    %v816 = vmul.f32 %v167, %v815
    %v817 = vadd.f32 %v813, %v816
    %s818 = sld [smem:[#allocation8 + $0x487]]
    %v819 = vstv %s818
    %v820 = vmul.f32 %v174, %v819
    %v821 = vadd.f32 %v817, %v820
    %s822 = sld [smem:[#allocation8 + $0x488]]
    %v823 = vstv %s822
    %v824 = vmul.f32 %v181, %v823
    %v825 = vadd.f32 %v821, %v824
    %s826 = sld [smem:[#allocation8 + $0x489]]
    %v827 = vstv %s826
    %v828 = vmul.f32 %v188, %v827
    %v829 = vadd.f32 %v825, %v828
    %s830 = sld [smem:[#allocation8 + $0x48a]]
    %v831 = vstv %s830
    %v832 = vmul.f32 %v195, %v831
    %v833 = vadd.f32 %v829, %v832
    %s834 = sld [smem:[#allocation8 + $0x48b]]
    %v835 = vstv %s834
    %v836 = vmul.f32 %v202, %v835
    %v837 = vadd.f32 %v833, %v836
    %s838 = sld [smem:[#allocation8 + $0x48c]]
    %v839 = vstv %s838
    %v840 = vmul.f32 %v209, %v839
    %v841 = vadd.f32 %v837, %v840
    %s842 = sld [smem:[#allocation8 + $0x48d]]
    %v843 = vstv %s842
    %v844 = vmul.f32 %v216, %v843
    %v845 = vadd.f32 %v841, %v844
    %s846 = sld [smem:[#allocation8 + $0x48e]]
    %v847 = vstv %s846
    %v848 = vmul.f32 %v223, %v847
    %v849 = vadd.f32 %v845, %v848
    %s850 = sld [smem:[#allocation9 + $0x9]]
    %v851 = vstv %s850
    %v852 = vadd.f32 %v849, %v851
    %v853 = vmax.f32 %v852, 0.0
    %s854 = sld [smem:[#allocation8 + $0x500]]
    %v855 = vstv %s854
    %v856 = vmul.f32 %v125, %v855
    %s857 = sld [smem:[#allocation8 + $0x501]]
    %v858 = vstv %s857
    %v859 = vmul.f32 %v132, %v858
    %v860 = vadd.f32 %v856, %v859
    %s861 = sld [smem:[#allocation8 + $0x502]]
    %v862 = vstv %s861
    %v863 = vmul.f32 %v139, %v862
    %v864 = vadd.f32 %v860, %v863
    %s865 = sld [smem:[#allocation8 + $0x503]]
    %v866 = vstv %s865
    %v867 = vmul.f32 %v146, %v866
    %v868 = vadd.f32 %v864, %v867
    %s869 = sld [smem:[#allocation8 + $0x504]]
    %v870 = vstv %s869
    %v871 = vmul.f32 %v153, %v870
    %v872 = vadd.f32 %v868, %v871
    %s873 = sld [smem:[#allocation8 + $0x505]]
    %v874 = vstv %s873
    %v875 = vmul.f32 %v160, %v874
    %v876 = vadd.f32 %v872, %v875
    %s877 = sld [smem:[#allocation8 + $0x506]]
    %v878 = vstv %s877
    %v879 = vmul.f32 %v167, %v878
    %v880 = vadd.f32 %v876, %v879
    %s881 = sld [smem:[#allocation8 + $0x507]]
    %v882 = vstv %s881
    %v883 = vmul.f32 %v174, %v882
    %v884 = vadd.f32 %v880, %v883
    %s885 = sld [smem:[#allocation8 + $0x508]]
    %v886 = vstv %s885
    %v887 = vmul.f32 %v181, %v886
    %v888 = vadd.f32 %v884, %v887
    %s889 = sld [smem:[#allocation8 + $0x509]]
    %v890 = vstv %s889
    %v891 = vmul.f32 %v188, %v890
    %v892 = vadd.f32 %v888, %v891
    %s893 = sld [smem:[#allocation8 + $0x50a]]
    %v894 = vstv %s893
    %v895 = vmul.f32 %v195, %v894
    %v896 = vadd.f32 %v892, %v895
    %s897 = sld [smem:[#allocation8 + $0x50b]]
    %v898 = vstv %s897
    %v899 = vmul.f32 %v202, %v898
    %v900 = vadd.f32 %v896, %v899
    %s901 = sld [smem:[#allocation8 + $0x50c]]
    %v902 = vstv %s901
    %v903 = vmul.f32 %v209, %v902
    %v904 = vadd.f32 %v900, %v903
    %s905 = sld [smem:[#allocation8 + $0x50d]]
    %v906 = vstv %s905
    %v907 = vmul.f32 %v216, %v906
    %v908 = vadd.f32 %v904, %v907
    %s909 = sld [smem:[#allocation8 + $0x50e]]
    %v910 = vstv %s909
    %v911 = vmul.f32 %v223, %v910
    %v912 = vadd.f32 %v908, %v911
    %s913 = sld [smem:[#allocation9 + $0xa]]
    %v914 = vstv %s913
    %v915 = vadd.f32 %v912, %v914
    %v916 = vmax.f32 %v915, 0.0
    %s917 = sld [smem:[#allocation8 + $0x580]]
    %v918 = vstv %s917
    %v919 = vmul.f32 %v125, %v918
    %s920 = sld [smem:[#allocation8 + $0x581]]
    %v921 = vstv %s920
    %v922 = vmul.f32 %v132, %v921
    %v923 = vadd.f32 %v919, %v922
    %s924 = sld [smem:[#allocation8 + $0x582]]
    %v925 = vstv %s924
    %v926 = vmul.f32 %v139, %v925
    %v927 = vadd.f32 %v923, %v926
    %s928 = sld [smem:[#allocation8 + $0x583]]
    %v929 = vstv %s928
    %v930 = vmul.f32 %v146, %v929
    %v931 = vadd.f32 %v927, %v930
    %s932 = sld [smem:[#allocation8 + $0x584]]
    %v933 = vstv %s932
    %v934 = vmul.f32 %v153, %v933
    %v935 = vadd.f32 %v931, %v934
    %s936 = sld [smem:[#allocation8 + $0x585]]
    %v937 = vstv %s936
    %v938 = vmul.f32 %v160, %v937
    %v939 = vadd.f32 %v935, %v938
    %s940 = sld [smem:[#allocation8 + $0x586]]
    %v941 = vstv %s940
    %v942 = vmul.f32 %v167, %v941
    %v943 = vadd.f32 %v939, %v942
    %s944 = sld [smem:[#allocation8 + $0x587]]
    %v945 = vstv %s944
    %v946 = vmul.f32 %v174, %v945
    %v947 = vadd.f32 %v943, %v946
    %s948 = sld [smem:[#allocation8 + $0x588]]
    %v949 = vstv %s948
    %v950 = vmul.f32 %v181, %v949
    %v951 = vadd.f32 %v947, %v950
    %s952 = sld [smem:[#allocation8 + $0x589]]
    %v953 = vstv %s952
    %v954 = vmul.f32 %v188, %v953
    %v955 = vadd.f32 %v951, %v954
    %s956 = sld [smem:[#allocation8 + $0x58a]]
    %v957 = vstv %s956
    %v958 = vmul.f32 %v195, %v957
    %v959 = vadd.f32 %v955, %v958
    %s960 = sld [smem:[#allocation8 + $0x58b]]
    %v961 = vstv %s960
    %v962 = vmul.f32 %v202, %v961
    %v963 = vadd.f32 %v959, %v962
    %s964 = sld [smem:[#allocation8 + $0x58c]]
    %v965 = vstv %s964
    %v966 = vmul.f32 %v209, %v965
    %v967 = vadd.f32 %v963, %v966
    %s968 = sld [smem:[#allocation8 + $0x58d]]
    %v969 = vstv %s968
    %v970 = vmul.f32 %v216, %v969
    %v971 = vadd.f32 %v967, %v970
    %s972 = sld [smem:[#allocation8 + $0x58e]]
    %v973 = vstv %s972
    %v974 = vmul.f32 %v223, %v973
    %v975 = vadd.f32 %v971, %v974
    %s976 = sld [smem:[#allocation9 + $0xb]]
    %v977 = vstv %s976
    %v978 = vadd.f32 %v975, %v977
    %v979 = vmax.f32 %v978, 0.0
    %s980 = sld [smem:[#allocation8 + $0x600]]
    %v981 = vstv %s980
    %v982 = vmul.f32 %v125, %v981
    %s983 = sld [smem:[#allocation8 + $0x601]]
    %v984 = vstv %s983
    %v985 = vmul.f32 %v132, %v984
    %v986 = vadd.f32 %v982, %v985
    %s987 = sld [smem:[#allocation8 + $0x602]]
    %v988 = vstv %s987
    %v989 = vmul.f32 %v139, %v988
    %v990 = vadd.f32 %v986, %v989
    %s991 = sld [smem:[#allocation8 + $0x603]]
    %v992 = vstv %s991
    %v993 = vmul.f32 %v146, %v992
    %v994 = vadd.f32 %v990, %v993
    %s995 = sld [smem:[#allocation8 + $0x604]]
    %v996 = vstv %s995
    %v997 = vmul.f32 %v153, %v996
    %v998 = vadd.f32 %v994, %v997
    %s999 = sld [smem:[#allocation8 + $0x605]]
    %v1000 = vstv %s999
    %v1001 = vmul.f32 %v160, %v1000
    %v1002 = vadd.f32 %v998, %v1001
    %s1003 = sld [smem:[#allocation8 + $0x606]]
    %v1004 = vstv %s1003
    %v1005 = vmul.f32 %v167, %v1004
    %v1006 = vadd.f32 %v1002, %v1005
    %s1007 = sld [smem:[#allocation8 + $0x607]]
    %v1008 = vstv %s1007
    %v1009 = vmul.f32 %v174, %v1008
    %v1010 = vadd.f32 %v1006, %v1009
    %s1011 = sld [smem:[#allocation8 + $0x608]]
    %v1012 = vstv %s1011
    %v1013 = vmul.f32 %v181, %v1012
    %v1014 = vadd.f32 %v1010, %v1013
    %s1015 = sld [smem:[#allocation8 + $0x609]]
    %v1016 = vstv %s1015
    %v1017 = vmul.f32 %v188, %v1016
    %v1018 = vadd.f32 %v1014, %v1017
    %s1019 = sld [smem:[#allocation8 + $0x60a]]
    %v1020 = vstv %s1019
    %v1021 = vmul.f32 %v195, %v1020
    %v1022 = vadd.f32 %v1018, %v1021
    %s1023 = sld [smem:[#allocation8 + $0x60b]]
    %v1024 = vstv %s1023
    %v1025 = vmul.f32 %v202, %v1024
    %v1026 = vadd.f32 %v1022, %v1025
    %s1027 = sld [smem:[#allocation8 + $0x60c]]
    %v1028 = vstv %s1027
    %v1029 = vmul.f32 %v209, %v1028
    %v1030 = vadd.f32 %v1026, %v1029
    %s1031 = sld [smem:[#allocation8 + $0x60d]]
    %v1032 = vstv %s1031
    %v1033 = vmul.f32 %v216, %v1032
    %v1034 = vadd.f32 %v1030, %v1033
    %s1035 = sld [smem:[#allocation8 + $0x60e]]
    %v1036 = vstv %s1035
    %v1037 = vmul.f32 %v223, %v1036
    %v1038 = vadd.f32 %v1034, %v1037
    %s1039 = sld [smem:[#allocation9 + $0xc]]
    %v1040 = vstv %s1039
    %v1041 = vadd.f32 %v1038, %v1040
    %v1042 = vmax.f32 %v1041, 0.0
    %s1043 = sld [smem:[#allocation8 + $0x680]]
    %v1044 = vstv %s1043
    %v1045 = vmul.f32 %v125, %v1044
    %s1046 = sld [smem:[#allocation8 + $0x681]]
    %v1047 = vstv %s1046
    %v1048 = vmul.f32 %v132, %v1047
    %v1049 = vadd.f32 %v1045, %v1048
    %s1050 = sld [smem:[#allocation8 + $0x682]]
    %v1051 = vstv %s1050
    %v1052 = vmul.f32 %v139, %v1051
    %v1053 = vadd.f32 %v1049, %v1052
    %s1054 = sld [smem:[#allocation8 + $0x683]]
    %v1055 = vstv %s1054
    %v1056 = vmul.f32 %v146, %v1055
    %v1057 = vadd.f32 %v1053, %v1056
    %s1058 = sld [smem:[#allocation8 + $0x684]]
    %v1059 = vstv %s1058
    %v1060 = vmul.f32 %v153, %v1059
    %v1061 = vadd.f32 %v1057, %v1060
    %s1062 = sld [smem:[#allocation8 + $0x685]]
    %v1063 = vstv %s1062
    %v1064 = vmul.f32 %v160, %v1063
    %v1065 = vadd.f32 %v1061, %v1064
    %s1066 = sld [smem:[#allocation8 + $0x686]]
    %v1067 = vstv %s1066
    %v1068 = vmul.f32 %v167, %v1067
    %v1069 = vadd.f32 %v1065, %v1068
    %s1070 = sld [smem:[#allocation8 + $0x687]]
    %v1071 = vstv %s1070
    %v1072 = vmul.f32 %v174, %v1071
    %v1073 = vadd.f32 %v1069, %v1072
    %s1074 = sld [smem:[#allocation8 + $0x688]]
    %v1075 = vstv %s1074
    %v1076 = vmul.f32 %v181, %v1075
    %v1077 = vadd.f32 %v1073, %v1076
    %s1078 = sld [smem:[#allocation8 + $0x689]]
    %v1079 = vstv %s1078
    %v1080 = vmul.f32 %v188, %v1079
    %v1081 = vadd.f32 %v1077, %v1080
    %s1082 = sld [smem:[#allocation8 + $0x68a]]
    %v1083 = vstv %s1082
    %v1084 = vmul.f32 %v195, %v1083
    %v1085 = vadd.f32 %v1081, %v1084
    %s1086 = sld [smem:[#allocation8 + $0x68b]]
    %v1087 = vstv %s1086
    %v1088 = vmul.f32 %v202, %v1087
    %v1089 = vadd.f32 %v1085, %v1088
    %s1090 = sld [smem:[#allocation8 + $0x68c]]
    %v1091 = vstv %s1090
    %v1092 = vmul.f32 %v209, %v1091
    %v1093 = vadd.f32 %v1089, %v1092
    %s1094 = sld [smem:[#allocation8 + $0x68d]]
    %v1095 = vstv %s1094
    %v1096 = vmul.f32 %v216, %v1095
    %v1097 = vadd.f32 %v1093, %v1096
    %s1098 = sld [smem:[#allocation8 + $0x68e]]
    %v1099 = vstv %s1098
    %v1100 = vmul.f32 %v223, %v1099
    %v1101 = vadd.f32 %v1097, %v1100
    %s1102 = sld [smem:[#allocation9 + $0xd]]
    %v1103 = vstv %s1102
    %v1104 = vadd.f32 %v1101, %v1103
    %v1105 = vmax.f32 %v1104, 0.0
    %s1106 = sld [smem:[#allocation8 + $0x700]]
    %v1107 = vstv %s1106
    %v1108 = vmul.f32 %v125, %v1107
    %s1109 = sld [smem:[#allocation8 + $0x701]]
    %v1110 = vstv %s1109
    %v1111 = vmul.f32 %v132, %v1110
    %v1112 = vadd.f32 %v1108, %v1111
    %s1113 = sld [smem:[#allocation8 + $0x702]]
    %v1114 = vstv %s1113
    %v1115 = vmul.f32 %v139, %v1114
    %v1116 = vadd.f32 %v1112, %v1115
    %s1117 = sld [smem:[#allocation8 + $0x703]]
    %v1118 = vstv %s1117
    %v1119 = vmul.f32 %v146, %v1118
    %v1120 = vadd.f32 %v1116, %v1119
    %s1121 = sld [smem:[#allocation8 + $0x704]]
    %v1122 = vstv %s1121
    %v1123 = vmul.f32 %v153, %v1122
    %v1124 = vadd.f32 %v1120, %v1123
    %s1125 = sld [smem:[#allocation8 + $0x705]]
    %v1126 = vstv %s1125
    %v1127 = vmul.f32 %v160, %v1126
    %v1128 = vadd.f32 %v1124, %v1127
    %s1129 = sld [smem:[#allocation8 + $0x706]]
    %v1130 = vstv %s1129
    %v1131 = vmul.f32 %v167, %v1130
    %v1132 = vadd.f32 %v1128, %v1131
    %s1133 = sld [smem:[#allocation8 + $0x707]]
    %v1134 = vstv %s1133
    %v1135 = vmul.f32 %v174, %v1134
    %v1136 = vadd.f32 %v1132, %v1135
    %s1137 = sld [smem:[#allocation8 + $0x708]]
    %v1138 = vstv %s1137
    %v1139 = vmul.f32 %v181, %v1138
    %v1140 = vadd.f32 %v1136, %v1139
    %s1141 = sld [smem:[#allocation8 + $0x709]]
    %v1142 = vstv %s1141
    %v1143 = vmul.f32 %v188, %v1142
    %v1144 = vadd.f32 %v1140, %v1143
    %s1145 = sld [smem:[#allocation8 + $0x70a]]
    %v1146 = vstv %s1145
    %v1147 = vmul.f32 %v195, %v1146
    %v1148 = vadd.f32 %v1144, %v1147
    %s1149 = sld [smem:[#allocation8 + $0x70b]]
    %v1150 = vstv %s1149
    %v1151 = vmul.f32 %v202, %v1150
    %v1152 = vadd.f32 %v1148, %v1151
    %s1153 = sld [smem:[#allocation8 + $0x70c]]
    %v1154 = vstv %s1153
    %v1155 = vmul.f32 %v209, %v1154
    %v1156 = vadd.f32 %v1152, %v1155
    %s1157 = sld [smem:[#allocation8 + $0x70d]]
    %v1158 = vstv %s1157
    %v1159 = vmul.f32 %v216, %v1158
    %v1160 = vadd.f32 %v1156, %v1159
    %s1161 = sld [smem:[#allocation8 + $0x70e]]
    %v1162 = vstv %s1161
    %v1163 = vmul.f32 %v223, %v1162
    %v1164 = vadd.f32 %v1160, %v1163
    %s1165 = sld [smem:[#allocation9 + $0xe]]
    %v1166 = vstv %s1165
    %v1167 = vadd.f32 %v1164, %v1166
    %v1168 = vmax.f32 %v1167, 0.0
    %s1169 = sld [smem:[#allocation11]]
    %v1170 = vstv %s1169
    %v1171 = vmul.f32 %v286, %v1170
    %s1172 = sld [smem:[#allocation11 + $0x1]]
    %v1173 = vstv %s1172
    %v1174 = vmul.f32 %v349, %v1173
    %v1175 = vadd.f32 %v1171, %v1174
    %s1176 = sld [smem:[#allocation11 + $0x2]]
    %v1177 = vstv %s1176
    %v1178 = vmul.f32 %v412, %v1177
    %v1179 = vadd.f32 %v1175, %v1178
    %s1180 = sld [smem:[#allocation11 + $0x3]]
    %v1181 = vstv %s1180
    %v1182 = vmul.f32 %v475, %v1181
    %v1183 = vadd.f32 %v1179, %v1182
    %s1184 = sld [smem:[#allocation11 + $0x4]]
    %v1185 = vstv %s1184
    %v1186 = vmul.f32 %v538, %v1185
    %v1187 = vadd.f32 %v1183, %v1186
    %s1188 = sld [smem:[#allocation11 + $0x5]]
    %v1189 = vstv %s1188
    %v1190 = vmul.f32 %v601, %v1189
    %v1191 = vadd.f32 %v1187, %v1190
    %s1192 = sld [smem:[#allocation11 + $0x6]]
    %v1193 = vstv %s1192
    %v1194 = vmul.f32 %v664, %v1193
    %v1195 = vadd.f32 %v1191, %v1194
    %s1196 = sld [smem:[#allocation11 + $0x7]]
    %v1197 = vstv %s1196
    %v1198 = vmul.f32 %v727, %v1197
    %v1199 = vadd.f32 %v1195, %v1198
    %s1200 = sld [smem:[#allocation11 + $0x8]]
    %v1201 = vstv %s1200
    %v1202 = vmul.f32 %v790, %v1201
    %v1203 = vadd.f32 %v1199, %v1202
    %s1204 = sld [smem:[#allocation11 + $0x9]]
    %v1205 = vstv %s1204
    %v1206 = vmul.f32 %v853, %v1205
    %v1207 = vadd.f32 %v1203, %v1206
    %s1208 = sld [smem:[#allocation11 + $0xa]]
    %v1209 = vstv %s1208
    %v1210 = vmul.f32 %v916, %v1209
    %v1211 = vadd.f32 %v1207, %v1210
    %s1212 = sld [smem:[#allocation11 + $0xb]]
    %v1213 = vstv %s1212
    %v1214 = vmul.f32 %v979, %v1213
    %v1215 = vadd.f32 %v1211, %v1214
    %s1216 = sld [smem:[#allocation11 + $0xc]]
    %v1217 = vstv %s1216
    %v1218 = vmul.f32 %v1042, %v1217
    %v1219 = vadd.f32 %v1215, %v1218
    %s1220 = sld [smem:[#allocation11 + $0xd]]
    %v1221 = vstv %s1220
    %v1222 = vmul.f32 %v1105, %v1221
    %v1223 = vadd.f32 %v1219, %v1222
    %s1224 = sld [smem:[#allocation11 + $0xe]]
    %v1225 = vstv %s1224
    %v1226 = vmul.f32 %v1168, %v1225
    %v1227 = vadd.f32 %v1223, %v1226
    %s1228 = sld [smem:[#allocation12]]
    %v1229 = vstv %s1228
    %v1230 = vadd.f32 %v1227, %v1229
    %v1231 = vtanh.pop %v1230
    %s1232 = sld [smem:[#allocation11 + $0x80]]
    %v1233 = vstv %s1232
    %v1234 = vmul.f32 %v286, %v1233
    %s1235 = sld [smem:[#allocation11 + $0x81]]
    %v1236 = vstv %s1235
    %v1237 = vmul.f32 %v349, %v1236
    %v1238 = vadd.f32 %v1234, %v1237
    %s1239 = sld [smem:[#allocation11 + $0x82]]
    %v1240 = vstv %s1239
    %v1241 = vmul.f32 %v412, %v1240
    %v1242 = vadd.f32 %v1238, %v1241
    %s1243 = sld [smem:[#allocation11 + $0x83]]
    %v1244 = vstv %s1243
    %v1245 = vmul.f32 %v475, %v1244
    %v1246 = vadd.f32 %v1242, %v1245
    %s1247 = sld [smem:[#allocation11 + $0x84]]
    %v1248 = vstv %s1247
    %v1249 = vmul.f32 %v538, %v1248
    %v1250 = vadd.f32 %v1246, %v1249
    %s1251 = sld [smem:[#allocation11 + $0x85]]
    %v1252 = vstv %s1251
    %v1253 = vmul.f32 %v601, %v1252
    %v1254 = vadd.f32 %v1250, %v1253
    %s1255 = sld [smem:[#allocation11 + $0x86]]
    %v1256 = vstv %s1255
    %v1257 = vmul.f32 %v664, %v1256
    %v1258 = vadd.f32 %v1254, %v1257
    %s1259 = sld [smem:[#allocation11 + $0x87]]
    %v1260 = vstv %s1259
    %v1261 = vmul.f32 %v727, %v1260
    %v1262 = vadd.f32 %v1258, %v1261
    %s1263 = sld [smem:[#allocation11 + $0x88]]
    %v1264 = vstv %s1263
    %v1265 = vmul.f32 %v790, %v1264
    %v1266 = vadd.f32 %v1262, %v1265
    %s1267 = sld [smem:[#allocation11 + $0x89]]
    %v1268 = vstv %s1267
    %v1269 = vmul.f32 %v853, %v1268
    %v1270 = vadd.f32 %v1266, %v1269
    %s1271 = sld [smem:[#allocation11 + $0x8a]]
    %v1272 = vstv %s1271
    %v1273 = vmul.f32 %v916, %v1272
    %v1274 = vadd.f32 %v1270, %v1273
    %s1275 = sld [smem:[#allocation11 + $0x8b]]
    %v1276 = vstv %s1275
    %v1277 = vmul.f32 %v979, %v1276
    %v1278 = vadd.f32 %v1274, %v1277
    %s1279 = sld [smem:[#allocation11 + $0x8c]]
    %v1280 = vstv %s1279
    %v1281 = vmul.f32 %v1042, %v1280
    %v1282 = vadd.f32 %v1278, %v1281
    %s1283 = sld [smem:[#allocation11 + $0x8d]]
    %v1284 = vstv %s1283
    %v1285 = vmul.f32 %v1105, %v1284
    %v1286 = vadd.f32 %v1282, %v1285
    %s1287 = sld [smem:[#allocation11 + $0x8e]]
    %v1288 = vstv %s1287
    %v1289 = vmul.f32 %v1168, %v1288
    %v1290 = vadd.f32 %v1286, %v1289
    %s1291 = sld [smem:[#allocation12 + $0x1]]
    %v1292 = vstv %s1291
    %v1293 = vadd.f32 %v1290, %v1292
    %v1294 = vtanh.pop %v1293
    %s1295 = sld [smem:[#allocation11 + $0x100]]
    %v1296 = vstv %s1295
    %v1297 = vmul.f32 %v286, %v1296
    %s1298 = sld [smem:[#allocation11 + $0x101]]
    %v1299 = vstv %s1298
    %v1300 = vmul.f32 %v349, %v1299
    %v1301 = vadd.f32 %v1297, %v1300
    %s1302 = sld [smem:[#allocation11 + $0x102]]
    %v1303 = vstv %s1302
    %v1304 = vmul.f32 %v412, %v1303
    %v1305 = vadd.f32 %v1301, %v1304
    %s1306 = sld [smem:[#allocation11 + $0x103]]
    %v1307 = vstv %s1306
    %v1308 = vmul.f32 %v475, %v1307
    %v1309 = vadd.f32 %v1305, %v1308
    %s1310 = sld [smem:[#allocation11 + $0x104]]
    %v1311 = vstv %s1310
    %v1312 = vmul.f32 %v538, %v1311
    %v1313 = vadd.f32 %v1309, %v1312
    %s1314 = sld [smem:[#allocation11 + $0x105]]
    %v1315 = vstv %s1314
    %v1316 = vmul.f32 %v601, %v1315
    %v1317 = vadd.f32 %v1313, %v1316
    %s1318 = sld [smem:[#allocation11 + $0x106]]
    %v1319 = vstv %s1318
    %v1320 = vmul.f32 %v664, %v1319
    %v1321 = vadd.f32 %v1317, %v1320
    %s1322 = sld [smem:[#allocation11 + $0x107]]
    %v1323 = vstv %s1322
    %v1324 = vmul.f32 %v727, %v1323
    %v1325 = vadd.f32 %v1321, %v1324
    %s1326 = sld [smem:[#allocation11 + $0x108]]
    %v1327 = vstv %s1326
    %v1328 = vmul.f32 %v790, %v1327
    %v1329 = vadd.f32 %v1325, %v1328
    %s1330 = sld [smem:[#allocation11 + $0x109]]
    %v1331 = vstv %s1330
    %v1332 = vmul.f32 %v853, %v1331
    %v1333 = vadd.f32 %v1329, %v1332
    %s1334 = sld [smem:[#allocation11 + $0x10a]]
    %v1335 = vstv %s1334
    %v1336 = vmul.f32 %v916, %v1335
    %v1337 = vadd.f32 %v1333, %v1336
    %s1338 = sld [smem:[#allocation11 + $0x10b]]
    %v1339 = vstv %s1338
    %v1340 = vmul.f32 %v979, %v1339
    %v1341 = vadd.f32 %v1337, %v1340
    %s1342 = sld [smem:[#allocation11 + $0x10c]]
    %v1343 = vstv %s1342
    %v1344 = vmul.f32 %v1042, %v1343
    %v1345 = vadd.f32 %v1341, %v1344
    %s1346 = sld [smem:[#allocation11 + $0x10d]]
    %v1347 = vstv %s1346
    %v1348 = vmul.f32 %v1105, %v1347
    %v1349 = vadd.f32 %v1345, %v1348
    %s1350 = sld [smem:[#allocation11 + $0x10e]]
    %v1351 = vstv %s1350
    %v1352 = vmul.f32 %v1168, %v1351
    %v1353 = vadd.f32 %v1349, %v1352
    %s1354 = sld [smem:[#allocation12 + $0x2]]
    %v1355 = vstv %s1354
    %v1356 = vadd.f32 %v1353, %v1355
    %v1357 = vtanh.pop %v1356
    %s1358 = sld [smem:[#allocation11 + $0x180]]
    %v1359 = vstv %s1358
    %v1360 = vmul.f32 %v286, %v1359
    %s1361 = sld [smem:[#allocation11 + $0x181]]
    %v1362 = vstv %s1361
    %v1363 = vmul.f32 %v349, %v1362
    %v1364 = vadd.f32 %v1360, %v1363
    %s1365 = sld [smem:[#allocation11 + $0x182]]
    %v1366 = vstv %s1365
    %v1367 = vmul.f32 %v412, %v1366
    %v1368 = vadd.f32 %v1364, %v1367
    %s1369 = sld [smem:[#allocation11 + $0x183]]
    %v1370 = vstv %s1369
    %v1371 = vmul.f32 %v475, %v1370
    %v1372 = vadd.f32 %v1368, %v1371
    %s1373 = sld [smem:[#allocation11 + $0x184]]
    %v1374 = vstv %s1373
    %v1375 = vmul.f32 %v538, %v1374
    %v1376 = vadd.f32 %v1372, %v1375
    %s1377 = sld [smem:[#allocation11 + $0x185]]
    %v1378 = vstv %s1377
    %v1379 = vmul.f32 %v601, %v1378
    %v1380 = vadd.f32 %v1376, %v1379
    %s1381 = sld [smem:[#allocation11 + $0x186]]
    %v1382 = vstv %s1381
    %v1383 = vmul.f32 %v664, %v1382
    %v1384 = vadd.f32 %v1380, %v1383
    %s1385 = sld [smem:[#allocation11 + $0x187]]
    %v1386 = vstv %s1385
    %v1387 = vmul.f32 %v727, %v1386
    %v1388 = vadd.f32 %v1384, %v1387
    %s1389 = sld [smem:[#allocation11 + $0x188]]
    %v1390 = vstv %s1389
    %v1391 = vmul.f32 %v790, %v1390
    %v1392 = vadd.f32 %v1388, %v1391
    %s1393 = sld [smem:[#allocation11 + $0x189]]
    %v1394 = vstv %s1393
    %v1395 = vmul.f32 %v853, %v1394
    %v1396 = vadd.f32 %v1392, %v1395
    %s1397 = sld [smem:[#allocation11 + $0x18a]]
    %v1398 = vstv %s1397
    %v1399 = vmul.f32 %v916, %v1398
    %v1400 = vadd.f32 %v1396, %v1399
    %s1401 = sld [smem:[#allocation11 + $0x18b]]
    %v1402 = vstv %s1401
    %v1403 = vmul.f32 %v979, %v1402
    %v1404 = vadd.f32 %v1400, %v1403
    %s1405 = sld [smem:[#allocation11 + $0x18c]]
    %v1406 = vstv %s1405
    %v1407 = vmul.f32 %v1042, %v1406
    %v1408 = vadd.f32 %v1404, %v1407
    %s1409 = sld [smem:[#allocation11 + $0x18d]]
    %v1410 = vstv %s1409
    %v1411 = vmul.f32 %v1105, %v1410
    %v1412 = vadd.f32 %v1408, %v1411
    %s1413 = sld [smem:[#allocation11 + $0x18e]]
    %v1414 = vstv %s1413
    %v1415 = vmul.f32 %v1168, %v1414
    %v1416 = vadd.f32 %v1412, %v1415
    %s1417 = sld [smem:[#allocation12 + $0x3]]
    %v1418 = vstv %s1417
    %v1419 = vadd.f32 %v1416, %v1418
    %v1420 = vtanh.pop %v1419
    %s1421 = sld [smem:[#allocation11 + $0x200]]
    %v1422 = vstv %s1421
    %v1423 = vmul.f32 %v286, %v1422
    %s1424 = sld [smem:[#allocation11 + $0x201]]
    %v1425 = vstv %s1424
    %v1426 = vmul.f32 %v349, %v1425
    %v1427 = vadd.f32 %v1423, %v1426
    %s1428 = sld [smem:[#allocation11 + $0x202]]
    %v1429 = vstv %s1428
    %v1430 = vmul.f32 %v412, %v1429
    %v1431 = vadd.f32 %v1427, %v1430
    %s1432 = sld [smem:[#allocation11 + $0x203]]
    %v1433 = vstv %s1432
    %v1434 = vmul.f32 %v475, %v1433
    %v1435 = vadd.f32 %v1431, %v1434
    %s1436 = sld [smem:[#allocation11 + $0x204]]
    %v1437 = vstv %s1436
    %v1438 = vmul.f32 %v538, %v1437
    %v1439 = vadd.f32 %v1435, %v1438
    %s1440 = sld [smem:[#allocation11 + $0x205]]
    %v1441 = vstv %s1440
    %v1442 = vmul.f32 %v601, %v1441
    %v1443 = vadd.f32 %v1439, %v1442
    %s1444 = sld [smem:[#allocation11 + $0x206]]
    %v1445 = vstv %s1444
    %v1446 = vmul.f32 %v664, %v1445
    %v1447 = vadd.f32 %v1443, %v1446
    %s1448 = sld [smem:[#allocation11 + $0x207]]
    %v1449 = vstv %s1448
    %v1450 = vmul.f32 %v727, %v1449
    %v1451 = vadd.f32 %v1447, %v1450
    %s1452 = sld [smem:[#allocation11 + $0x208]]
    %v1453 = vstv %s1452
    %v1454 = vmul.f32 %v790, %v1453
    %v1455 = vadd.f32 %v1451, %v1454
    %s1456 = sld [smem:[#allocation11 + $0x209]]
    %v1457 = vstv %s1456
    %v1458 = vmul.f32 %v853, %v1457
    %v1459 = vadd.f32 %v1455, %v1458
    %s1460 = sld [smem:[#allocation11 + $0x20a]]
    %v1461 = vstv %s1460
    %v1462 = vmul.f32 %v916, %v1461
    %v1463 = vadd.f32 %v1459, %v1462
    %s1464 = sld [smem:[#allocation11 + $0x20b]]
    %v1465 = vstv %s1464
    %v1466 = vmul.f32 %v979, %v1465
    %v1467 = vadd.f32 %v1463, %v1466
    %s1468 = sld [smem:[#allocation11 + $0x20c]]
    %v1469 = vstv %s1468
    %v1470 = vmul.f32 %v1042, %v1469
    %v1471 = vadd.f32 %v1467, %v1470
    %s1472 = sld [smem:[#allocation11 + $0x20d]]
    %v1473 = vstv %s1472
    %v1474 = vmul.f32 %v1105, %v1473
    %v1475 = vadd.f32 %v1471, %v1474
    %s1476 = sld [smem:[#allocation11 + $0x20e]]
    %v1477 = vstv %s1476
    %v1478 = vmul.f32 %v1168, %v1477
    %v1479 = vadd.f32 %v1475, %v1478
    %s1480 = sld [smem:[#allocation12 + $0x4]]
    %v1481 = vstv %s1480
    %v1482 = vadd.f32 %v1479, %v1481
    %v1483 = vtanh.pop %v1482
    %s1484 = sld [smem:[#allocation11 + $0x280]]
    %v1485 = vstv %s1484
    %v1486 = vmul.f32 %v286, %v1485
    %s1487 = sld [smem:[#allocation11 + $0x281]]
    %v1488 = vstv %s1487
    %v1489 = vmul.f32 %v349, %v1488
    %v1490 = vadd.f32 %v1486, %v1489
    %s1491 = sld [smem:[#allocation11 + $0x282]]
    %v1492 = vstv %s1491
    %v1493 = vmul.f32 %v412, %v1492
    %v1494 = vadd.f32 %v1490, %v1493
    %s1495 = sld [smem:[#allocation11 + $0x283]]
    %v1496 = vstv %s1495
    %v1497 = vmul.f32 %v475, %v1496
    %v1498 = vadd.f32 %v1494, %v1497
    %s1499 = sld [smem:[#allocation11 + $0x284]]
    %v1500 = vstv %s1499
    %v1501 = vmul.f32 %v538, %v1500
    %v1502 = vadd.f32 %v1498, %v1501
    %s1503 = sld [smem:[#allocation11 + $0x285]]
    %v1504 = vstv %s1503
    %v1505 = vmul.f32 %v601, %v1504
    %v1506 = vadd.f32 %v1502, %v1505
    %s1507 = sld [smem:[#allocation11 + $0x286]]
    %v1508 = vstv %s1507
    %v1509 = vmul.f32 %v664, %v1508
    %v1510 = vadd.f32 %v1506, %v1509
    %s1511 = sld [smem:[#allocation11 + $0x287]]
    %v1512 = vstv %s1511
    %v1513 = vmul.f32 %v727, %v1512
    %v1514 = vadd.f32 %v1510, %v1513
    %s1515 = sld [smem:[#allocation11 + $0x288]]
    %v1516 = vstv %s1515
    %v1517 = vmul.f32 %v790, %v1516
    %v1518 = vadd.f32 %v1514, %v1517
    %s1519 = sld [smem:[#allocation11 + $0x289]]
    %v1520 = vstv %s1519
    %v1521 = vmul.f32 %v853, %v1520
    %v1522 = vadd.f32 %v1518, %v1521
    %s1523 = sld [smem:[#allocation11 + $0x28a]]
    %v1524 = vstv %s1523
    %v1525 = vmul.f32 %v916, %v1524
    %v1526 = vadd.f32 %v1522, %v1525
    %s1527 = sld [smem:[#allocation11 + $0x28b]]
    %v1528 = vstv %s1527
    %v1529 = vmul.f32 %v979, %v1528
    %v1530 = vadd.f32 %v1526, %v1529
    %s1531 = sld [smem:[#allocation11 + $0x28c]]
    %v1532 = vstv %s1531
    %v1533 = vmul.f32 %v1042, %v1532
    %v1534 = vadd.f32 %v1530, %v1533
    %s1535 = sld [smem:[#allocation11 + $0x28d]]
    %v1536 = vstv %s1535
    %v1537 = vmul.f32 %v1105, %v1536
    %v1538 = vadd.f32 %v1534, %v1537
    %s1539 = sld [smem:[#allocation11 + $0x28e]]
    %v1540 = vstv %s1539
    %v1541 = vmul.f32 %v1168, %v1540
    %v1542 = vadd.f32 %v1538, %v1541
    %s1543 = sld [smem:[#allocation12 + $0x5]]
    %v1544 = vstv %s1543
    %v1545 = vadd.f32 %v1542, %v1544
    %v1546 = vtanh.pop %v1545
    %s1547 = sld [smem:[#allocation11 + $0x300]]
    %v1548 = vstv %s1547
    %v1549 = vmul.f32 %v286, %v1548
    %s1550 = sld [smem:[#allocation11 + $0x301]]
    %v1551 = vstv %s1550
    %v1552 = vmul.f32 %v349, %v1551
    %v1553 = vadd.f32 %v1549, %v1552
    %s1554 = sld [smem:[#allocation11 + $0x302]]
    %v1555 = vstv %s1554
    %v1556 = vmul.f32 %v412, %v1555
    %v1557 = vadd.f32 %v1553, %v1556
    %s1558 = sld [smem:[#allocation11 + $0x303]]
    %v1559 = vstv %s1558
    %v1560 = vmul.f32 %v475, %v1559
    %v1561 = vadd.f32 %v1557, %v1560
    %s1562 = sld [smem:[#allocation11 + $0x304]]
    %v1563 = vstv %s1562
    %v1564 = vmul.f32 %v538, %v1563
    %v1565 = vadd.f32 %v1561, %v1564
    %s1566 = sld [smem:[#allocation11 + $0x305]]
    %v1567 = vstv %s1566
    %v1568 = vmul.f32 %v601, %v1567
    %v1569 = vadd.f32 %v1565, %v1568
    %s1570 = sld [smem:[#allocation11 + $0x306]]
    %v1571 = vstv %s1570
    %v1572 = vmul.f32 %v664, %v1571
    %v1573 = vadd.f32 %v1569, %v1572
    %s1574 = sld [smem:[#allocation11 + $0x307]]
    %v1575 = vstv %s1574
    %v1576 = vmul.f32 %v727, %v1575
    %v1577 = vadd.f32 %v1573, %v1576
    %s1578 = sld [smem:[#allocation11 + $0x308]]
    %v1579 = vstv %s1578
    %v1580 = vmul.f32 %v790, %v1579
    %v1581 = vadd.f32 %v1577, %v1580
    %s1582 = sld [smem:[#allocation11 + $0x309]]
    %v1583 = vstv %s1582
    %v1584 = vmul.f32 %v853, %v1583
    %v1585 = vadd.f32 %v1581, %v1584
    %s1586 = sld [smem:[#allocation11 + $0x30a]]
    %v1587 = vstv %s1586
    %v1588 = vmul.f32 %v916, %v1587
    %v1589 = vadd.f32 %v1585, %v1588
    %s1590 = sld [smem:[#allocation11 + $0x30b]]
    %v1591 = vstv %s1590
    %v1592 = vmul.f32 %v979, %v1591
    %v1593 = vadd.f32 %v1589, %v1592
    %s1594 = sld [smem:[#allocation11 + $0x30c]]
    %v1595 = vstv %s1594
    %v1596 = vmul.f32 %v1042, %v1595
    %v1597 = vadd.f32 %v1593, %v1596
    %s1598 = sld [smem:[#allocation11 + $0x30d]]
    %v1599 = vstv %s1598
    %v1600 = vmul.f32 %v1105, %v1599
    %v1601 = vadd.f32 %v1597, %v1600
    %s1602 = sld [smem:[#allocation11 + $0x30e]]
    %v1603 = vstv %s1602
    %v1604 = vmul.f32 %v1168, %v1603
    %v1605 = vadd.f32 %v1601, %v1604
    %s1606 = sld [smem:[#allocation12 + $0x6]]
    %v1607 = vstv %s1606
    %v1608 = vadd.f32 %v1605, %v1607
    %v1609 = vtanh.pop %v1608
    %s1610 = sld [smem:[#allocation11 + $0x380]]
    %v1611 = vstv %s1610
    %v1612 = vmul.f32 %v286, %v1611
    %s1613 = sld [smem:[#allocation11 + $0x381]]
    %v1614 = vstv %s1613
    %v1615 = vmul.f32 %v349, %v1614
    %v1616 = vadd.f32 %v1612, %v1615
    %s1617 = sld [smem:[#allocation11 + $0x382]]
    %v1618 = vstv %s1617
    %v1619 = vmul.f32 %v412, %v1618
    %v1620 = vadd.f32 %v1616, %v1619
    %s1621 = sld [smem:[#allocation11 + $0x383]]
    %v1622 = vstv %s1621
    %v1623 = vmul.f32 %v475, %v1622
    %v1624 = vadd.f32 %v1620, %v1623
    %s1625 = sld [smem:[#allocation11 + $0x384]]
    %v1626 = vstv %s1625
    %v1627 = vmul.f32 %v538, %v1626
    %v1628 = vadd.f32 %v1624, %v1627
    %s1629 = sld [smem:[#allocation11 + $0x385]]
    %v1630 = vstv %s1629
    %v1631 = vmul.f32 %v601, %v1630
    %v1632 = vadd.f32 %v1628, %v1631
    %s1633 = sld [smem:[#allocation11 + $0x386]]
    %v1634 = vstv %s1633
    %v1635 = vmul.f32 %v664, %v1634
    %v1636 = vadd.f32 %v1632, %v1635
    %s1637 = sld [smem:[#allocation11 + $0x387]]
    %v1638 = vstv %s1637
    %v1639 = vmul.f32 %v727, %v1638
    %v1640 = vadd.f32 %v1636, %v1639
    %s1641 = sld [smem:[#allocation11 + $0x388]]
    %v1642 = vstv %s1641
    %v1643 = vmul.f32 %v790, %v1642
    %v1644 = vadd.f32 %v1640, %v1643
    %s1645 = sld [smem:[#allocation11 + $0x389]]
    %v1646 = vstv %s1645
    %v1647 = vmul.f32 %v853, %v1646
    %v1648 = vadd.f32 %v1644, %v1647
    %s1649 = sld [smem:[#allocation11 + $0x38a]]
    %v1650 = vstv %s1649
    %v1651 = vmul.f32 %v916, %v1650
    %v1652 = vadd.f32 %v1648, %v1651
    %s1653 = sld [smem:[#allocation11 + $0x38b]]
    %v1654 = vstv %s1653
    %v1655 = vmul.f32 %v979, %v1654
    %v1656 = vadd.f32 %v1652, %v1655
    %s1657 = sld [smem:[#allocation11 + $0x38c]]
    %v1658 = vstv %s1657
    %v1659 = vmul.f32 %v1042, %v1658
    %v1660 = vadd.f32 %v1656, %v1659
    %s1661 = sld [smem:[#allocation11 + $0x38d]]
    %v1662 = vstv %s1661
    %v1663 = vmul.f32 %v1105, %v1662
    %v1664 = vadd.f32 %v1660, %v1663
    %s1665 = sld [smem:[#allocation11 + $0x38e]]
    %v1666 = vstv %s1665
    %v1667 = vmul.f32 %v1168, %v1666
    %v1668 = vadd.f32 %v1664, %v1667
    %s1669 = sld [smem:[#allocation12 + $0x7]]
    %v1670 = vstv %s1669
    %v1671 = vadd.f32 %v1668, %v1670
    %v1672 = vtanh.pop %v1671
    %s1673 = sld [smem:[#allocation11 + $0x400]]
    %v1674 = vstv %s1673
    %v1675 = vmul.f32 %v286, %v1674
    %s1676 = sld [smem:[#allocation11 + $0x401]]
    %v1677 = vstv %s1676
    %v1678 = vmul.f32 %v349, %v1677
    %v1679 = vadd.f32 %v1675, %v1678
    %s1680 = sld [smem:[#allocation11 + $0x402]]
    %v1681 = vstv %s1680
    %v1682 = vmul.f32 %v412, %v1681
    %v1683 = vadd.f32 %v1679, %v1682
    %s1684 = sld [smem:[#allocation11 + $0x403]]
    %v1685 = vstv %s1684
    %v1686 = vmul.f32 %v475, %v1685
    %v1687 = vadd.f32 %v1683, %v1686
    %s1688 = sld [smem:[#allocation11 + $0x404]]
    %v1689 = vstv %s1688
    %v1690 = vmul.f32 %v538, %v1689
    %v1691 = vadd.f32 %v1687, %v1690
    %s1692 = sld [smem:[#allocation11 + $0x405]]
    %v1693 = vstv %s1692
    %v1694 = vmul.f32 %v601, %v1693
    %v1695 = vadd.f32 %v1691, %v1694
    %s1696 = sld [smem:[#allocation11 + $0x406]]
    %v1697 = vstv %s1696
    %v1698 = vmul.f32 %v664, %v1697
    %v1699 = vadd.f32 %v1695, %v1698
    %s1700 = sld [smem:[#allocation11 + $0x407]]
    %v1701 = vstv %s1700
    %v1702 = vmul.f32 %v727, %v1701
    %v1703 = vadd.f32 %v1699, %v1702
    %s1704 = sld [smem:[#allocation11 + $0x408]]
    %v1705 = vstv %s1704
    %v1706 = vmul.f32 %v790, %v1705
    %v1707 = vadd.f32 %v1703, %v1706
    %s1708 = sld [smem:[#allocation11 + $0x409]]
    %v1709 = vstv %s1708
    %v1710 = vmul.f32 %v853, %v1709
    %v1711 = vadd.f32 %v1707, %v1710
    %s1712 = sld [smem:[#allocation11 + $0x40a]]
    %v1713 = vstv %s1712
    %v1714 = vmul.f32 %v916, %v1713
    %v1715 = vadd.f32 %v1711, %v1714
    %s1716 = sld [smem:[#allocation11 + $0x40b]]
    %v1717 = vstv %s1716
    %v1718 = vmul.f32 %v979, %v1717
    %v1719 = vadd.f32 %v1715, %v1718
    %s1720 = sld [smem:[#allocation11 + $0x40c]]
    %v1721 = vstv %s1720
    %v1722 = vmul.f32 %v1042, %v1721
    %v1723 = vadd.f32 %v1719, %v1722
    %s1724 = sld [smem:[#allocation11 + $0x40d]]
    %v1725 = vstv %s1724
    %v1726 = vmul.f32 %v1105, %v1725
    %v1727 = vadd.f32 %v1723, %v1726
    %s1728 = sld [smem:[#allocation11 + $0x40e]]
    %v1729 = vstv %s1728
    %v1730 = vmul.f32 %v1168, %v1729
    %v1731 = vadd.f32 %v1727, %v1730
    %s1732 = sld [smem:[#allocation12 + $0x8]]
    %v1733 = vstv %s1732
    %v1734 = vadd.f32 %v1731, %v1733
    %v1735 = vtanh.pop %v1734
    %s1736 = sld [smem:[#allocation11 + $0x480]]
    %v1737 = vstv %s1736
    %v1738 = vmul.f32 %v286, %v1737
    %s1739 = sld [smem:[#allocation11 + $0x481]]
    %v1740 = vstv %s1739
    %v1741 = vmul.f32 %v349, %v1740
    %v1742 = vadd.f32 %v1738, %v1741
    %s1743 = sld [smem:[#allocation11 + $0x482]]
    %v1744 = vstv %s1743
    %v1745 = vmul.f32 %v412, %v1744
    %v1746 = vadd.f32 %v1742, %v1745
    %s1747 = sld [smem:[#allocation11 + $0x483]]
    %v1748 = vstv %s1747
    %v1749 = vmul.f32 %v475, %v1748
    %v1750 = vadd.f32 %v1746, %v1749
    %s1751 = sld [smem:[#allocation11 + $0x484]]
    %v1752 = vstv %s1751
    %v1753 = vmul.f32 %v538, %v1752
    %v1754 = vadd.f32 %v1750, %v1753
    %s1755 = sld [smem:[#allocation11 + $0x485]]
    %v1756 = vstv %s1755
    %v1757 = vmul.f32 %v601, %v1756
    %v1758 = vadd.f32 %v1754, %v1757
    %s1759 = sld [smem:[#allocation11 + $0x486]]
    %v1760 = vstv %s1759
    %v1761 = vmul.f32 %v664, %v1760
    %v1762 = vadd.f32 %v1758, %v1761
    %s1763 = sld [smem:[#allocation11 + $0x487]]
    %v1764 = vstv %s1763
    %v1765 = vmul.f32 %v727, %v1764
    %v1766 = vadd.f32 %v1762, %v1765
    %s1767 = sld [smem:[#allocation11 + $0x488]]
    %v1768 = vstv %s1767
    %v1769 = vmul.f32 %v790, %v1768
    %v1770 = vadd.f32 %v1766, %v1769
    %s1771 = sld [smem:[#allocation11 + $0x489]]
    %v1772 = vstv %s1771
    %v1773 = vmul.f32 %v853, %v1772
    %v1774 = vadd.f32 %v1770, %v1773
    %s1775 = sld [smem:[#allocation11 + $0x48a]]
    %v1776 = vstv %s1775
    %v1777 = vmul.f32 %v916, %v1776
    %v1778 = vadd.f32 %v1774, %v1777
    %s1779 = sld [smem:[#allocation11 + $0x48b]]
    %v1780 = vstv %s1779
    %v1781 = vmul.f32 %v979, %v1780
    %v1782 = vadd.f32 %v1778, %v1781
    %s1783 = sld [smem:[#allocation11 + $0x48c]]
    %v1784 = vstv %s1783
    %v1785 = vmul.f32 %v1042, %v1784
    %v1786 = vadd.f32 %v1782, %v1785
    %s1787 = sld [smem:[#allocation11 + $0x48d]]
    %v1788 = vstv %s1787
    %v1789 = vmul.f32 %v1105, %v1788
    %v1790 = vadd.f32 %v1786, %v1789
    %s1791 = sld [smem:[#allocation11 + $0x48e]]
    %v1792 = vstv %s1791
    %v1793 = vmul.f32 %v1168, %v1792
    %v1794 = vadd.f32 %v1790, %v1793
    %s1795 = sld [smem:[#allocation12 + $0x9]]
    %v1796 = vstv %s1795
    %v1797 = vadd.f32 %v1794, %v1796
    %v1798 = vtanh.pop %v1797
    %s1799 = sld [smem:[#allocation11 + $0x500]]
    %v1800 = vstv %s1799
    %v1801 = vmul.f32 %v286, %v1800
    %s1802 = sld [smem:[#allocation11 + $0x501]]
    %v1803 = vstv %s1802
    %v1804 = vmul.f32 %v349, %v1803
    %v1805 = vadd.f32 %v1801, %v1804
    %s1806 = sld [smem:[#allocation11 + $0x502]]
    %v1807 = vstv %s1806
    %v1808 = vmul.f32 %v412, %v1807
    %v1809 = vadd.f32 %v1805, %v1808
    %s1810 = sld [smem:[#allocation11 + $0x503]]
    %v1811 = vstv %s1810
    %v1812 = vmul.f32 %v475, %v1811
    %v1813 = vadd.f32 %v1809, %v1812
    %s1814 = sld [smem:[#allocation11 + $0x504]]
    %v1815 = vstv %s1814
    %v1816 = vmul.f32 %v538, %v1815
    %v1817 = vadd.f32 %v1813, %v1816
    %s1818 = sld [smem:[#allocation11 + $0x505]]
    %v1819 = vstv %s1818
    %v1820 = vmul.f32 %v601, %v1819
    %v1821 = vadd.f32 %v1817, %v1820
    %s1822 = sld [smem:[#allocation11 + $0x506]]
    %v1823 = vstv %s1822
    %v1824 = vmul.f32 %v664, %v1823
    %v1825 = vadd.f32 %v1821, %v1824
    %s1826 = sld [smem:[#allocation11 + $0x507]]
    %v1827 = vstv %s1826
    %v1828 = vmul.f32 %v727, %v1827
    %v1829 = vadd.f32 %v1825, %v1828
    %s1830 = sld [smem:[#allocation11 + $0x508]]
    %v1831 = vstv %s1830
    %v1832 = vmul.f32 %v790, %v1831
    %v1833 = vadd.f32 %v1829, %v1832
    %s1834 = sld [smem:[#allocation11 + $0x509]]
    %v1835 = vstv %s1834
    %v1836 = vmul.f32 %v853, %v1835
    %v1837 = vadd.f32 %v1833, %v1836
    %s1838 = sld [smem:[#allocation11 + $0x50a]]
    %v1839 = vstv %s1838
    %v1840 = vmul.f32 %v916, %v1839
    %v1841 = vadd.f32 %v1837, %v1840
    %s1842 = sld [smem:[#allocation11 + $0x50b]]
    %v1843 = vstv %s1842
    %v1844 = vmul.f32 %v979, %v1843
    %v1845 = vadd.f32 %v1841, %v1844
    %s1846 = sld [smem:[#allocation11 + $0x50c]]
    %v1847 = vstv %s1846
    %v1848 = vmul.f32 %v1042, %v1847
    %v1849 = vadd.f32 %v1845, %v1848
    %s1850 = sld [smem:[#allocation11 + $0x50d]]
    %v1851 = vstv %s1850
    %v1852 = vmul.f32 %v1105, %v1851
    %v1853 = vadd.f32 %v1849, %v1852
    %s1854 = sld [smem:[#allocation11 + $0x50e]]
    %v1855 = vstv %s1854
    %v1856 = vmul.f32 %v1168, %v1855
    %v1857 = vadd.f32 %v1853, %v1856
    %s1858 = sld [smem:[#allocation12 + $0xa]]
    %v1859 = vstv %s1858
    %v1860 = vadd.f32 %v1857, %v1859
    %v1861 = vtanh.pop %v1860
    %s1862 = sld [smem:[#allocation11 + $0x580]]
    %v1863 = vstv %s1862
    %v1864 = vmul.f32 %v286, %v1863
    %s1865 = sld [smem:[#allocation11 + $0x581]]
    %v1866 = vstv %s1865
    %v1867 = vmul.f32 %v349, %v1866
    %v1868 = vadd.f32 %v1864, %v1867
    %s1869 = sld [smem:[#allocation11 + $0x582]]
    %v1870 = vstv %s1869
    %v1871 = vmul.f32 %v412, %v1870
    %v1872 = vadd.f32 %v1868, %v1871
    %s1873 = sld [smem:[#allocation11 + $0x583]]
    %v1874 = vstv %s1873
    %v1875 = vmul.f32 %v475, %v1874
    %v1876 = vadd.f32 %v1872, %v1875
    %s1877 = sld [smem:[#allocation11 + $0x584]]
    %v1878 = vstv %s1877
    %v1879 = vmul.f32 %v538, %v1878
    %v1880 = vadd.f32 %v1876, %v1879
    %s1881 = sld [smem:[#allocation11 + $0x585]]
    %v1882 = vstv %s1881
    %v1883 = vmul.f32 %v601, %v1882
    %v1884 = vadd.f32 %v1880, %v1883
    %s1885 = sld [smem:[#allocation11 + $0x586]]
    %v1886 = vstv %s1885
    %v1887 = vmul.f32 %v664, %v1886
    %v1888 = vadd.f32 %v1884, %v1887
    %s1889 = sld [smem:[#allocation11 + $0x587]]
    %v1890 = vstv %s1889
    %v1891 = vmul.f32 %v727, %v1890
    %v1892 = vadd.f32 %v1888, %v1891
    %s1893 = sld [smem:[#allocation11 + $0x588]]
    %v1894 = vstv %s1893
    %v1895 = vmul.f32 %v790, %v1894
    %v1896 = vadd.f32 %v1892, %v1895
    %s1897 = sld [smem:[#allocation11 + $0x589]]
    %v1898 = vstv %s1897
    %v1899 = vmul.f32 %v853, %v1898
    %v1900 = vadd.f32 %v1896, %v1899
    %s1901 = sld [smem:[#allocation11 + $0x58a]]
    %v1902 = vstv %s1901
    %v1903 = vmul.f32 %v916, %v1902
    %v1904 = vadd.f32 %v1900, %v1903
    %s1905 = sld [smem:[#allocation11 + $0x58b]]
    %v1906 = vstv %s1905
    %v1907 = vmul.f32 %v979, %v1906
    %v1908 = vadd.f32 %v1904, %v1907
    %s1909 = sld [smem:[#allocation11 + $0x58c]]
    %v1910 = vstv %s1909
    %v1911 = vmul.f32 %v1042, %v1910
    %v1912 = vadd.f32 %v1908, %v1911
    %s1913 = sld [smem:[#allocation11 + $0x58d]]
    %v1914 = vstv %s1913
    %v1915 = vmul.f32 %v1105, %v1914
    %v1916 = vadd.f32 %v1912, %v1915
    %s1917 = sld [smem:[#allocation11 + $0x58e]]
    %v1918 = vstv %s1917
    %v1919 = vmul.f32 %v1168, %v1918
    %v1920 = vadd.f32 %v1916, %v1919
    %s1921 = sld [smem:[#allocation12 + $0xb]]
    %v1922 = vstv %s1921
    %v1923 = vadd.f32 %v1920, %v1922
    %v1924 = vtanh.pop %v1923
    %s1925 = sld [smem:[#allocation11 + $0x600]]
    %v1926 = vstv %s1925
    %v1927 = vmul.f32 %v286, %v1926
    %s1928 = sld [smem:[#allocation11 + $0x601]]
    %v1929 = vstv %s1928
    %v1930 = vmul.f32 %v349, %v1929
    %v1931 = vadd.f32 %v1927, %v1930
    %s1932 = sld [smem:[#allocation11 + $0x602]]
    %v1933 = vstv %s1932
    %v1934 = vmul.f32 %v412, %v1933
    %v1935 = vadd.f32 %v1931, %v1934
    %s1936 = sld [smem:[#allocation11 + $0x603]]
    %v1937 = vstv %s1936
    %v1938 = vmul.f32 %v475, %v1937
    %v1939 = vadd.f32 %v1935, %v1938
    %s1940 = sld [smem:[#allocation11 + $0x604]]
    %v1941 = vstv %s1940
    %v1942 = vmul.f32 %v538, %v1941
    %v1943 = vadd.f32 %v1939, %v1942
    %s1944 = sld [smem:[#allocation11 + $0x605]]
    %v1945 = vstv %s1944
    %v1946 = vmul.f32 %v601, %v1945
    %v1947 = vadd.f32 %v1943, %v1946
    %s1948 = sld [smem:[#allocation11 + $0x606]]
    %v1949 = vstv %s1948
    %v1950 = vmul.f32 %v664, %v1949
    %v1951 = vadd.f32 %v1947, %v1950
    %s1952 = sld [smem:[#allocation11 + $0x607]]
    %v1953 = vstv %s1952
    %v1954 = vmul.f32 %v727, %v1953
    %v1955 = vadd.f32 %v1951, %v1954
    %s1956 = sld [smem:[#allocation11 + $0x608]]
    %v1957 = vstv %s1956
    %v1958 = vmul.f32 %v790, %v1957
    %v1959 = vadd.f32 %v1955, %v1958
    %s1960 = sld [smem:[#allocation11 + $0x609]]
    %v1961 = vstv %s1960
    %v1962 = vmul.f32 %v853, %v1961
    %v1963 = vadd.f32 %v1959, %v1962
    %s1964 = sld [smem:[#allocation11 + $0x60a]]
    %v1965 = vstv %s1964
    %v1966 = vmul.f32 %v916, %v1965
    %v1967 = vadd.f32 %v1963, %v1966
    %s1968 = sld [smem:[#allocation11 + $0x60b]]
    %v1969 = vstv %s1968
    %v1970 = vmul.f32 %v979, %v1969
    %v1971 = vadd.f32 %v1967, %v1970
    %s1972 = sld [smem:[#allocation11 + $0x60c]]
    %v1973 = vstv %s1972
    %v1974 = vmul.f32 %v1042, %v1973
    %v1975 = vadd.f32 %v1971, %v1974
    %s1976 = sld [smem:[#allocation11 + $0x60d]]
    %v1977 = vstv %s1976
    %v1978 = vmul.f32 %v1105, %v1977
    %v1979 = vadd.f32 %v1975, %v1978
    %s1980 = sld [smem:[#allocation11 + $0x60e]]
    %v1981 = vstv %s1980
    %v1982 = vmul.f32 %v1168, %v1981
    %v1983 = vadd.f32 %v1979, %v1982
    %s1984 = sld [smem:[#allocation12 + $0xc]]
    %v1985 = vstv %s1984
    %v1986 = vadd.f32 %v1983, %v1985
    %v1987 = vtanh.pop %v1986
    %s1988 = sld [smem:[#allocation11 + $0x680]]
    %v1989 = vstv %s1988
    %v1990 = vmul.f32 %v286, %v1989
    %s1991 = sld [smem:[#allocation11 + $0x681]]
    %v1992 = vstv %s1991
    %v1993 = vmul.f32 %v349, %v1992
    %v1994 = vadd.f32 %v1990, %v1993
    %s1995 = sld [smem:[#allocation11 + $0x682]]
    %v1996 = vstv %s1995
    %v1997 = vmul.f32 %v412, %v1996
    %v1998 = vadd.f32 %v1994, %v1997
    %s1999 = sld [smem:[#allocation11 + $0x683]]
    %v2000 = vstv %s1999
    %v2001 = vmul.f32 %v475, %v2000
    %v2002 = vadd.f32 %v1998, %v2001
    %s2003 = sld [smem:[#allocation11 + $0x684]]
    %v2004 = vstv %s2003
    %v2005 = vmul.f32 %v538, %v2004
    %v2006 = vadd.f32 %v2002, %v2005
    %s2007 = sld [smem:[#allocation11 + $0x685]]
    %v2008 = vstv %s2007
    %v2009 = vmul.f32 %v601, %v2008
    %v2010 = vadd.f32 %v2006, %v2009
    %s2011 = sld [smem:[#allocation11 + $0x686]]
    %v2012 = vstv %s2011
    %v2013 = vmul.f32 %v664, %v2012
    %v2014 = vadd.f32 %v2010, %v2013
    %s2015 = sld [smem:[#allocation11 + $0x687]]
    %v2016 = vstv %s2015
    %v2017 = vmul.f32 %v727, %v2016
    %v2018 = vadd.f32 %v2014, %v2017
    %s2019 = sld [smem:[#allocation11 + $0x688]]
    %v2020 = vstv %s2019
    %v2021 = vmul.f32 %v790, %v2020
    %v2022 = vadd.f32 %v2018, %v2021
    %s2023 = sld [smem:[#allocation11 + $0x689]]
    %v2024 = vstv %s2023
    %v2025 = vmul.f32 %v853, %v2024
    %v2026 = vadd.f32 %v2022, %v2025
    %s2027 = sld [smem:[#allocation11 + $0x68a]]
    %v2028 = vstv %s2027
    %v2029 = vmul.f32 %v916, %v2028
    %v2030 = vadd.f32 %v2026, %v2029
    %s2031 = sld [smem:[#allocation11 + $0x68b]]
    %v2032 = vstv %s2031
    %v2033 = vmul.f32 %v979, %v2032
    %v2034 = vadd.f32 %v2030, %v2033
    %s2035 = sld [smem:[#allocation11 + $0x68c]]
    %v2036 = vstv %s2035
    %v2037 = vmul.f32 %v1042, %v2036
    %v2038 = vadd.f32 %v2034, %v2037
    %s2039 = sld [smem:[#allocation11 + $0x68d]]
    %v2040 = vstv %s2039
    %v2041 = vmul.f32 %v1105, %v2040
    %v2042 = vadd.f32 %v2038, %v2041
    %s2043 = sld [smem:[#allocation11 + $0x68e]]
    %v2044 = vstv %s2043
    %v2045 = vmul.f32 %v1168, %v2044
    %v2046 = vadd.f32 %v2042, %v2045
    %s2047 = sld [smem:[#allocation12 + $0xd]]
    %v2048 = vstv %s2047
    %v2049 = vadd.f32 %v2046, %v2048
    %v2050 = vtanh.pop %v2049
    %s2051 = sld [smem:[#allocation11 + $0x700]]
    %v2052 = vstv %s2051
    %v2053 = vmul.f32 %v286, %v2052
    %s2054 = sld [smem:[#allocation11 + $0x701]]
    %v2055 = vstv %s2054
    %v2056 = vmul.f32 %v349, %v2055
    %v2057 = vadd.f32 %v2053, %v2056
    %s2058 = sld [smem:[#allocation11 + $0x702]]
    %v2059 = vstv %s2058
    %v2060 = vmul.f32 %v412, %v2059
    %v2061 = vadd.f32 %v2057, %v2060
    %s2062 = sld [smem:[#allocation11 + $0x703]]
    %v2063 = vstv %s2062
    %v2064 = vmul.f32 %v475, %v2063
    %v2065 = vadd.f32 %v2061, %v2064
    %s2066 = sld [smem:[#allocation11 + $0x704]]
    %v2067 = vstv %s2066
    %v2068 = vmul.f32 %v538, %v2067
    %v2069 = vadd.f32 %v2065, %v2068
    %s2070 = sld [smem:[#allocation11 + $0x705]]
    %v2071 = vstv %s2070
    %v2072 = vmul.f32 %v601, %v2071
    %v2073 = vadd.f32 %v2069, %v2072
    %s2074 = sld [smem:[#allocation11 + $0x706]]
    %v2075 = vstv %s2074
    %v2076 = vmul.f32 %v664, %v2075
    %v2077 = vadd.f32 %v2073, %v2076
    %s2078 = sld [smem:[#allocation11 + $0x707]]
    %v2079 = vstv %s2078
    %v2080 = vmul.f32 %v727, %v2079
    %v2081 = vadd.f32 %v2077, %v2080
    %s2082 = sld [smem:[#allocation11 + $0x708]]
    %v2083 = vstv %s2082
    %v2084 = vmul.f32 %v790, %v2083
    %v2085 = vadd.f32 %v2081, %v2084
    %s2086 = sld [smem:[#allocation11 + $0x709]]
    %v2087 = vstv %s2086
    %v2088 = vmul.f32 %v853, %v2087
    %v2089 = vadd.f32 %v2085, %v2088
    %s2090 = sld [smem:[#allocation11 + $0x70a]]
    %v2091 = vstv %s2090
    %v2092 = vmul.f32 %v916, %v2091
    %v2093 = vadd.f32 %v2089, %v2092
    %s2094 = sld [smem:[#allocation11 + $0x70b]]
    %v2095 = vstv %s2094
    %v2096 = vmul.f32 %v979, %v2095
    %v2097 = vadd.f32 %v2093, %v2096
    %s2098 = sld [smem:[#allocation11 + $0x70c]]
    %v2099 = vstv %s2098
    %v2100 = vmul.f32 %v1042, %v2099
    %v2101 = vadd.f32 %v2097, %v2100
    %s2102 = sld [smem:[#allocation11 + $0x70d]]
    %v2103 = vstv %s2102
    %v2104 = vmul.f32 %v1105, %v2103
    %v2105 = vadd.f32 %v2101, %v2104
    %s2106 = sld [smem:[#allocation11 + $0x70e]]
    %v2107 = vstv %s2106
    %v2108 = vmul.f32 %v1168, %v2107
    %v2109 = vadd.f32 %v2105, %v2108
    %s2110 = sld [smem:[#allocation12 + $0xe]]
    %v2111 = vstv %s2110
    %v2112 = vadd.f32 %v2109, %v2111
    %v2113 = vtanh.pop %v2112
    %s2114 = sld [smem:[#allocation13]]
    %v2115 = vstv %s2114
    %v2116 = vmul.f32 %v1231, %v2115
    %s2117 = sld [smem:[#allocation13 + $0x1]]
    %v2118 = vstv %s2117
    %v2119 = vmul.f32 %v1294, %v2118
    %v2120 = vadd.f32 %v2116, %v2119
    %s2121 = sld [smem:[#allocation13 + $0x2]]
    %v2122 = vstv %s2121
    %v2123 = vmul.f32 %v1357, %v2122
    %v2124 = vadd.f32 %v2120, %v2123
    %s2125 = sld [smem:[#allocation13 + $0x3]]
    %v2126 = vstv %s2125
    %v2127 = vmul.f32 %v1420, %v2126
    %v2128 = vadd.f32 %v2124, %v2127
    %s2129 = sld [smem:[#allocation13 + $0x4]]
    %v2130 = vstv %s2129
    %v2131 = vmul.f32 %v1483, %v2130
    %v2132 = vadd.f32 %v2128, %v2131
    %s2133 = sld [smem:[#allocation13 + $0x5]]
    %v2134 = vstv %s2133
    %v2135 = vmul.f32 %v1546, %v2134
    %v2136 = vadd.f32 %v2132, %v2135
    %s2137 = sld [smem:[#allocation13 + $0x6]]
    %v2138 = vstv %s2137
    %v2139 = vmul.f32 %v1609, %v2138
    %v2140 = vadd.f32 %v2136, %v2139
    %s2141 = sld [smem:[#allocation13 + $0x7]]
    %v2142 = vstv %s2141
    %v2143 = vmul.f32 %v1672, %v2142
    %v2144 = vadd.f32 %v2140, %v2143
    %s2145 = sld [smem:[#allocation13 + $0x8]]
    %v2146 = vstv %s2145
    %v2147 = vmul.f32 %v1735, %v2146
    %v2148 = vadd.f32 %v2144, %v2147
    %s2149 = sld [smem:[#allocation13 + $0x9]]
    %v2150 = vstv %s2149
    %v2151 = vmul.f32 %v1798, %v2150
    %v2152 = vadd.f32 %v2148, %v2151
    %s2153 = sld [smem:[#allocation13 + $0xa]]
    %v2154 = vstv %s2153
    %v2155 = vmul.f32 %v1861, %v2154
    %v2156 = vadd.f32 %v2152, %v2155
    %s2157 = sld [smem:[#allocation13 + $0xb]]
    %v2158 = vstv %s2157
    %v2159 = vmul.f32 %v1924, %v2158
    %v2160 = vadd.f32 %v2156, %v2159
    %s2161 = sld [smem:[#allocation13 + $0xc]]
    %v2162 = vstv %s2161
    %v2163 = vmul.f32 %v1987, %v2162
    %v2164 = vadd.f32 %v2160, %v2163
    %s2165 = sld [smem:[#allocation13 + $0xd]]
    %v2166 = vstv %s2165
    %v2167 = vmul.f32 %v2050, %v2166
    %v2168 = vadd.f32 %v2164, %v2167
    %s2169 = sld [smem:[#allocation13 + $0xe]]
    %v2170 = vstv %s2169
    %v2171 = vmul.f32 %v2113, %v2170
    %v2172 = vadd.f32 %v2168, %v2171
    %s2173 = sld [smem:[#allocation2]]
    %v2174 = vstv %s2173
    %v2175 = vadd.f32 %v2172, %v2174
    %2176 = vst [vmem:[%s9] sm:$0xff] %v2175
    // Predicated region
    $region66: #{net_hgr_forward.1} parent=1 // pred_check
      _
    $region67: #{net_hgr_forward.1} parent=1 // pred_check_branch
      %2178 = sbr.rel (0) target = $region69
    $region68: #{net_hgr_forward.1} parent=1 // pred_region
      _
    $region69: #{net_hgr_forward.1} parent=1 // pred_fallthru
      _
    // Predicated region
    $region70: #{net_hgr_forward.1} parent=1 // pred_check
      _
    $region71: #{net_hgr_forward.1} parent=1 // pred_check_branch
      %2180 = sbr.rel (0) target = $region73
    $region72: #{net_hgr_forward.1} parent=1 // pred_region
      _
    $region73: #{net_hgr_forward.1} parent=1 // pred_fallthru
      _
    %2181 = vsyncpa [#allocation4], 1
    %2182 = vsyncpa [#allocation5], 1
    %2183 = vsyncpa [#allocation7], 1
    %2184 = vsyncpa [#allocation10], 1
    %2185 = vsyncpa [#allocation14], 1

</llo_original>
